<compile_context>
chip_gen: v5e
topology: v5e:2x2
jax: 0.10.0
libtpu: 0.0.40
codegen_flags: <defaults>
</compile_context>

<pallas_src>
import functools

import jax
import jax.numpy as jnp
import numpy as np
from jax import lax
from jax.experimental import pallas as pl
from jax.experimental.pallas import tpu as pltpu

# ---- stands in for the missing `config` module ----
RNN_CHANNEL = 8            # config.Rnn_channel
RNN_HALF = RNN_CHANNEL // 2
EXT_CHANNEL = 16           # config.Extractor_channel
EXT_NUM = 1                # config.Extractor_num
IN_CHANNEL = 18            # per-frame input channels (Extractor takes 18 + RNN_HALF)


# ----------------------------- Pallas kernel ---------------------------------
def _rnn_seq_kernel(*refs, n_res, t_blk, img_w, bhw, ch, cin, cin_pad, ec):
    maxlen_ref = refs[0]                                              # SMEM scalar
    (x_ref, h0_ref, c0_ref, mask_ref, cn_ref, co_ref,
     w0_ref, b0_ref) = refs[1:9]
    res_refs = refs[9:9 + 4 * n_res]
    gwh_ref, gwx_ref, gb_ref = refs[9 + 4 * n_res:12 + 4 * n_res]
    h_ref, c_ref = refs[12 + 4 * n_res:14 + 4 * n_res]                # carry outputs
    zbuf, tap_a, tap_b = refs[14 + 4 * n_res:]                        # VMEM scratch

    bf16 = jnp.bfloat16

    def conv3x3(z, w_ref, tap_ref, cinp):
        """3x3 'same' conv as one wide-K MXU dot, channels-first.

        z: [cinp, bhw] f32 (pad rows already zero); w_ref: [cout, 9*cinp] bf16;
        tap_ref: [9*cinp, bhw] bf16 scratch.  Border mask is fused into the tap
        store (per-tap [1, bhw] row); wrap-around across image/batch boundaries
        from the flattened-pixel roll is neutralized by that mask.
        """
        for dy in range(3):
            for dx in range(3):
                k = dy * 3 + dx
                s = (dy - 1) * img_w + (dx - 1)       # flattened-pixel offset
                if s == 0:                            # center tap: always valid
                    val = z
                else:
                    val = pltpu.roll(z, (-s) % bhw, axis=1) * mask_ref[k:k + 1, :]
                tap_ref[k * cinp:(k + 1) * cinp, :] = val.astype(bf16)
        return jnp.dot(w_ref[...], tap_ref[...],
                       preferred_element_type=jnp.float32)

    def step(tb):
        t = pl.program_id(0) * t_blk + tb

        @pl.when(t < maxlen_ref[0])                   # skip fully-inactive steps
        def _active():
            hf = h_ref[...]                           # [ch, bhw] f32
            cf = c_ref[...]

            # Extractor first conv on concat([h, x]): assemble once, one dot.
            zbuf[0:ch, :] = hf
            zbuf[ch:cin, :] = x_ref[tb]               # [cin-ch, bhw]
            hid = jnp.maximum(
                conv3x3(zbuf[...], w0_ref, tap_a, cin_pad) + b0_ref[...], 0.0)

            # Residual blocks: relu(x + conv3x3(relu(conv3x3(x))))
            for r in range(n_res):
                w1, b1, w2, b2 = res_refs[4 * r:4 * r + 4]
                y = jnp.maximum(conv3x3(hid, w1, tap_b, ec) + b1[...], 0.0)
                y = conv3x3(y, w2, tap_b, ec) + b2[...]
                hid = jnp.maximum(hid + y, 0.0)

            # Gate (1x1 conv on concat([h, hidden])) == two small dots.
            g = (jnp.dot(gwh_ref[...], hf.astype(bf16),
                         preferred_element_type=jnp.float32)
                 + jnp.dot(gwx_ref[...], hid.astype(bf16),
                           preferred_element_type=jnp.float32)
                 + gb_ref[...])                       # [4*ch, bhw], f/i/o pre-halved

            th = jnp.tanh(g)                          # one full-width EUP pass
            sig_f = 0.5 * (th[0 * ch:1 * ch, :] + 1.0)
            sig_i = 0.5 * (th[1 * ch:2 * ch, :] + 1.0)
            tanh_j = th[2 * ch:3 * ch, :]
            sig_o = 0.5 * (th[3 * ch:4 * ch, :] + 1.0)

            c_new = cf * sig_f + sig_i * tanh_j
            h_new = jnp.tanh(c_new) * sig_o

            # per-batch active/reset blend, pre-expanded to lane vectors
            cn = cn_ref[tb]                           # [1, bhw]
            co = co_ref[tb]
            h_ref[...] = cn * h_new + co * hf
            c_ref[...] = cn * c_new + co * cf

    @pl.when(pl.program_id(0) == 0)
    def _init():
        h_ref[...] = h0_ref[...]
        c_ref[...] = c0_ref[...]
        if cin_pad > cin:                             # zero pad rows once
            zbuf[cin:cin_pad, :] = jnp.zeros((cin_pad - cin, bhw), jnp.float32)

    for tb in range(t_blk):                           # static unroll of T_BLK steps
        step(tb)


# ----------------------------- helpers ----------------------------------------
def _make_tap_mask(H, W, B):
    """[9, B*HW] border-validity mask (1 where the tap stays inside its image)."""
    yy, xx = np.meshgrid(np.arange(H), np.arange(W), indexing='ij')
    rows = []
    for dy in range(3):
        for dx in range(3):
            valid = ((yy + dy - 1 >= 0) & (yy + dy - 1 < H)
                     & (xx + dx - 1 >= 0) & (xx + dx - 1 < W))
            rows.append(valid.reshape(1, H * W))
    m = np.concatenate(rows, axis=0).astype(np.float32)        # [9, HW]
    return jnp.asarray(np.tile(m, (1, B)))                     # [9, B*HW]


# ----------------------------- JAX wrapper ------------------------------------
def rnn_layer_forward(params, inputs, lengths, rnn_states=None, resets=None,
                      t_block=4):
    """inputs: [B, T, 18, H, W]; lengths: [B] int; rnn_states: [B, RNN_CHANNEL, H, W]
       or None; resets: [B, T] or None.
       Returns (rnn_outputs [B, RNN_HALF, H, W], rnn_states [B, RNN_CHANNEL, H, W])."""
    B, T, C, H, W = inputs.shape
    HW = H * W
    BHW = B * HW
    CH = RNN_HALF
    EC = EXT_CHANNEL
    CIN = CH + C
    CIN_PAD = ((CIN + 7) // 8) * 8
    assert EC % 8 == 0
    dtype = inputs.dtype
    f32 = jnp.float32
    bf16 = jnp.bfloat16

    lengths = lengths.astype(jnp.int32)
    if rnn_states is None:
        rnn_states = jnp.zeros((B, RNN_CHANNEL, H, W), dtype)
    if resets is None:
        resets = jnp.zeros((B, T), dtype)

    t_blk = max(1, min(t_block, T))
    T_pad = ((T + t_blk - 1) // t_blk) * t_blk

    # ---- channels-on-sublanes / pixels-on-lanes layout: [..., C, B*HW] ----
    x_seq = jnp.transpose(inputs, (1, 2, 0, 3, 4)).reshape(T, C, BHW).astype(f32)
    st = rnn_states.astype(f32)
    h0 = jnp.transpose(st[:, :CH], (1, 0, 2, 3)).reshape(CH, BHW)
    c0 = jnp.transpose(st[:, CH:], (1, 0, 2, 3)).reshape(CH, BHW)
    mask = _make_tap_mask(H, W, B)                               # [9, B*HW]

    # per-(t, b) active/reset multipliers, expanded to per-lane vectors
    tt = jnp.arange(T, dtype=jnp.int32)[:, None]
    act = (tt < lengths[None, :]).astype(f32)                    # [T, B]
    mult = 1.0 - resets.astype(f32).T                            # [T, B]
    cn = jnp.repeat(act * mult, HW, axis=1).reshape(T, 1, BHW)
    co = jnp.repeat(1.0 - act, HW, axis=1).reshape(T, 1, BHW)
    if T_pad > T:
        x_seq = jnp.pad(x_seq, ((0, T_pad - T), (0, 0), (0, 0)))
        cn = jnp.pad(cn, ((0, T_pad - T), (0, 0), (0, 0)))
        co = jnp.pad(co, ((0, T_pad - T), (0, 0), (0, 0)), constant_values=1.0)

    maxlen = jnp.max(lengths).reshape(1).astype(jnp.int32)       # scalar prefetch

    # ---- weights: [Cout, 9*Cin_pad] channels-first, bf16 MXU operands ----
    def conv_w(w_hwio, cin_pad):
        kh, kw, ci, cout = w_hwio.shape
        w = jnp.pad(w_hwio, ((0, 0), (0, 0), (0, cin_pad - ci), (0, 0)))
        return (jnp.transpose(w.reshape(9, cin_pad, cout), (2, 0, 1))
                .reshape(cout, 9 * cin_pad).astype(bf16))

    w0 = conv_w(jnp.concatenate([params['w0h'], params['w0x']], axis=2), CIN_PAD)
    b0 = params['b0'].reshape(EC, 1).astype(f32)
    res_in = []
    for (w1, b1, w2, b2) in params['res']:
        res_in += [conv_w(w1, EC), b1.reshape(EC, 1).astype(f32),
                   conv_w(w2, EC), b2.reshape(EC, 1).astype(f32)]

    # gate 1x1: pre-scale f/i/o rows by 0.5 so sigmoid(x) = 0.5*(tanh(g)+1)
    sc = jnp.concatenate([jnp.full((CH,), 0.5), jnp.full((CH,), 0.5),
                          jnp.ones((CH,)), jnp.full((CH,), 0.5)]).astype(f32)
    gwh = (params['gwh'].T * sc[:, None]).astype(bf16)           # [4*CH, CH]
    gwx = (params['gwx'].T * sc[:, None]).astype(bf16)           # [4*CH, EC]
    gb = (params['gb'].reshape(-1) * sc).reshape(4 * CH, 1).astype(f32)

    const = lambda g, *_: (0, 0)
    seq3 = lambda g, *_: (g, 0, 0)

    res_specs = []
    for _ in params['res']:
        res_specs += [pl.BlockSpec((EC, 9 * EC), const), pl.BlockSpec((EC, 1), const),
                      pl.BlockSpec((EC, 9 * EC), const), pl.BlockSpec((EC, 1), const)]

    in_specs = ([pl.BlockSpec((t_blk, C, BHW), seq3),            # x[t-block]
                 pl.BlockSpec((CH, BHW), const),                 # h0
                 pl.BlockSpec((CH, BHW), const),                 # c0
                 pl.BlockSpec((9, BHW), const),                  # border mask
                 pl.BlockSpec((t_blk, 1, BHW), seq3),            # cn (act*reset)
                 pl.BlockSpec((t_blk, 1, BHW), seq3),            # co (1-act)
                 pl.BlockSpec((EC, 9 * CIN_PAD), const),         # w0
                 pl.BlockSpec((EC, 1), const)]                   # b0
                + res_specs
                + [pl.BlockSpec((4 * CH, CH), const),            # gate w (h part)
                   pl.BlockSpec((4 * CH, EC), const),            # gate w (hidden part)
                   pl.BlockSpec((4 * CH, 1), const)])            # gate bias

    out_specs = (pl.BlockSpec((CH, BHW), const), pl.BlockSpec((CH, BHW), const))
    out_shape = (jax.ShapeDtypeStruct((CH, BHW), f32),) * 2

    scratch = [pltpu.VMEM((CIN_PAD, BHW), f32),                  # zbuf (concat [h, x])
               pltpu.VMEM((9 * CIN_PAD, BHW), bf16),             # tap_a (extractor)
               pltpu.VMEM((9 * EC, BHW), bf16)]                  # tap_b (residual)

    kernel = functools.partial(_rnn_seq_kernel, n_res=len(params['res']),
                               t_blk=t_blk, img_w=W, bhw=BHW, ch=CH,
                               cin=CIN, cin_pad=CIN_PAD, ec=EC)

    h, c = pl.pallas_call(
        kernel,
        out_shape=out_shape,
        grid_spec=pltpu.PrefetchScalarGridSpec(
            num_scalar_prefetch=1,
            grid=(T_pad // t_blk,),                  # sequential carry over time
            in_specs=in_specs,
            out_specs=out_specs,
            scratch_shapes=scratch),
        compiler_params=pltpu.CompilerParams(
            dimension_semantics=("arbitrary",)),
    )(maxlen, x_seq, h0, c0, mask, cn, co, w0, b0, *res_in, gwh, gwx, gb)

    def unfold(a):                                   # [CH, B*HW] -> [B, CH, H, W]
        return jnp.transpose(a.reshape(CH, B, H, W), (1, 0, 2, 3)).astype(dtype)

    h_out = unfold(h)
    c_out = unfold(c)
    # out == h after any active step; zeros for sequences with length 0.
    rnn_outputs = jnp.where((lengths > 0)[:, None, None, None],
                            h_out, jnp.zeros_like(h_out))
    rnn_states_out = jnp.concatenate([h_out, c_out], axis=1)
    return rnn_outputs, rnn_states_out


# ----------------------------- parameters -------------------------------------
def init_params(key):
    ks = list(jax.random.split(key, 6 + 4 * EXT_NUM))
    it = iter(ks)
    scale = 0.1

    def w(shape):
        return scale * jax.random.normal(next(it), shape, jnp.float32)

    params = {
        'w0h': w((3, 3, RNN_HALF, EXT_CHANNEL)),     # extractor conv, h-part
        'w0x': w((3, 3, IN_CHANNEL, EXT_CHANNEL)),   # extractor conv, input-part
        'b0':  w((1, EXT_CHANNEL)),
        'gwh': w((RNN_HALF, 4 * RNN_HALF)),          # gate 1x1 conv, h-part
        'gwx': w((EXT_CHANNEL, 4 * RNN_HALF)),       # gate 1x1 conv, hidden-part
        'gb':  w((1, 4 * RNN_HALF)),
        'res': [],
    }
    for _ in range(EXT_NUM):
        params['res'].append((w((3, 3, EXT_CHANNEL, EXT_CHANNEL)), w((1, EXT_CHANNEL)),
                              w((3, 3, EXT_CHANNEL, EXT_CHANNEL)), w((1, EXT_CHANNEL))))
    return params


# ----------------------------- pure-JAX reference -----------------------------
def _conv2d_ref(x, w, b, pad):
    y = lax.conv_general_dilated(
        x, w, window_strides=(1, 1), padding=((pad, pad), (pad, pad)),
        dimension_numbers=('NHWC', 'HWIO', 'NHWC'),
        precision=lax.Precision.HIGHEST)
    return y + b.reshape(1, 1, 1, -1)


def _cell_ref(params, x, h, c):
    w0 = jnp.concatenate([params['w0h'], params['w0x']], axis=2)
    hid = jax.nn.relu(_conv2d_ref(jnp.concatenate([h, x], axis=-1),
                                  w0, params['b0'][0], 1))
    for (w1, b1, w2, b2) in params['res']:
        y = jax.nn.relu(_conv2d_ref(hid, w1, b1[0], 1))
        y = _conv2d_ref(y, w2, b2[0], 1)
        hid = jax.nn.relu(hid + y)
    gw = jnp.concatenate([params['gwh'], params['gwx']], axis=0)[None, None]
    gate = _conv2d_ref(jnp.concatenate([h, hid], axis=-1), gw, params['gb'][0], 0)
    ch = RNN_HALF
    f, i, j, o = (gate[..., 0:ch], gate[..., ch:2 * ch],
                  gate[..., 2 * ch:3 * ch], gate[..., 3 * ch:4 * ch])
    c_new = c * jax.nn.sigmoid(f) + jax.nn.sigmoid(i) * jnp.tanh(j)
    h_new = jnp.tanh(c_new) * jax.nn.sigmoid(o)
    return h_new, c_new


def rnn_layer_ref(params, inputs, lengths, rnn_states, resets):
    B, T, C, H, W = inputs.shape
    x_seq = jnp.transpose(inputs, (0, 1, 3, 4, 2))
    h = jnp.transpose(rnn_states[:, :RNN_HALF], (0, 2, 3, 1))
    c = jnp.transpose(rnn_states[:, RNN_HALF:], (0, 2, 3, 1))
    out = jnp.zeros_like(h)
    for t in range(T):
        h_new, c_new = _cell_ref(params, x_seq[:, t], h, c)
        mult = (1.0 - resets[:, t])[:, None, None, None]
        act = (t < lengths).astype(inputs.dtype)[:, None, None, None]
        h = act * (h_new * mult) + (1 - act) * h
        c = act * (c_new * mult) + (1 - act) * c
        out = act * (h_new * mult) + (1 - act) * out
    to_nchw = lambda a: jnp.transpose(a, (0, 3, 1, 2))
    return to_nchw(out), jnp.concatenate([to_nchw(h), to_nchw(c)], axis=1)


# ----------------------------- main --------------------------------------------
if __name__ == "__main__":
    key = jax.random.PRNGKey(0)
    kp, kx, ks = jax.random.split(key, 3)
    B, T, H, W = 2, 4, 8, 8

    params = init_params(kp)
    inputs = 0.5 * jax.random.normal(kx, (B, T, IN_CHANNEL, H, W), jnp.float32)
    lengths = jnp.array([4, 2], jnp.int32)
    rnn_states0 = 0.5 * jax.random.normal(ks, (B, RNN_CHANNEL, H, W), jnp.float32)
    resets = jnp.zeros((B, T), jnp.float32).at[0, 1].set(1.0)

    # t_block=2 -> grid=(2,) exercises both the in-kernel time unroll and the
    # cross-grid-step carry of the resident h/c blocks.
    fwd = jax.jit(functools.partial(rnn_layer_forward, params, t_block=2))
    out, states = fwd(inputs, lengths, rnn_states0, resets)
    jax.block_until_ready((out, states))

    assert out.shape == (B, RNN_HALF, H, W)
    assert states.shape == (B, RNN_CHANNEL, H, W)

    ref_out, ref_states = rnn_layer_ref(params, inputs, lengths, rnn_states0, resets)
    # bf16 MXU operands (f32 accumulate) -> slightly looser tolerance than pure f32.
    np.testing.assert_allclose(np.asarray(out), np.asarray(ref_out),
                               atol=2e-2, rtol=2e-2)
    np.testing.assert_allclose(np.asarray(states), np.asarray(ref_states),
                               atol=2e-2, rtol=2e-2)
    print("KERNEL_OK")
</pallas_src>

<mosaic_0001>
module attributes {stable_mosaic.version = 11 : i64} {
  func.func @_rnn_seq_kernel(%arg0: i32, %arg1: memref<1xi32, #tpu.memory_space<smem>>, %arg2: memref<2x18x128xf32, #tpu.memory_space<vmem>>, %arg3: memref<4x128xf32, #tpu.memory_space<vmem>>, %arg4: memref<4x128xf32, #tpu.memory_space<vmem>>, %arg5: memref<9x128xf32, #tpu.memory_space<vmem>>, %arg6: memref<2x1x128xf32, #tpu.memory_space<vmem>>, %arg7: memref<2x1x128xf32, #tpu.memory_space<vmem>>, %arg8: memref<16x216xbf16, #tpu.memory_space<vmem>>, %arg9: memref<16x1xf32, #tpu.memory_space<vmem>>, %arg10: memref<16x144xbf16, #tpu.memory_space<vmem>>, %arg11: memref<16x1xf32, #tpu.memory_space<vmem>>, %arg12: memref<16x144xbf16, #tpu.memory_space<vmem>>, %arg13: memref<16x1xf32, #tpu.memory_space<vmem>>, %arg14: memref<16x4xbf16, #tpu.memory_space<vmem>>, %arg15: memref<16x16xbf16, #tpu.memory_space<vmem>>, %arg16: memref<16x1xf32, #tpu.memory_space<vmem>>, %arg17: memref<4x128xf32, #tpu.memory_space<vmem>>, %arg18: memref<4x128xf32, #tpu.memory_space<vmem>>, %arg19: memref<24x128xf32, #tpu.memory_space<vmem>>, %arg20: memref<216x128xbf16, #tpu.memory_space<vmem>>, %arg21: memref<144x128xbf16, #tpu.memory_space<vmem>>) attributes {dimension_semantics = [#tpu.dimension_semantics<arbitrary>], iteration_bounds = array<i64: 2>, scalar_prefetch = 1 : i64, scratch_operands = 3 : i64, tpu.core_type = #tpu.core_type<tc>, window_params = [{transform_indices = @transform_0, window_bounds = array<i64: 2, 18, 128>}, {pipeline_mode = #tpu.pipeline_mode<synchronous>, transform_indices = @transform_1, window_bounds = array<i64: 4, 128>}, {pipeline_mode = #tpu.pipeline_mode<synchronous>, transform_indices = @transform_2, window_bounds = array<i64: 4, 128>}, {pipeline_mode = #tpu.pipeline_mode<synchronous>, transform_indices = @transform_3, window_bounds = array<i64: 9, 128>}, {transform_indices = @transform_4, window_bounds = array<i64: 2, 1, 128>}, {transform_indices = @transform_5, window_bounds = array<i64: 2, 1, 128>}, {pipeline_mode = #tpu.pipeline_mode<synchronous>, transform_indices = @transform_6, window_bounds = array<i64: 16, 216>}, {pipeline_mode = #tpu.pipeline_mode<synchronous>, transform_indices = @transform_7, window_bounds = array<i64: 16, 1>}, {pipeline_mode = #tpu.pipeline_mode<synchronous>, transform_indices = @transform_8, window_bounds = array<i64: 16, 144>}, {pipeline_mode = #tpu.pipeline_mode<synchronous>, transform_indices = @transform_9, window_bounds = array<i64: 16, 1>}, {pipeline_mode = #tpu.pipeline_mode<synchronous>, transform_indices = @transform_10, window_bounds = array<i64: 16, 144>}, {pipeline_mode = #tpu.pipeline_mode<synchronous>, transform_indices = @transform_11, window_bounds = array<i64: 16, 1>}, {pipeline_mode = #tpu.pipeline_mode<synchronous>, transform_indices = @transform_12, window_bounds = array<i64: 16, 4>}, {pipeline_mode = #tpu.pipeline_mode<synchronous>, transform_indices = @transform_13, window_bounds = array<i64: 16, 16>}, {pipeline_mode = #tpu.pipeline_mode<synchronous>, transform_indices = @transform_14, window_bounds = array<i64: 16, 1>}, {pipeline_mode = #tpu.pipeline_mode<synchronous>, transform_indices = @transform_15, window_bounds = array<i64: 4, 128>}, {pipeline_mode = #tpu.pipeline_mode<synchronous>, transform_indices = @transform_16, window_bounds = array<i64: 4, 128>}]} {
    %c0_i32 = arith.constant 0 : i32
    %0 = arith.cmpi eq, %arg0, %c0_i32 : i32
    %1 = arith.extui %0 : i1 to i32
    %c0_i32_0 = arith.constant 0 : i32
    %2 = arith.cmpi ne, %1, %c0_i32_0 : i32
    scf.if %2 {
      %c0_6 = arith.constant 0 : index
      %c0_7 = arith.constant 0 : index
      %15 = vector.load %arg3[%c0_6, %c0_7] : memref<4x128xf32, #tpu.memory_space<vmem>>, vector<4x128xf32>
      %c0_8 = arith.constant 0 : index
      %c0_9 = arith.constant 0 : index
      %16 = vector.load %arg17[%c0_8, %c0_9] : memref<4x128xf32, #tpu.memory_space<vmem>>, vector<4x128xf32>
      tpu.vector_store %arg17[%c0_8, %c0_9], %15 {strides = array<i32>} : memref<4x128xf32, #tpu.memory_space<vmem>>, vector<4x128xf32>,
      %c0_10 = arith.constant 0 : index
      %c0_11 = arith.constant 0 : index
      %17 = vector.load %arg4[%c0_10, %c0_11] : memref<4x128xf32, #tpu.memory_space<vmem>>, vector<4x128xf32>
      %c0_12 = arith.constant 0 : index
      %c0_13 = arith.constant 0 : index
      %18 = vector.load %arg18[%c0_12, %c0_13] : memref<4x128xf32, #tpu.memory_space<vmem>>, vector<4x128xf32>
      tpu.vector_store %arg18[%c0_12, %c0_13], %17 {strides = array<i32>} : memref<4x128xf32, #tpu.memory_space<vmem>>, vector<4x128xf32>,
      %cst = arith.constant 0.000000e+00 : f32
      %19 = vector.broadcast %cst : f32 to vector<2x128xf32>
      %c22 = arith.constant 22 : index
      %c0_14 = arith.constant 0 : index
      %20 = vector.load %arg19[%c22, %c0_14] : memref<24x128xf32, #tpu.memory_space<vmem>>, vector<2x128xf32>
      tpu.vector_store %arg19[%c22, %c0_14], %19 {strides = array<i32>} : memref<24x128xf32, #tpu.memory_space<vmem>>, vector<2x128xf32>,
    } else {
    }
    %c2_i32 = arith.constant 2 : i32
    %3 = arith.muli %arg0, %c2_i32 : i32
    %c0_i32_1 = arith.constant 0 : i32
    %4 = arith.addi %3, %c0_i32_1 : i32
    %c0 = arith.constant 0 : index
    %5 = memref.load %arg1[%c0] : memref<1xi32, #tpu.memory_space<smem>>
    %6 = arith.cmpi slt, %4, %5 : i32
    %7 = arith.extui %6 : i1 to i32
    %c0_i32_2 = arith.constant 0 : i32
    %8 = arith.cmpi ne, %7, %c0_i32_2 : i32
    scf.if %8 {
      %c0_6 = arith.constant 0 : index
      %c0_7 = arith.constant 0 : index
      %15 = vector.load %arg17[%c0_6, %c0_7] : memref<4x128xf32, #tpu.memory_space<vmem>>, vector<4x128xf32>
      %c0_8 = arith.constant 0 : index
      %c0_9 = arith.constant 0 : index
      %16 = vector.load %arg18[%c0_8, %c0_9] : memref<4x128xf32, #tpu.memory_space<vmem>>, vector<4x128xf32>
      %c0_10 = arith.constant 0 : index
      %c0_11 = arith.constant 0 : index
      %17 = vector.load %arg19[%c0_10, %c0_11] : memref<24x128xf32, #tpu.memory_space<vmem>>, vector<4x128xf32>
      tpu.vector_store %arg19[%c0_10, %c0_11], %15 {strides = array<i32>} : memref<24x128xf32, #tpu.memory_space<vmem>>, vector<4x128xf32>,
      %c0_12 = arith.constant 0 : index
      %c0_13 = arith.constant 0 : index
      %c0_14 = arith.constant 0 : index
      %18 = vector.load %arg2[%c0_12, %c0_13, %c0_14] : memref<2x18x128xf32, #tpu.memory_space<vmem>>, vector<1x18x128xf32>
      %19 = vector.shape_cast %18 : vector<1x18x128xf32> to vector<18x128xf32>
      %c4 = arith.constant 4 : index
      %c0_15 = arith.constant 0 : index
      %20 = vector.load %arg19[%c4, %c0_15] : memref<24x128xf32, #tpu.memory_space<vmem>>, vector<18x128xf32>
      tpu.vector_store %arg19[%c4, %c0_15], %19 {strides = array<i32>} : memref<24x128xf32, #tpu.memory_space<vmem>>, vector<18x128xf32>,
      %c0_16 = arith.constant 0 : index
      %c0_17 = arith.constant 0 : index
      %21 = vector.load %arg19[%c0_16, %c0_17] : memref<24x128xf32, #tpu.memory_space<vmem>>, vector<24x128xf32>
      %c9_i32 = arith.constant 9 : i32
      %22 = tpu.dynamic_rotate %21 by %c9_i32 dim 1 : vector<24x128xf32>, i32 -> vector<24x128xf32>
      %c0_18 = arith.constant 0 : index
      %c0_19 = arith.constant 0 : index
      %23 = vector.load %arg5[%c0_18, %c0_19] : memref<9x128xf32, #tpu.memory_space<vmem>>, vector<1x128xf32>
      %24 = vector.broadcast %23 : vector<1x128xf32> to vector<24x128xf32>
      %25 = arith.mulf %22, %24 : vector<24x128xf32>
      %26 = arith.truncf %25 : vector<24x128xf32> to vector<24x128xbf16>
      %c0_20 = arith.constant 0 : index
      %c0_21 = arith.constant 0 : index
      %27 = vector.load %arg20[%c0_20, %c0_21] : memref<216x128xbf16, #tpu.memory_space<vmem>>, vector<24x128xbf16>
      tpu.vector_store %arg20[%c0_20, %c0_21], %26 {strides = array<i32>} : memref<216x128xbf16, #tpu.memory_space<vmem>>, vector<24x128xbf16>,
      %c8_i32 = arith.constant 8 : i32
      %28 = tpu.dynamic_rotate %21 by %c8_i32 dim 1 : vector<24x128xf32>, i32 -> vector<24x128xf32>
      %c1 = arith.constant 1 : index
      %c0_22 = arith.constant 0 : index
      %29 = vector.load %arg5[%c1, %c0_22] : memref<9x128xf32, #tpu.memory_space<vmem>>, vector<1x128xf32>
      %30 = vector.broadcast %29 : vector<1x128xf32> to vector<24x128xf32>
      %31 = arith.mulf %28, %30 : vector<24x128xf32>
      %32 = arith.truncf %31 : vector<24x128xf32> to vector<24x128xbf16>
      %c24 = arith.constant 24 : index
      %c0_23 = arith.constant 0 : index
      %33 = vector.load %arg20[%c24, %c0_23] : memref<216x128xbf16, #tpu.memory_space<vmem>>, vector<24x128xbf16>
      tpu.vector_store %arg20[%c24, %c0_23], %32 {strides = array<i32>} : memref<216x128xbf16, #tpu.memory_space<vmem>>, vector<24x128xbf16>,
      %c7_i32 = arith.constant 7 : i32
      %34 = tpu.dynamic_rotate %21 by %c7_i32 dim 1 : vector<24x128xf32>, i32 -> vector<24x128xf32>
      %c2 = arith.constant 2 : index
      %c0_24 = arith.constant 0 : index
      %35 = vector.load %arg5[%c2, %c0_24] : memref<9x128xf32, #tpu.memory_space<vmem>>, vector<1x128xf32>
      %36 = vector.broadcast %35 : vector<1x128xf32> to vector<24x128xf32>
      %37 = arith.mulf %34, %36 : vector<24x128xf32>
      %38 = arith.truncf %37 : vector<24x128xf32> to vector<24x128xbf16>
      %c48 = arith.constant 48 : index
      %c0_25 = arith.constant 0 : index
      %39 = vector.load %arg20[%c48, %c0_25] : memref<216x128xbf16, #tpu.memory_space<vmem>>, vector<24x128xbf16>
      tpu.vector_store %arg20[%c48, %c0_25], %38 {strides = array<i32>} : memref<216x128xbf16, #tpu.memory_space<vmem>>, vector<24x128xbf16>,
      %c1_i32_26 = arith.constant 1 : i32
      %40 = tpu.dynamic_rotate %21 by %c1_i32_26 dim 1 : vector<24x128xf32>, i32 -> vector<24x128xf32>
      %c3 = arith.constant 3 : index
      %c0_27 = arith.constant 0 : index
      %41 = vector.load %arg5[%c3, %c0_27] : memref<9x128xf32, #tpu.memory_space<vmem>>, vector<1x128xf32>
      %42 = vector.broadcast %41 : vector<1x128xf32> to vector<24x128xf32>
      %43 = arith.mulf %40, %42 : vector<24x128xf32>
      %44 = arith.truncf %43 : vector<24x128xf32> to vector<24x128xbf16>
      %c72 = arith.constant 72 : index
      %c0_28 = arith.constant 0 : index
      %45 = vector.load %arg20[%c72, %c0_28] : memref<216x128xbf16, #tpu.memory_space<vmem>>, vector<24x128xbf16>
      tpu.vector_store %arg20[%c72, %c0_28], %44 {strides = array<i32>} : memref<216x128xbf16, #tpu.memory_space<vmem>>, vector<24x128xbf16>,
      %46 = arith.truncf %21 : vector<24x128xf32> to vector<24x128xbf16>
      %c96 = arith.constant 96 : index
      %c0_29 = arith.constant 0 : index
      %47 = vector.load %arg20[%c96, %c0_29] : memref<216x128xbf16, #tpu.memory_space<vmem>>, vector<24x128xbf16>
      tpu.vector_store %arg20[%c96, %c0_29], %46 {strides = array<i32>} : memref<216x128xbf16, #tpu.memory_space<vmem>>, vector<24x128xbf16>,
      %c127_i32 = arith.constant 127 : i32
      %48 = tpu.dynamic_rotate %21 by %c127_i32 dim 1 : vector<24x128xf32>, i32 -> vector<24x128xf32>
      %c5 = arith.constant 5 : index
      %c0_30 = arith.constant 0 : index
      %49 = vector.load %arg5[%c5, %c0_30] : memref<9x128xf32, #tpu.memory_space<vmem>>, vector<1x128xf32>
      %50 = vector.broadcast %49 : vector<1x128xf32> to vector<24x128xf32>
      %51 = arith.mulf %48, %50 : vector<24x128xf32>
      %52 = arith.truncf %51 : vector<24x128xf32> to vector<24x128xbf16>
      %c120 = arith.constant 120 : index
      %c0_31 = arith.constant 0 : index
      %53 = vector.load %arg20[%c120, %c0_31] : memref<216x128xbf16, #tpu.memory_space<vmem>>, vector<24x128xbf16>
      tpu.vector_store %arg20[%c120, %c0_31], %52 {strides = array<i32>} : memref<216x128xbf16, #tpu.memory_space<vmem>>, vector<24x128xbf16>,
      %c121_i32 = arith.constant 121 : i32
      %54 = tpu.dynamic_rotate %21 by %c121_i32 dim 1 : vector<24x128xf32>, i32 -> vector<24x128xf32>
      %c6 = arith.constant 6 : index
      %c0_32 = arith.constant 0 : index
      %55 = vector.load %arg5[%c6, %c0_32] : memref<9x128xf32, #tpu.memory_space<vmem>>, vector<1x128xf32>
      %56 = vector.broadcast %55 : vector<1x128xf32> to vector<24x128xf32>
      %57 = arith.mulf %54, %56 : vector<24x128xf32>
      %58 = arith.truncf %57 : vector<24x128xf32> to vector<24x128xbf16>
      %c144 = arith.constant 144 : index
      %c0_33 = arith.constant 0 : index
      %59 = vector.load %arg20[%c144, %c0_33] : memref<216x128xbf16, #tpu.memory_space<vmem>>, vector<24x128xbf16>
      tpu.vector_store %arg20[%c144, %c0_33], %58 {strides = array<i32>} : memref<216x128xbf16, #tpu.memory_space<vmem>>, vector<24x128xbf16>,
      %c120_i32 = arith.constant 120 : i32
      %60 = tpu.dynamic_rotate %21 by %c120_i32 dim 1 : vector<24x128xf32>, i32 -> vector<24x128xf32>
      %c7 = arith.constant 7 : index
      %c0_34 = arith.constant 0 : index
      %61 = vector.load %arg5[%c7, %c0_34] : memref<9x128xf32, #tpu.memory_space<vmem>>, vector<1x128xf32>
      %62 = vector.broadcast %61 : vector<1x128xf32> to vector<24x128xf32>
      %63 = arith.mulf %60, %62 : vector<24x128xf32>
      %64 = arith.truncf %63 : vector<24x128xf32> to vector<24x128xbf16>
      %c168 = arith.constant 168 : index
      %c0_35 = arith.constant 0 : index
      %65 = vector.load %arg20[%c168, %c0_35] : memref<216x128xbf16, #tpu.memory_space<vmem>>, vector<24x128xbf16>
      tpu.vector_store %arg20[%c168, %c0_35], %64 {strides = array<i32>} : memref<216x128xbf16, #tpu.memory_space<vmem>>, vector<24x128xbf16>,
      %c119_i32 = arith.constant 119 : i32
      %66 = tpu.dynamic_rotate %21 by %c119_i32 dim 1 : vector<24x128xf32>, i32 -> vector<24x128xf32>
      %c8 = arith.constant 8 : index
      %c0_36 = arith.constant 0 : index
      %67 = vector.load %arg5[%c8, %c0_36] : memref<9x128xf32, #tpu.memory_space<vmem>>, vector<1x128xf32>
      %68 = vector.broadcast %67 : vector<1x128xf32> to vector<24x128xf32>
      %69 = arith.mulf %66, %68 : vector<24x128xf32>
      %70 = arith.truncf %69 : vector<24x128xf32> to vector<24x128xbf16>
      %c192 = arith.constant 192 : index
      %c0_37 = arith.constant 0 : index
      %71 = vector.load %arg20[%c192, %c0_37] : memref<216x128xbf16, #tpu.memory_space<vmem>>, vector<24x128xbf16>
      tpu.vector_store %arg20[%c192, %c0_37], %70 {strides = array<i32>} : memref<216x128xbf16, #tpu.memory_space<vmem>>, vector<24x128xbf16>,
      %c0_38 = arith.constant 0 : index
      %c0_39 = arith.constant 0 : index
      %72 = vector.load %arg8[%c0_38, %c0_39] : memref<16x216xbf16, #tpu.memory_space<vmem>>, vector<16x216xbf16>
      %c0_40 = arith.constant 0 : index
      %c0_41 = arith.constant 0 : index
      %73 = vector.load %arg20[%c0_40, %c0_41] : memref<216x128xbf16, #tpu.memory_space<vmem>>, vector<216x128xbf16>
      %cst = arith.constant dense<0.000000e+00> : vector<16x128xf32>
      %74 = tpu.matmul %72, %73, %cst {dimension_numbers = #tpu.dot_dimension_numbers<[1], [0], [0], [1], [0, 0, 1, 1], [], []>} : vector<16x216xbf16>, vector<216x128xbf16>, vector<16x128xf32> -> vector<16x128xf32>
      %c0_42 = arith.constant 0 : index
      %c0_43 = arith.constant 0 : index
      %75 = vector.load %arg9[%c0_42, %c0_43] : memref<16x1xf32, #tpu.memory_space<vmem>>, vector<16x1xf32>
      %76 = vector.broadcast %75 : vector<16x1xf32> to vector<16x128xf32>
      %77 = arith.addf %74, %76 : vector<16x128xf32>
      %cst_44 = arith.constant 0.000000e+00 : f32
      %78 = vector.broadcast %cst_44 : f32 to vector<16x128xf32>
      %79 = arith.maximumf %77, %78 : vector<16x128xf32>
      %c9_i32_45 = arith.constant 9 : i32
      %80 = tpu.dynamic_rotate %79 by %c9_i32_45 dim 1 : vector<16x128xf32>, i32 -> vector<16x128xf32>
      %c0_46 = arith.constant 0 : index
      %c0_47 = arith.constant 0 : index
      %81 = vector.load %arg5[%c0_46, %c0_47] : memref<9x128xf32, #tpu.memory_space<vmem>>, vector<1x128xf32>
      %82 = vector.broadcast %81 : vector<1x128xf32> to vector<16x128xf32>
      %83 = arith.mulf %80, %82 : vector<16x128xf32>
      %84 = arith.truncf %83 : vector<16x128xf32> to vector<16x128xbf16>
      %c0_48 = arith.constant 0 : index
      %c0_49 = arith.constant 0 : index
      %85 = vector.load %arg21[%c0_48, %c0_49] : memref<144x128xbf16, #tpu.memory_space<vmem>>, vector<16x128xbf16>
      tpu.vector_store %arg21[%c0_48, %c0_49], %84 {strides = array<i32>} : memref<144x128xbf16, #tpu.memory_space<vmem>>, vector<16x128xbf16>,
      %c8_i32_50 = arith.constant 8 : i32
      %86 = tpu.dynamic_rotate %79 by %c8_i32_50 dim 1 : vector<16x128xf32>, i32 -> vector<16x128xf32>
      %c1_51 = arith.constant 1 : index
      %c0_52 = arith.constant 0 : index
      %87 = vector.load %arg5[%c1_51, %c0_52] : memref<9x128xf32, #tpu.memory_space<vmem>>, vector<1x128xf32>
      %88 = vector.broadcast %87 : vector<1x128xf32> to vector<16x128xf32>
      %89 = arith.mulf %86, %88 : vector<16x128xf32>
      %90 = arith.truncf %89 : vector<16x128xf32> to vector<16x128xbf16>
      %c16 = arith.constant 16 : index
      %c0_53 = arith.constant 0 : index
      %91 = vector.load %arg21[%c16, %c0_53] : memref<144x128xbf16, #tpu.memory_space<vmem>>, vector<16x128xbf16>
      tpu.vector_store %arg21[%c16, %c0_53], %90 {strides = array<i32>} : memref<144x128xbf16, #tpu.memory_space<vmem>>, vector<16x128xbf16>,
      %c7_i32_54 = arith.constant 7 : i32
      %92 = tpu.dynamic_rotate %79 by %c7_i32_54 dim 1 : vector<16x128xf32>, i32 -> vector<16x128xf32>
      %c2_55 = arith.constant 2 : index
      %c0_56 = arith.constant 0 : index
      %93 = vector.load %arg5[%c2_55, %c0_56] : memref<9x128xf32, #tpu.memory_space<vmem>>, vector<1x128xf32>
      %94 = vector.broadcast %93 : vector<1x128xf32> to vector<16x128xf32>
      %95 = arith.mulf %92, %94 : vector<16x128xf32>
      %96 = arith.truncf %95 : vector<16x128xf32> to vector<16x128xbf16>
      %c32 = arith.constant 32 : index
      %c0_57 = arith.constant 0 : index
      %97 = vector.load %arg21[%c32, %c0_57] : memref<144x128xbf16, #tpu.memory_space<vmem>>, vector<16x128xbf16>
      tpu.vector_store %arg21[%c32, %c0_57], %96 {strides = array<i32>} : memref<144x128xbf16, #tpu.memory_space<vmem>>, vector<16x128xbf16>,
      %c1_i32_58 = arith.constant 1 : i32
      %98 = tpu.dynamic_rotate %79 by %c1_i32_58 dim 1 : vector<16x128xf32>, i32 -> vector<16x128xf32>
      %c3_59 = arith.constant 3 : index
      %c0_60 = arith.constant 0 : index
      %99 = vector.load %arg5[%c3_59, %c0_60] : memref<9x128xf32, #tpu.memory_space<vmem>>, vector<1x128xf32>
      %100 = vector.broadcast %99 : vector<1x128xf32> to vector<16x128xf32>
      %101 = arith.mulf %98, %100 : vector<16x128xf32>
      %102 = arith.truncf %101 : vector<16x128xf32> to vector<16x128xbf16>
      %c48_61 = arith.constant 48 : index
      %c0_62 = arith.constant 0 : index
      %103 = vector.load %arg21[%c48_61, %c0_62] : memref<144x128xbf16, #tpu.memory_space<vmem>>, vector<16x128xbf16>
      tpu.vector_store %arg21[%c48_61, %c0_62], %102 {strides = array<i32>} : memref<144x128xbf16, #tpu.memory_space<vmem>>, vector<16x128xbf16>,
      %104 = arith.truncf %79 : vector<16x128xf32> to vector<16x128xbf16>
      %c64 = arith.constant 64 : index
      %c0_63 = arith.constant 0 : index
      %105 = vector.load %arg21[%c64, %c0_63] : memref<144x128xbf16, #tpu.memory_space<vmem>>, vector<16x128xbf16>
      tpu.vector_store %arg21[%c64, %c0_63], %104 {strides = array<i32>} : memref<144x128xbf16, #tpu.memory_space<vmem>>, vector<16x128xbf16>,
      %c127_i32_64 = arith.constant 127 : i32
      %106 = tpu.dynamic_rotate %79 by %c127_i32_64 dim 1 : vector<16x128xf32>, i32 -> vector<16x128xf32>
      %c5_65 = arith.constant 5 : index
      %c0_66 = arith.constant 0 : index
      %107 = vector.load %arg5[%c5_65, %c0_66] : memref<9x128xf32, #tpu.memory_space<vmem>>, vector<1x128xf32>
      %108 = vector.broadcast %107 : vector<1x128xf32> to vector<16x128xf32>
      %109 = arith.mulf %106, %108 : vector<16x128xf32>
      %110 = arith.truncf %109 : vector<16x128xf32> to vector<16x128xbf16>
      %c80 = arith.constant 80 : index
      %c0_67 = arith.constant 0 : index
      %111 = vector.load %arg21[%c80, %c0_67] : memref<144x128xbf16, #tpu.memory_space<vmem>>, vector<16x128xbf16>
      tpu.vector_store %arg21[%c80, %c0_67], %110 {strides = array<i32>} : memref<144x128xbf16, #tpu.memory_space<vmem>>, vector<16x128xbf16>,
      %c121_i32_68 = arith.constant 121 : i32
      %112 = tpu.dynamic_rotate %79 by %c121_i32_68 dim 1 : vector<16x128xf32>, i32 -> vector<16x128xf32>
      %c6_69 = arith.constant 6 : index
      %c0_70 = arith.constant 0 : index
      %113 = vector.load %arg5[%c6_69, %c0_70] : memref<9x128xf32, #tpu.memory_space<vmem>>, vector<1x128xf32>
      %114 = vector.broadcast %113 : vector<1x128xf32> to vector<16x128xf32>
      %115 = arith.mulf %112, %114 : vector<16x128xf32>
      %116 = arith.truncf %115 : vector<16x128xf32> to vector<16x128xbf16>
      %c96_71 = arith.constant 96 : index
      %c0_72 = arith.constant 0 : index
      %117 = vector.load %arg21[%c96_71, %c0_72] : memref<144x128xbf16, #tpu.memory_space<vmem>>, vector<16x128xbf16>
      tpu.vector_store %arg21[%c96_71, %c0_72], %116 {strides = array<i32>} : memref<144x128xbf16, #tpu.memory_space<vmem>>, vector<16x128xbf16>,
      %c120_i32_73 = arith.constant 120 : i32
      %118 = tpu.dynamic_rotate %79 by %c120_i32_73 dim 1 : vector<16x128xf32>, i32 -> vector<16x128xf32>
      %c7_74 = arith.constant 7 : index
      %c0_75 = arith.constant 0 : index
      %119 = vector.load %arg5[%c7_74, %c0_75] : memref<9x128xf32, #tpu.memory_space<vmem>>, vector<1x128xf32>
      %120 = vector.broadcast %119 : vector<1x128xf32> to vector<16x128xf32>
      %121 = arith.mulf %118, %120 : vector<16x128xf32>
      %122 = arith.truncf %121 : vector<16x128xf32> to vector<16x128xbf16>
      %c112 = arith.constant 112 : index
      %c0_76 = arith.constant 0 : index
      %123 = vector.load %arg21[%c112, %c0_76] : memref<144x128xbf16, #tpu.memory_space<vmem>>, vector<16x128xbf16>
      tpu.vector_store %arg21[%c112, %c0_76], %122 {strides = array<i32>} : memref<144x128xbf16, #tpu.memory_space<vmem>>, vector<16x128xbf16>,
      %c119_i32_77 = arith.constant 119 : i32
      %124 = tpu.dynamic_rotate %79 by %c119_i32_77 dim 1 : vector<16x128xf32>, i32 -> vector<16x128xf32>
      %c8_78 = arith.constant 8 : index
      %c0_79 = arith.constant 0 : index
      %125 = vector.load %arg5[%c8_78, %c0_79] : memref<9x128xf32, #tpu.memory_space<vmem>>, vector<1x128xf32>
      %126 = vector.broadcast %125 : vector<1x128xf32> to vector<16x128xf32>
      %127 = arith.mulf %124, %126 : vector<16x128xf32>
      %128 = arith.truncf %127 : vector<16x128xf32> to vector<16x128xbf16>
      %c128 = arith.constant 128 : index
      %c0_80 = arith.constant 0 : index
      %129 = vector.load %arg21[%c128, %c0_80] : memref<144x128xbf16, #tpu.memory_space<vmem>>, vector<16x128xbf16>
      tpu.vector_store %arg21[%c128, %c0_80], %128 {strides = array<i32>} : memref<144x128xbf16, #tpu.memory_space<vmem>>, vector<16x128xbf16>,
      %c0_81 = arith.constant 0 : index
      %c0_82 = arith.constant 0 : index
      %130 = vector.load %arg10[%c0_81, %c0_82] : memref<16x144xbf16, #tpu.memory_space<vmem>>, vector<16x144xbf16>
      %c0_83 = arith.constant 0 : index
      %c0_84 = arith.constant 0 : index
      %131 = vector.load %arg21[%c0_83, %c0_84] : memref<144x128xbf16, #tpu.memory_space<vmem>>, vector<144x128xbf16>
      %cst_85 = arith.constant dense<0.000000e+00> : vector<16x128xf32>
      %132 = tpu.matmul %130, %131, %cst_85 {dimension_numbers = #tpu.dot_dimension_numbers<[1], [0], [0], [1], [0, 0, 1, 1], [], []>} : vector<16x144xbf16>, vector<144x128xbf16>, vector<16x128xf32> -> vector<16x128xf32>
      %c0_86 = arith.constant 0 : index
      %c0_87 = arith.constant 0 : index
      %133 = vector.load %arg11[%c0_86, %c0_87] : memref<16x1xf32, #tpu.memory_space<vmem>>, vector<16x1xf32>
      %134 = vector.broadcast %133 : vector<16x1xf32> to vector<16x128xf32>
      %135 = arith.addf %132, %134 : vector<16x128xf32>
      %cst_88 = arith.constant 0.000000e+00 : f32
      %136 = vector.broadcast %cst_88 : f32 to vector<16x128xf32>
      %137 = arith.maximumf %135, %136 : vector<16x128xf32>
      %c9_i32_89 = arith.constant 9 : i32
      %138 = tpu.dynamic_rotate %137 by %c9_i32_89 dim 1 : vector<16x128xf32>, i32 -> vector<16x128xf32>
      %c0_90 = arith.constant 0 : index
      %c0_91 = arith.constant 0 : index
      %139 = vector.load %arg5[%c0_90, %c0_91] : memref<9x128xf32, #tpu.memory_space<vmem>>, vector<1x128xf32>
      %140 = vector.broadcast %139 : vector<1x128xf32> to vector<16x128xf32>
      %141 = arith.mulf %138, %140 : vector<16x128xf32>
      %142 = arith.truncf %141 : vector<16x128xf32> to vector<16x128xbf16>
      %c0_92 = arith.constant 0 : index
      %c0_93 = arith.constant 0 : index
      %143 = vector.load %arg21[%c0_92, %c0_93] : memref<144x128xbf16, #tpu.memory_space<vmem>>, vector<16x128xbf16>
      tpu.vector_store %arg21[%c0_92, %c0_93], %142 {strides = array<i32>} : memref<144x128xbf16, #tpu.memory_space<vmem>>, vector<16x128xbf16>,
      %c8_i32_94 = arith.constant 8 : i32
      %144 = tpu.dynamic_rotate %137 by %c8_i32_94 dim 1 : vector<16x128xf32>, i32 -> vector<16x128xf32>
      %c1_95 = arith.constant 1 : index
      %c0_96 = arith.constant 0 : index
      %145 = vector.load %arg5[%c1_95, %c0_96] : memref<9x128xf32, #tpu.memory_space<vmem>>, vector<1x128xf32>
      %146 = vector.broadcast %145 : vector<1x128xf32> to vector<16x128xf32>
      %147 = arith.mulf %144, %146 : vector<16x128xf32>
      %148 = arith.truncf %147 : vector<16x128xf32> to vector<16x128xbf16>
      %c16_97 = arith.constant 16 : index
      %c0_98 = arith.constant 0 : index
      %149 = vector.load %arg21[%c16_97, %c0_98] : memref<144x128xbf16, #tpu.memory_space<vmem>>, vector<16x128xbf16>
      tpu.vector_store %arg21[%c16_97, %c0_98], %148 {strides = array<i32>} : memref<144x128xbf16, #tpu.memory_space<vmem>>, vector<16x128xbf16>,
      %c7_i32_99 = arith.constant 7 : i32
      %150 = tpu.dynamic_rotate %137 by %c7_i32_99 dim 1 : vector<16x128xf32>, i32 -> vector<16x128xf32>
      %c2_100 = arith.constant 2 : index
      %c0_101 = arith.constant 0 : index
      %151 = vector.load %arg5[%c2_100, %c0_101] : memref<9x128xf32, #tpu.memory_space<vmem>>, vector<1x128xf32>
      %152 = vector.broadcast %151 : vector<1x128xf32> to vector<16x128xf32>
      %153 = arith.mulf %150, %152 : vector<16x128xf32>
      %154 = arith.truncf %153 : vector<16x128xf32> to vector<16x128xbf16>
      %c32_102 = arith.constant 32 : index
      %c0_103 = arith.constant 0 : index
      %155 = vector.load %arg21[%c32_102, %c0_103] : memref<144x128xbf16, #tpu.memory_space<vmem>>, vector<16x128xbf16>
      tpu.vector_store %arg21[%c32_102, %c0_103], %154 {strides = array<i32>} : memref<144x128xbf16, #tpu.memory_space<vmem>>, vector<16x128xbf16>,
      %c1_i32_104 = arith.constant 1 : i32
      %156 = tpu.dynamic_rotate %137 by %c1_i32_104 dim 1 : vector<16x128xf32>, i32 -> vector<16x128xf32>
      %c3_105 = arith.constant 3 : index
      %c0_106 = arith.constant 0 : index
      %157 = vector.load %arg5[%c3_105, %c0_106] : memref<9x128xf32, #tpu.memory_space<vmem>>, vector<1x128xf32>
      %158 = vector.broadcast %157 : vector<1x128xf32> to vector<16x128xf32>
      %159 = arith.mulf %156, %158 : vector<16x128xf32>
      %160 = arith.truncf %159 : vector<16x128xf32> to vector<16x128xbf16>
      %c48_107 = arith.constant 48 : index
      %c0_108 = arith.constant 0 : index
      %161 = vector.load %arg21[%c48_107, %c0_108] : memref<144x128xbf16, #tpu.memory_space<vmem>>, vector<16x128xbf16>
      tpu.vector_store %arg21[%c48_107, %c0_108], %160 {strides = array<i32>} : memref<144x128xbf16, #tpu.memory_space<vmem>>, vector<16x128xbf16>,
      %162 = arith.truncf %137 : vector<16x128xf32> to vector<16x128xbf16>
      %c64_109 = arith.constant 64 : index
      %c0_110 = arith.constant 0 : index
      %163 = vector.load %arg21[%c64_109, %c0_110] : memref<144x128xbf16, #tpu.memory_space<vmem>>, vector<16x128xbf16>
      tpu.vector_store %arg21[%c64_109, %c0_110], %162 {strides = array<i32>} : memref<144x128xbf16, #tpu.memory_space<vmem>>, vector<16x128xbf16>,
      %c127_i32_111 = arith.constant 127 : i32
      %164 = tpu.dynamic_rotate %137 by %c127_i32_111 dim 1 : vector<16x128xf32>, i32 -> vector<16x128xf32>
      %c5_112 = arith.constant 5 : index
      %c0_113 = arith.constant 0 : index
      %165 = vector.load %arg5[%c5_112, %c0_113] : memref<9x128xf32, #tpu.memory_space<vmem>>, vector<1x128xf32>
      %166 = vector.broadcast %165 : vector<1x128xf32> to vector<16x128xf32>
      %167 = arith.mulf %164, %166 : vector<16x128xf32>
      %168 = arith.truncf %167 : vector<16x128xf32> to vector<16x128xbf16>
      %c80_114 = arith.constant 80 : index
      %c0_115 = arith.constant 0 : index
      %169 = vector.load %arg21[%c80_114, %c0_115] : memref<144x128xbf16, #tpu.memory_space<vmem>>, vector<16x128xbf16>
      tpu.vector_store %arg21[%c80_114, %c0_115], %168 {strides = array<i32>} : memref<144x128xbf16, #tpu.memory_space<vmem>>, vector<16x128xbf16>,
      %c121_i32_116 = arith.constant 121 : i32
      %170 = tpu.dynamic_rotate %137 by %c121_i32_116 dim 1 : vector<16x128xf32>, i32 -> vector<16x128xf32>
      %c6_117 = arith.constant 6 : index
      %c0_118 = arith.constant 0 : index
      %171 = vector.load %arg5[%c6_117, %c0_118] : memref<9x128xf32, #tpu.memory_space<vmem>>, vector<1x128xf32>
      %172 = vector.broadcast %171 : vector<1x128xf32> to vector<16x128xf32>
      %173 = arith.mulf %170, %172 : vector<16x128xf32>
      %174 = arith.truncf %173 : vector<16x128xf32> to vector<16x128xbf16>
      %c96_119 = arith.constant 96 : index
      %c0_120 = arith.constant 0 : index
      %175 = vector.load %arg21[%c96_119, %c0_120] : memref<144x128xbf16, #tpu.memory_space<vmem>>, vector<16x128xbf16>
      tpu.vector_store %arg21[%c96_119, %c0_120], %174 {strides = array<i32>} : memref<144x128xbf16, #tpu.memory_space<vmem>>, vector<16x128xbf16>,
      %c120_i32_121 = arith.constant 120 : i32
      %176 = tpu.dynamic_rotate %137 by %c120_i32_121 dim 1 : vector<16x128xf32>, i32 -> vector<16x128xf32>
      %c7_122 = arith.constant 7 : index
      %c0_123 = arith.constant 0 : index
      %177 = vector.load %arg5[%c7_122, %c0_123] : memref<9x128xf32, #tpu.memory_space<vmem>>, vector<1x128xf32>
      %178 = vector.broadcast %177 : vector<1x128xf32> to vector<16x128xf32>
      %179 = arith.mulf %176, %178 : vector<16x128xf32>
      %180 = arith.truncf %179 : vector<16x128xf32> to vector<16x128xbf16>
      %c112_124 = arith.constant 112 : index
      %c0_125 = arith.constant 0 : index
      %181 = vector.load %arg21[%c112_124, %c0_125] : memref<144x128xbf16, #tpu.memory_space<vmem>>, vector<16x128xbf16>
      tpu.vector_store %arg21[%c112_124, %c0_125], %180 {strides = array<i32>} : memref<144x128xbf16, #tpu.memory_space<vmem>>, vector<16x128xbf16>,
      %c119_i32_126 = arith.constant 119 : i32
      %182 = tpu.dynamic_rotate %137 by %c119_i32_126 dim 1 : vector<16x128xf32>, i32 -> vector<16x128xf32>
      %c8_127 = arith.constant 8 : index
      %c0_128 = arith.constant 0 : index
      %183 = vector.load %arg5[%c8_127, %c0_128] : memref<9x128xf32, #tpu.memory_space<vmem>>, vector<1x128xf32>
      %184 = vector.broadcast %183 : vector<1x128xf32> to vector<16x128xf32>
      %185 = arith.mulf %182, %184 : vector<16x128xf32>
      %186 = arith.truncf %185 : vector<16x128xf32> to vector<16x128xbf16>
      %c128_129 = arith.constant 128 : index
      %c0_130 = arith.constant 0 : index
      %187 = vector.load %arg21[%c128_129, %c0_130] : memref<144x128xbf16, #tpu.memory_space<vmem>>, vector<16x128xbf16>
      tpu.vector_store %arg21[%c128_129, %c0_130], %186 {strides = array<i32>} : memref<144x128xbf16, #tpu.memory_space<vmem>>, vector<16x128xbf16>,
      %c0_131 = arith.constant 0 : index
      %c0_132 = arith.constant 0 : index
      %188 = vector.load %arg12[%c0_131, %c0_132] : memref<16x144xbf16, #tpu.memory_space<vmem>>, vector<16x144xbf16>
      %c0_133 = arith.constant 0 : index
      %c0_134 = arith.constant 0 : index
      %189 = vector.load %arg21[%c0_133, %c0_134] : memref<144x128xbf16, #tpu.memory_space<vmem>>, vector<144x128xbf16>
      %cst_135 = arith.constant dense<0.000000e+00> : vector<16x128xf32>
      %190 = tpu.matmul %188, %189, %cst_135 {dimension_numbers = #tpu.dot_dimension_numbers<[1], [0], [0], [1], [0, 0, 1, 1], [], []>} : vector<16x144xbf16>, vector<144x128xbf16>, vector<16x128xf32> -> vector<16x128xf32>
      %c0_136 = arith.constant 0 : index
      %c0_137 = arith.constant 0 : index
      %191 = vector.load %arg13[%c0_136, %c0_137] : memref<16x1xf32, #tpu.memory_space<vmem>>, vector<16x1xf32>
      %192 = vector.broadcast %191 : vector<16x1xf32> to vector<16x128xf32>
      %193 = arith.addf %190, %192 : vector<16x128xf32>
      %194 = arith.addf %79, %193 : vector<16x128xf32>
      %cst_138 = arith.constant 0.000000e+00 : f32
      %195 = vector.broadcast %cst_138 : f32 to vector<16x128xf32>
      %196 = arith.maximumf %194, %195 : vector<16x128xf32>
      %c0_139 = arith.constant 0 : index
      %c0_140 = arith.constant 0 : index
      %197 = vector.load %arg14[%c0_139, %c0_140] : memref<16x4xbf16, #tpu.memory_space<vmem>>, vector<16x4xbf16>
      %198 = arith.truncf %15 : vector<4x128xf32> to vector<4x128xbf16>
      %cst_141 = arith.constant dense<0.000000e+00> : vector<16x128xf32>
      %199 = tpu.matmul %197, %198, %cst_141 {dimension_numbers = #tpu.dot_dimension_numbers<[1], [0], [0], [1], [0, 0, 1, 1], [], []>} : vector<16x4xbf16>, vector<4x128xbf16>, vector<16x128xf32> -> vector<16x128xf32>
      %c0_142 = arith.constant 0 : index
      %c0_143 = arith.constant 0 : index
      %200 = vector.load %arg15[%c0_142, %c0_143] : memref<16x16xbf16, #tpu.memory_space<vmem>>, vector<16x16xbf16>
      %201 = arith.truncf %196 : vector<16x128xf32> to vector<16x128xbf16>
      %cst_144 = arith.constant dense<0.000000e+00> : vector<16x128xf32>
      %202 = tpu.matmul %200, %201, %cst_144 {dimension_numbers = #tpu.dot_dimension_numbers<[1], [0], [0], [1], [0, 0, 1, 1], [], []>} : vector<16x16xbf16>, vector<16x128xbf16>, vector<16x128xf32> -> vector<16x128xf32>
      %203 = arith.addf %199, %202 : vector<16x128xf32>
      %c0_145 = arith.constant 0 : index
      %c0_146 = arith.constant 0 : index
      %204 = vector.load %arg16[%c0_145, %c0_146] : memref<16x1xf32, #tpu.memory_space<vmem>>, vector<16x1xf32>
      %205 = vector.broadcast %204 : vector<16x1xf32> to vector<16x128xf32>
      %206 = arith.addf %203, %205 : vector<16x128xf32>
      %207 = math.tanh %206 : vector<16x128xf32>
      %208 = vector.extract_strided_slice %207 {offsets = [0, 0], sizes = [4, 128], strides = [1, 1]} : vector<16x128xf32> to vector<4x128xf32>
      %cst_147 = arith.constant 1.000000e+00 : f32
      %209 = vector.broadcast %cst_147 : f32 to vector<4x128xf32>
      %210 = arith.addf %208, %209 : vector<4x128xf32>
      %cst_148 = arith.constant 5.000000e-01 : f32
      %211 = vector.broadcast %cst_148 : f32 to vector<4x128xf32>
      %212 = arith.mulf %211, %210 : vector<4x128xf32>
      %213 = vector.extract_strided_slice %207 {offsets = [4, 0], sizes = [4, 128], strides = [1, 1]} : vector<16x128xf32> to vector<4x128xf32>
      %cst_149 = arith.constant 1.000000e+00 : f32
      %214 = vector.broadcast %cst_149 : f32 to vector<4x128xf32>
      %215 = arith.addf %213, %214 : vector<4x128xf32>
      %cst_150 = arith.constant 5.000000e-01 : f32
      %216 = vector.broadcast %cst_150 : f32 to vector<4x128xf32>
      %217 = arith.mulf %216, %215 : vector<4x128xf32>
      %218 = vector.extract_strided_slice %207 {offsets = [8, 0], sizes = [4, 128], strides = [1, 1]} : vector<16x128xf32> to vector<4x128xf32>
      %219 = vector.extract_strided_slice %207 {offsets = [12, 0], sizes = [4, 128], strides = [1, 1]} : vector<16x128xf32> to vector<4x128xf32>
      %cst_151 = arith.constant 1.000000e+00 : f32
      %220 = vector.broadcast %cst_151 : f32 to vector<4x128xf32>
      %221 = arith.addf %219, %220 : vector<4x128xf32>
      %cst_152 = arith.constant 5.000000e-01 : f32
      %222 = vector.broadcast %cst_152 : f32 to vector<4x128xf32>
      %223 = arith.mulf %222, %221 : vector<4x128xf32>
      %224 = arith.mulf %16, %212 : vector<4x128xf32>
      %225 = arith.mulf %217, %218 : vector<4x128xf32>
      %226 = arith.addf %224, %225 : vector<4x128xf32>
      %227 = math.tanh %226 : vector<4x128xf32>
      %228 = arith.mulf %227, %223 : vector<4x128xf32>
      %c0_153 = arith.constant 0 : index
      %c0_154 = arith.constant 0 : index
      %c0_155 = arith.constant 0 : index
      %229 = vector.load %arg6[%c0_153, %c0_154, %c0_155] : memref<2x1x128xf32, #tpu.memory_space<vmem>>, vector<1x1x128xf32>
      %230 = vector.shape_cast %229 : vector<1x1x128xf32> to vector<1x128xf32>
      %c0_156 = arith.constant 0 : index
      %c0_157 = arith.constant 0 : index
      %c0_158 = arith.constant 0 : index
      %231 = vector.load %arg7[%c0_156, %c0_157, %c0_158] : memref<2x1x128xf32, #tpu.memory_space<vmem>>, vector<1x1x128xf32>
      %232 = vector.shape_cast %231 : vector<1x1x128xf32> to vector<1x128xf32>
      %233 = vector.broadcast %230 : vector<1x128xf32> to vector<4x128xf32>
      %234 = arith.mulf %233, %228 : vector<4x128xf32>
      %235 = vector.broadcast %232 : vector<1x128xf32> to vector<4x128xf32>
      %236 = arith.mulf %235, %15 : vector<4x128xf32>
      %237 = arith.addf %234, %236 : vector<4x128xf32>
      %c0_159 = arith.constant 0 : index
      %c0_160 = arith.constant 0 : index
      %238 = vector.load %arg17[%c0_159, %c0_160] : memref<4x128xf32, #tpu.memory_space<vmem>>, vector<4x128xf32>
      tpu.vector_store %arg17[%c0_159, %c0_160], %237 {strides = array<i32>} : memref<4x128xf32, #tpu.memory_space<vmem>>, vector<4x128xf32>,
      %239 = vector.broadcast %230 : vector<1x128xf32> to vector<4x128xf32>
      %240 = arith.mulf %239, %226 : vector<4x128xf32>
      %241 = vector.broadcast %232 : vector<1x128xf32> to vector<4x128xf32>
      %242 = arith.mulf %241, %16 : vector<4x128xf32>
      %243 = arith.addf %240, %242 : vector<4x128xf32>
      %c0_161 = arith.constant 0 : index
      %c0_162 = arith.constant 0 : index
      %244 = vector.load %arg18[%c0_161, %c0_162] : memref<4x128xf32, #tpu.memory_space<vmem>>, vector<4x128xf32>
      tpu.vector_store %arg18[%c0_161, %c0_162], %243 {strides = array<i32>} : memref<4x128xf32, #tpu.memory_space<vmem>>, vector<4x128xf32>,
    } else {
    }
    %c2_i32_3 = arith.constant 2 : i32
    %9 = arith.muli %arg0, %c2_i32_3 : i32
    %c1_i32 = arith.constant 1 : i32
    %10 = arith.addi %9, %c1_i32 : i32
    %c0_4 = arith.constant 0 : index
    %11 = memref.load %arg1[%c0_4] : memref<1xi32, #tpu.memory_space<smem>>
    %12 = arith.cmpi slt, %10, %11 : i32
    %13 = arith.extui %12 : i1 to i32
    %c0_i32_5 = arith.constant 0 : i32
    %14 = arith.cmpi ne, %13, %c0_i32_5 : i32
    scf.if %14 {
      %c0_6 = arith.constant 0 : index
      %c0_7 = arith.constant 0 : index
      %15 = vector.load %arg17[%c0_6, %c0_7] : memref<4x128xf32, #tpu.memory_space<vmem>>, vector<4x128xf32>
      %c0_8 = arith.constant 0 : index
      %c0_9 = arith.constant 0 : index
      %16 = vector.load %arg18[%c0_8, %c0_9] : memref<4x128xf32, #tpu.memory_space<vmem>>, vector<4x128xf32>
      %c0_10 = arith.constant 0 : index
      %c0_11 = arith.constant 0 : index
      %17 = vector.load %arg19[%c0_10, %c0_11] : memref<24x128xf32, #tpu.memory_space<vmem>>, vector<4x128xf32>
      tpu.vector_store %arg19[%c0_10, %c0_11], %15 {strides = array<i32>} : memref<24x128xf32, #tpu.memory_space<vmem>>, vector<4x128xf32>,
      %c1 = arith.constant 1 : index
      %c0_12 = arith.constant 0 : index
      %c0_13 = arith.constant 0 : index
      %18 = vector.load %arg2[%c1, %c0_12, %c0_13] : memref<2x18x128xf32, #tpu.memory_space<vmem>>, vector<1x18x128xf32>
      %19 = vector.shape_cast %18 : vector<1x18x128xf32> to vector<18x128xf32>
      %c4 = arith.constant 4 : index
      %c0_14 = arith.constant 0 : index
      %20 = vector.load %arg19[%c4, %c0_14] : memref<24x128xf32, #tpu.memory_space<vmem>>, vector<18x128xf32>
      tpu.vector_store %arg19[%c4, %c0_14], %19 {strides = array<i32>} : memref<24x128xf32, #tpu.memory_space<vmem>>, vector<18x128xf32>,
      %c0_15 = arith.constant 0 : index
      %c0_16 = arith.constant 0 : index
      %21 = vector.load %arg19[%c0_15, %c0_16] : memref<24x128xf32, #tpu.memory_space<vmem>>, vector<24x128xf32>
      %c9_i32 = arith.constant 9 : i32
      %22 = tpu.dynamic_rotate %21 by %c9_i32 dim 1 : vector<24x128xf32>, i32 -> vector<24x128xf32>
      %c0_17 = arith.constant 0 : index
      %c0_18 = arith.constant 0 : index
      %23 = vector.load %arg5[%c0_17, %c0_18] : memref<9x128xf32, #tpu.memory_space<vmem>>, vector<1x128xf32>
      %24 = vector.broadcast %23 : vector<1x128xf32> to vector<24x128xf32>
      %25 = arith.mulf %22, %24 : vector<24x128xf32>
      %26 = arith.truncf %25 : vector<24x128xf32> to vector<24x128xbf16>
      %c0_19 = arith.constant 0 : index
      %c0_20 = arith.constant 0 : index
      %27 = vector.load %arg20[%c0_19, %c0_20] : memref<216x128xbf16, #tpu.memory_space<vmem>>, vector<24x128xbf16>
      tpu.vector_store %arg20[%c0_19, %c0_20], %26 {strides = array<i32>} : memref<216x128xbf16, #tpu.memory_space<vmem>>, vector<24x128xbf16>,
      %c8_i32 = arith.constant 8 : i32
      %28 = tpu.dynamic_rotate %21 by %c8_i32 dim 1 : vector<24x128xf32>, i32 -> vector<24x128xf32>
      %c1_21 = arith.constant 1 : index
      %c0_22 = arith.constant 0 : index
      %29 = vector.load %arg5[%c1_21, %c0_22] : memref<9x128xf32, #tpu.memory_space<vmem>>, vector<1x128xf32>
      %30 = vector.broadcast %29 : vector<1x128xf32> to vector<24x128xf32>
      %31 = arith.mulf %28, %30 : vector<24x128xf32>
      %32 = arith.truncf %31 : vector<24x128xf32> to vector<24x128xbf16>
      %c24 = arith.constant 24 : index
      %c0_23 = arith.constant 0 : index
      %33 = vector.load %arg20[%c24, %c0_23] : memref<216x128xbf16, #tpu.memory_space<vmem>>, vector<24x128xbf16>
      tpu.vector_store %arg20[%c24, %c0_23], %32 {strides = array<i32>} : memref<216x128xbf16, #tpu.memory_space<vmem>>, vector<24x128xbf16>,
      %c7_i32 = arith.constant 7 : i32
      %34 = tpu.dynamic_rotate %21 by %c7_i32 dim 1 : vector<24x128xf32>, i32 -> vector<24x128xf32>
      %c2 = arith.constant 2 : index
      %c0_24 = arith.constant 0 : index
      %35 = vector.load %arg5[%c2, %c0_24] : memref<9x128xf32, #tpu.memory_space<vmem>>, vector<1x128xf32>
      %36 = vector.broadcast %35 : vector<1x128xf32> to vector<24x128xf32>
      %37 = arith.mulf %34, %36 : vector<24x128xf32>
      %38 = arith.truncf %37 : vector<24x128xf32> to vector<24x128xbf16>
      %c48 = arith.constant 48 : index
      %c0_25 = arith.constant 0 : index
      %39 = vector.load %arg20[%c48, %c0_25] : memref<216x128xbf16, #tpu.memory_space<vmem>>, vector<24x128xbf16>
      tpu.vector_store %arg20[%c48, %c0_25], %38 {strides = array<i32>} : memref<216x128xbf16, #tpu.memory_space<vmem>>, vector<24x128xbf16>,
      %c1_i32_26 = arith.constant 1 : i32
      %40 = tpu.dynamic_rotate %21 by %c1_i32_26 dim 1 : vector<24x128xf32>, i32 -> vector<24x128xf32>
      %c3 = arith.constant 3 : index
      %c0_27 = arith.constant 0 : index
      %41 = vector.load %arg5[%c3, %c0_27] : memref<9x128xf32, #tpu.memory_space<vmem>>, vector<1x128xf32>
      %42 = vector.broadcast %41 : vector<1x128xf32> to vector<24x128xf32>
      %43 = arith.mulf %40, %42 : vector<24x128xf32>
      %44 = arith.truncf %43 : vector<24x128xf32> to vector<24x128xbf16>
      %c72 = arith.constant 72 : index
      %c0_28 = arith.constant 0 : index
      %45 = vector.load %arg20[%c72, %c0_28] : memref<216x128xbf16, #tpu.memory_space<vmem>>, vector<24x128xbf16>
      tpu.vector_store %arg20[%c72, %c0_28], %44 {strides = array<i32>} : memref<216x128xbf16, #tpu.memory_space<vmem>>, vector<24x128xbf16>,
      %46 = arith.truncf %21 : vector<24x128xf32> to vector<24x128xbf16>
      %c96 = arith.constant 96 : index
      %c0_29 = arith.constant 0 : index
      %47 = vector.load %arg20[%c96, %c0_29] : memref<216x128xbf16, #tpu.memory_space<vmem>>, vector<24x128xbf16>
      tpu.vector_store %arg20[%c96, %c0_29], %46 {strides = array<i32>} : memref<216x128xbf16, #tpu.memory_space<vmem>>, vector<24x128xbf16>,
      %c127_i32 = arith.constant 127 : i32
      %48 = tpu.dynamic_rotate %21 by %c127_i32 dim 1 : vector<24x128xf32>, i32 -> vector<24x128xf32>
      %c5 = arith.constant 5 : index
      %c0_30 = arith.constant 0 : index
      %49 = vector.load %arg5[%c5, %c0_30] : memref<9x128xf32, #tpu.memory_space<vmem>>, vector<1x128xf32>
      %50 = vector.broadcast %49 : vector<1x128xf32> to vector<24x128xf32>
      %51 = arith.mulf %48, %50 : vector<24x128xf32>
      %52 = arith.truncf %51 : vector<24x128xf32> to vector<24x128xbf16>
      %c120 = arith.constant 120 : index
      %c0_31 = arith.constant 0 : index
      %53 = vector.load %arg20[%c120, %c0_31] : memref<216x128xbf16, #tpu.memory_space<vmem>>, vector<24x128xbf16>
      tpu.vector_store %arg20[%c120, %c0_31], %52 {strides = array<i32>} : memref<216x128xbf16, #tpu.memory_space<vmem>>, vector<24x128xbf16>,
      %c121_i32 = arith.constant 121 : i32
      %54 = tpu.dynamic_rotate %21 by %c121_i32 dim 1 : vector<24x128xf32>, i32 -> vector<24x128xf32>
      %c6 = arith.constant 6 : index
      %c0_32 = arith.constant 0 : index
      %55 = vector.load %arg5[%c6, %c0_32] : memref<9x128xf32, #tpu.memory_space<vmem>>, vector<1x128xf32>
      %56 = vector.broadcast %55 : vector<1x128xf32> to vector<24x128xf32>
      %57 = arith.mulf %54, %56 : vector<24x128xf32>
      %58 = arith.truncf %57 : vector<24x128xf32> to vector<24x128xbf16>
      %c144 = arith.constant 144 : index
      %c0_33 = arith.constant 0 : index
      %59 = vector.load %arg20[%c144, %c0_33] : memref<216x128xbf16, #tpu.memory_space<vmem>>, vector<24x128xbf16>
      tpu.vector_store %arg20[%c144, %c0_33], %58 {strides = array<i32>} : memref<216x128xbf16, #tpu.memory_space<vmem>>, vector<24x128xbf16>,
      %c120_i32 = arith.constant 120 : i32
      %60 = tpu.dynamic_rotate %21 by %c120_i32 dim 1 : vector<24x128xf32>, i32 -> vector<24x128xf32>
      %c7 = arith.constant 7 : index
      %c0_34 = arith.constant 0 : index
      %61 = vector.load %arg5[%c7, %c0_34] : memref<9x128xf32, #tpu.memory_space<vmem>>, vector<1x128xf32>
      %62 = vector.broadcast %61 : vector<1x128xf32> to vector<24x128xf32>
      %63 = arith.mulf %60, %62 : vector<24x128xf32>
      %64 = arith.truncf %63 : vector<24x128xf32> to vector<24x128xbf16>
      %c168 = arith.constant 168 : index
      %c0_35 = arith.constant 0 : index
      %65 = vector.load %arg20[%c168, %c0_35] : memref<216x128xbf16, #tpu.memory_space<vmem>>, vector<24x128xbf16>
      tpu.vector_store %arg20[%c168, %c0_35], %64 {strides = array<i32>} : memref<216x128xbf16, #tpu.memory_space<vmem>>, vector<24x128xbf16>,
      %c119_i32 = arith.constant 119 : i32
      %66 = tpu.dynamic_rotate %21 by %c119_i32 dim 1 : vector<24x128xf32>, i32 -> vector<24x128xf32>
      %c8 = arith.constant 8 : index
      %c0_36 = arith.constant 0 : index
      %67 = vector.load %arg5[%c8, %c0_36] : memref<9x128xf32, #tpu.memory_space<vmem>>, vector<1x128xf32>
      %68 = vector.broadcast %67 : vector<1x128xf32> to vector<24x128xf32>
      %69 = arith.mulf %66, %68 : vector<24x128xf32>
      %70 = arith.truncf %69 : vector<24x128xf32> to vector<24x128xbf16>
      %c192 = arith.constant 192 : index
      %c0_37 = arith.constant 0 : index
      %71 = vector.load %arg20[%c192, %c0_37] : memref<216x128xbf16, #tpu.memory_space<vmem>>, vector<24x128xbf16>
      tpu.vector_store %arg20[%c192, %c0_37], %70 {strides = array<i32>} : memref<216x128xbf16, #tpu.memory_space<vmem>>, vector<24x128xbf16>,
      %c0_38 = arith.constant 0 : index
      %c0_39 = arith.constant 0 : index
      %72 = vector.load %arg8[%c0_38, %c0_39] : memref<16x216xbf16, #tpu.memory_space<vmem>>, vector<16x216xbf16>
      %c0_40 = arith.constant 0 : index
      %c0_41 = arith.constant 0 : index
      %73 = vector.load %arg20[%c0_40, %c0_41] : memref<216x128xbf16, #tpu.memory_space<vmem>>, vector<216x128xbf16>
      %cst = arith.constant dense<0.000000e+00> : vector<16x128xf32>
      %74 = tpu.matmul %72, %73, %cst {dimension_numbers = #tpu.dot_dimension_numbers<[1], [0], [0], [1], [0, 0, 1, 1], [], []>} : vector<16x216xbf16>, vector<216x128xbf16>, vector<16x128xf32> -> vector<16x128xf32>
      %c0_42 = arith.constant 0 : index
      %c0_43 = arith.constant 0 : index
      %75 = vector.load %arg9[%c0_42, %c0_43] : memref<16x1xf32, #tpu.memory_space<vmem>>, vector<16x1xf32>
      %76 = vector.broadcast %75 : vector<16x1xf32> to vector<16x128xf32>
      %77 = arith.addf %74, %76 : vector<16x128xf32>
      %cst_44 = arith.constant 0.000000e+00 : f32
      %78 = vector.broadcast %cst_44 : f32 to vector<16x128xf32>
      %79 = arith.maximumf %77, %78 : vector<16x128xf32>
      %c9_i32_45 = arith.constant 9 : i32
      %80 = tpu.dynamic_rotate %79 by %c9_i32_45 dim 1 : vector<16x128xf32>, i32 -> vector<16x128xf32>
      %c0_46 = arith.constant 0 : index
      %c0_47 = arith.constant 0 : index
      %81 = vector.load %arg5[%c0_46, %c0_47] : memref<9x128xf32, #tpu.memory_space<vmem>>, vector<1x128xf32>
      %82 = vector.broadcast %81 : vector<1x128xf32> to vector<16x128xf32>
      %83 = arith.mulf %80, %82 : vector<16x128xf32>
      %84 = arith.truncf %83 : vector<16x128xf32> to vector<16x128xbf16>
      %c0_48 = arith.constant 0 : index
      %c0_49 = arith.constant 0 : index
      %85 = vector.load %arg21[%c0_48, %c0_49] : memref<144x128xbf16, #tpu.memory_space<vmem>>, vector<16x128xbf16>
      tpu.vector_store %arg21[%c0_48, %c0_49], %84 {strides = array<i32>} : memref<144x128xbf16, #tpu.memory_space<vmem>>, vector<16x128xbf16>,
      %c8_i32_50 = arith.constant 8 : i32
      %86 = tpu.dynamic_rotate %79 by %c8_i32_50 dim 1 : vector<16x128xf32>, i32 -> vector<16x128xf32>
      %c1_51 = arith.constant 1 : index
      %c0_52 = arith.constant 0 : index
      %87 = vector.load %arg5[%c1_51, %c0_52] : memref<9x128xf32, #tpu.memory_space<vmem>>, vector<1x128xf32>
      %88 = vector.broadcast %87 : vector<1x128xf32> to vector<16x128xf32>
      %89 = arith.mulf %86, %88 : vector<16x128xf32>
      %90 = arith.truncf %89 : vector<16x128xf32> to vector<16x128xbf16>
      %c16 = arith.constant 16 : index
      %c0_53 = arith.constant 0 : index
      %91 = vector.load %arg21[%c16, %c0_53] : memref<144x128xbf16, #tpu.memory_space<vmem>>, vector<16x128xbf16>
      tpu.vector_store %arg21[%c16, %c0_53], %90 {strides = array<i32>} : memref<144x128xbf16, #tpu.memory_space<vmem>>, vector<16x128xbf16>,
      %c7_i32_54 = arith.constant 7 : i32
      %92 = tpu.dynamic_rotate %79 by %c7_i32_54 dim 1 : vector<16x128xf32>, i32 -> vector<16x128xf32>
      %c2_55 = arith.constant 2 : index
      %c0_56 = arith.constant 0 : index
      %93 = vector.load %arg5[%c2_55, %c0_56] : memref<9x128xf32, #tpu.memory_space<vmem>>, vector<1x128xf32>
      %94 = vector.broadcast %93 : vector<1x128xf32> to vector<16x128xf32>
      %95 = arith.mulf %92, %94 : vector<16x128xf32>
      %96 = arith.truncf %95 : vector<16x128xf32> to vector<16x128xbf16>
      %c32 = arith.constant 32 : index
      %c0_57 = arith.constant 0 : index
      %97 = vector.load %arg21[%c32, %c0_57] : memref<144x128xbf16, #tpu.memory_space<vmem>>, vector<16x128xbf16>
      tpu.vector_store %arg21[%c32, %c0_57], %96 {strides = array<i32>} : memref<144x128xbf16, #tpu.memory_space<vmem>>, vector<16x128xbf16>,
      %c1_i32_58 = arith.constant 1 : i32
      %98 = tpu.dynamic_rotate %79 by %c1_i32_58 dim 1 : vector<16x128xf32>, i32 -> vector<16x128xf32>
      %c3_59 = arith.constant 3 : index
      %c0_60 = arith.constant 0 : index
      %99 = vector.load %arg5[%c3_59, %c0_60] : memref<9x128xf32, #tpu.memory_space<vmem>>, vector<1x128xf32>
      %100 = vector.broadcast %99 : vector<1x128xf32> to vector<16x128xf32>
      %101 = arith.mulf %98, %100 : vector<16x128xf32>
      %102 = arith.truncf %101 : vector<16x128xf32> to vector<16x128xbf16>
      %c48_61 = arith.constant 48 : index
      %c0_62 = arith.constant 0 : index
      %103 = vector.load %arg21[%c48_61, %c0_62] : memref<144x128xbf16, #tpu.memory_space<vmem>>, vector<16x128xbf16>
      tpu.vector_store %arg21[%c48_61, %c0_62], %102 {strides = array<i32>} : memref<144x128xbf16, #tpu.memory_space<vmem>>, vector<16x128xbf16>,
      %104 = arith.truncf %79 : vector<16x128xf32> to vector<16x128xbf16>
      %c64 = arith.constant 64 : index
      %c0_63 = arith.constant 0 : index
      %105 = vector.load %arg21[%c64, %c0_63] : memref<144x128xbf16, #tpu.memory_space<vmem>>, vector<16x128xbf16>
      tpu.vector_store %arg21[%c64, %c0_63], %104 {strides = array<i32>} : memref<144x128xbf16, #tpu.memory_space<vmem>>, vector<16x128xbf16>,
      %c127_i32_64 = arith.constant 127 : i32
      %106 = tpu.dynamic_rotate %79 by %c127_i32_64 dim 1 : vector<16x128xf32>, i32 -> vector<16x128xf32>
      %c5_65 = arith.constant 5 : index
      %c0_66 = arith.constant 0 : index
      %107 = vector.load %arg5[%c5_65, %c0_66] : memref<9x128xf32, #tpu.memory_space<vmem>>, vector<1x128xf32>
      %108 = vector.broadcast %107 : vector<1x128xf32> to vector<16x128xf32>
      %109 = arith.mulf %106, %108 : vector<16x128xf32>
      %110 = arith.truncf %109 : vector<16x128xf32> to vector<16x128xbf16>
      %c80 = arith.constant 80 : index
      %c0_67 = arith.constant 0 : index
      %111 = vector.load %arg21[%c80, %c0_67] : memref<144x128xbf16, #tpu.memory_space<vmem>>, vector<16x128xbf16>
      tpu.vector_store %arg21[%c80, %c0_67], %110 {strides = array<i32>} : memref<144x128xbf16, #tpu.memory_space<vmem>>, vector<16x128xbf16>,
      %c121_i32_68 = arith.constant 121 : i32
      %112 = tpu.dynamic_rotate %79 by %c121_i32_68 dim 1 : vector<16x128xf32>, i32 -> vector<16x128xf32>
      %c6_69 = arith.constant 6 : index
      %c0_70 = arith.constant 0 : index
      %113 = vector.load %arg5[%c6_69, %c0_70] : memref<9x128xf32, #tpu.memory_space<vmem>>, vector<1x128xf32>
      %114 = vector.broadcast %113 : vector<1x128xf32> to vector<16x128xf32>
      %115 = arith.mulf %112, %114 : vector<16x128xf32>
      %116 = arith.truncf %115 : vector<16x128xf32> to vector<16x128xbf16>
      %c96_71 = arith.constant 96 : index
      %c0_72 = arith.constant 0 : index
      %117 = vector.load %arg21[%c96_71, %c0_72] : memref<144x128xbf16, #tpu.memory_space<vmem>>, vector<16x128xbf16>
      tpu.vector_store %arg21[%c96_71, %c0_72], %116 {strides = array<i32>} : memref<144x128xbf16, #tpu.memory_space<vmem>>, vector<16x128xbf16>,
      %c120_i32_73 = arith.constant 120 : i32
      %118 = tpu.dynamic_rotate %79 by %c120_i32_73 dim 1 : vector<16x128xf32>, i32 -> vector<16x128xf32>
      %c7_74 = arith.constant 7 : index
      %c0_75 = arith.constant 0 : index
      %119 = vector.load %arg5[%c7_74, %c0_75] : memref<9x128xf32, #tpu.memory_space<vmem>>, vector<1x128xf32>
      %120 = vector.broadcast %119 : vector<1x128xf32> to vector<16x128xf32>
      %121 = arith.mulf %118, %120 : vector<16x128xf32>
      %122 = arith.truncf %121 : vector<16x128xf32> to vector<16x128xbf16>
      %c112 = arith.constant 112 : index
      %c0_76 = arith.constant 0 : index
      %123 = vector.load %arg21[%c112, %c0_76] : memref<144x128xbf16, #tpu.memory_space<vmem>>, vector<16x128xbf16>
      tpu.vector_store %arg21[%c112, %c0_76], %122 {strides = array<i32>} : memref<144x128xbf16, #tpu.memory_space<vmem>>, vector<16x128xbf16>,
      %c119_i32_77 = arith.constant 119 : i32
      %124 = tpu.dynamic_rotate %79 by %c119_i32_77 dim 1 : vector<16x128xf32>, i32 -> vector<16x128xf32>
      %c8_78 = arith.constant 8 : index
      %c0_79 = arith.constant 0 : index
      %125 = vector.load %arg5[%c8_78, %c0_79] : memref<9x128xf32, #tpu.memory_space<vmem>>, vector<1x128xf32>
      %126 = vector.broadcast %125 : vector<1x128xf32> to vector<16x128xf32>
      %127 = arith.mulf %124, %126 : vector<16x128xf32>
      %128 = arith.truncf %127 : vector<16x128xf32> to vector<16x128xbf16>
      %c128 = arith.constant 128 : index
      %c0_80 = arith.constant 0 : index
      %129 = vector.load %arg21[%c128, %c0_80] : memref<144x128xbf16, #tpu.memory_space<vmem>>, vector<16x128xbf16>
      tpu.vector_store %arg21[%c128, %c0_80], %128 {strides = array<i32>} : memref<144x128xbf16, #tpu.memory_space<vmem>>, vector<16x128xbf16>,
      %c0_81 = arith.constant 0 : index
      %c0_82 = arith.constant 0 : index
      %130 = vector.load %arg10[%c0_81, %c0_82] : memref<16x144xbf16, #tpu.memory_space<vmem>>, vector<16x144xbf16>
      %c0_83 = arith.constant 0 : index
      %c0_84 = arith.constant 0 : index
      %131 = vector.load %arg21[%c0_83, %c0_84] : memref<144x128xbf16, #tpu.memory_space<vmem>>, vector<144x128xbf16>
      %cst_85 = arith.constant dense<0.000000e+00> : vector<16x128xf32>
      %132 = tpu.matmul %130, %131, %cst_85 {dimension_numbers = #tpu.dot_dimension_numbers<[1], [0], [0], [1], [0, 0, 1, 1], [], []>} : vector<16x144xbf16>, vector<144x128xbf16>, vector<16x128xf32> -> vector<16x128xf32>
      %c0_86 = arith.constant 0 : index
      %c0_87 = arith.constant 0 : index
      %133 = vector.load %arg11[%c0_86, %c0_87] : memref<16x1xf32, #tpu.memory_space<vmem>>, vector<16x1xf32>
      %134 = vector.broadcast %133 : vector<16x1xf32> to vector<16x128xf32>
      %135 = arith.addf %132, %134 : vector<16x128xf32>
      %cst_88 = arith.constant 0.000000e+00 : f32
      %136 = vector.broadcast %cst_88 : f32 to vector<16x128xf32>
      %137 = arith.maximumf %135, %136 : vector<16x128xf32>
      %c9_i32_89 = arith.constant 9 : i32
      %138 = tpu.dynamic_rotate %137 by %c9_i32_89 dim 1 : vector<16x128xf32>, i32 -> vector<16x128xf32>
      %c0_90 = arith.constant 0 : index
      %c0_91 = arith.constant 0 : index
      %139 = vector.load %arg5[%c0_90, %c0_91] : memref<9x128xf32, #tpu.memory_space<vmem>>, vector<1x128xf32>
      %140 = vector.broadcast %139 : vector<1x128xf32> to vector<16x128xf32>
      %141 = arith.mulf %138, %140 : vector<16x128xf32>
      %142 = arith.truncf %141 : vector<16x128xf32> to vector<16x128xbf16>
      %c0_92 = arith.constant 0 : index
      %c0_93 = arith.constant 0 : index
      %143 = vector.load %arg21[%c0_92, %c0_93] : memref<144x128xbf16, #tpu.memory_space<vmem>>, vector<16x128xbf16>
      tpu.vector_store %arg21[%c0_92, %c0_93], %142 {strides = array<i32>} : memref<144x128xbf16, #tpu.memory_space<vmem>>, vector<16x128xbf16>,
      %c8_i32_94 = arith.constant 8 : i32
      %144 = tpu.dynamic_rotate %137 by %c8_i32_94 dim 1 : vector<16x128xf32>, i32 -> vector<16x128xf32>
      %c1_95 = arith.constant 1 : index
      %c0_96 = arith.constant 0 : index
      %145 = vector.load %arg5[%c1_95, %c0_96] : memref<9x128xf32, #tpu.memory_space<vmem>>, vector<1x128xf32>
      %146 = vector.broadcast %145 : vector<1x128xf32> to vector<16x128xf32>
      %147 = arith.mulf %144, %146 : vector<16x128xf32>
      %148 = arith.truncf %147 : vector<16x128xf32> to vector<16x128xbf16>
      %c16_97 = arith.constant 16 : index
      %c0_98 = arith.constant 0 : index
      %149 = vector.load %arg21[%c16_97, %c0_98] : memref<144x128xbf16, #tpu.memory_space<vmem>>, vector<16x128xbf16>
      tpu.vector_store %arg21[%c16_97, %c0_98], %148 {strides = array<i32>} : memref<144x128xbf16, #tpu.memory_space<vmem>>, vector<16x128xbf16>,
      %c7_i32_99 = arith.constant 7 : i32
      %150 = tpu.dynamic_rotate %137 by %c7_i32_99 dim 1 : vector<16x128xf32>, i32 -> vector<16x128xf32>
      %c2_100 = arith.constant 2 : index
      %c0_101 = arith.constant 0 : index
      %151 = vector.load %arg5[%c2_100, %c0_101] : memref<9x128xf32, #tpu.memory_space<vmem>>, vector<1x128xf32>
      %152 = vector.broadcast %151 : vector<1x128xf32> to vector<16x128xf32>
      %153 = arith.mulf %150, %152 : vector<16x128xf32>
      %154 = arith.truncf %153 : vector<16x128xf32> to vector<16x128xbf16>
      %c32_102 = arith.constant 32 : index
      %c0_103 = arith.constant 0 : index
      %155 = vector.load %arg21[%c32_102, %c0_103] : memref<144x128xbf16, #tpu.memory_space<vmem>>, vector<16x128xbf16>
      tpu.vector_store %arg21[%c32_102, %c0_103], %154 {strides = array<i32>} : memref<144x128xbf16, #tpu.memory_space<vmem>>, vector<16x128xbf16>,
      %c1_i32_104 = arith.constant 1 : i32
      %156 = tpu.dynamic_rotate %137 by %c1_i32_104 dim 1 : vector<16x128xf32>, i32 -> vector<16x128xf32>
      %c3_105 = arith.constant 3 : index
      %c0_106 = arith.constant 0 : index
      %157 = vector.load %arg5[%c3_105, %c0_106] : memref<9x128xf32, #tpu.memory_space<vmem>>, vector<1x128xf32>
      %158 = vector.broadcast %157 : vector<1x128xf32> to vector<16x128xf32>
      %159 = arith.mulf %156, %158 : vector<16x128xf32>
      %160 = arith.truncf %159 : vector<16x128xf32> to vector<16x128xbf16>
      %c48_107 = arith.constant 48 : index
      %c0_108 = arith.constant 0 : index
      %161 = vector.load %arg21[%c48_107, %c0_108] : memref<144x128xbf16, #tpu.memory_space<vmem>>, vector<16x128xbf16>
      tpu.vector_store %arg21[%c48_107, %c0_108], %160 {strides = array<i32>} : memref<144x128xbf16, #tpu.memory_space<vmem>>, vector<16x128xbf16>,
      %162 = arith.truncf %137 : vector<16x128xf32> to vector<16x128xbf16>
      %c64_109 = arith.constant 64 : index
      %c0_110 = arith.constant 0 : index
      %163 = vector.load %arg21[%c64_109, %c0_110] : memref<144x128xbf16, #tpu.memory_space<vmem>>, vector<16x128xbf16>
      tpu.vector_store %arg21[%c64_109, %c0_110], %162 {strides = array<i32>} : memref<144x128xbf16, #tpu.memory_space<vmem>>, vector<16x128xbf16>,
      %c127_i32_111 = arith.constant 127 : i32
      %164 = tpu.dynamic_rotate %137 by %c127_i32_111 dim 1 : vector<16x128xf32>, i32 -> vector<16x128xf32>
      %c5_112 = arith.constant 5 : index
      %c0_113 = arith.constant 0 : index
      %165 = vector.load %arg5[%c5_112, %c0_113] : memref<9x128xf32, #tpu.memory_space<vmem>>, vector<1x128xf32>
      %166 = vector.broadcast %165 : vector<1x128xf32> to vector<16x128xf32>
      %167 = arith.mulf %164, %166 : vector<16x128xf32>
      %168 = arith.truncf %167 : vector<16x128xf32> to vector<16x128xbf16>
      %c80_114 = arith.constant 80 : index
      %c0_115 = arith.constant 0 : index
      %169 = vector.load %arg21[%c80_114, %c0_115] : memref<144x128xbf16, #tpu.memory_space<vmem>>, vector<16x128xbf16>
      tpu.vector_store %arg21[%c80_114, %c0_115], %168 {strides = array<i32>} : memref<144x128xbf16, #tpu.memory_space<vmem>>, vector<16x128xbf16>,
      %c121_i32_116 = arith.constant 121 : i32
      %170 = tpu.dynamic_rotate %137 by %c121_i32_116 dim 1 : vector<16x128xf32>, i32 -> vector<16x128xf32>
      %c6_117 = arith.constant 6 : index
      %c0_118 = arith.constant 0 : index
      %171 = vector.load %arg5[%c6_117, %c0_118] : memref<9x128xf32, #tpu.memory_space<vmem>>, vector<1x128xf32>
      %172 = vector.broadcast %171 : vector<1x128xf32> to vector<16x128xf32>
      %173 = arith.mulf %170, %172 : vector<16x128xf32>
      %174 = arith.truncf %173 : vector<16x128xf32> to vector<16x128xbf16>
      %c96_119 = arith.constant 96 : index
      %c0_120 = arith.constant 0 : index
      %175 = vector.load %arg21[%c96_119, %c0_120] : memref<144x128xbf16, #tpu.memory_space<vmem>>, vector<16x128xbf16>
      tpu.vector_store %arg21[%c96_119, %c0_120], %174 {strides = array<i32>} : memref<144x128xbf16, #tpu.memory_space<vmem>>, vector<16x128xbf16>,
      %c120_i32_121 = arith.constant 120 : i32
      %176 = tpu.dynamic_rotate %137 by %c120_i32_121 dim 1 : vector<16x128xf32>, i32 -> vector<16x128xf32>
      %c7_122 = arith.constant 7 : index
      %c0_123 = arith.constant 0 : index
      %177 = vector.load %arg5[%c7_122, %c0_123] : memref<9x128xf32, #tpu.memory_space<vmem>>, vector<1x128xf32>
      %178 = vector.broadcast %177 : vector<1x128xf32> to vector<16x128xf32>
      %179 = arith.mulf %176, %178 : vector<16x128xf32>
      %180 = arith.truncf %179 : vector<16x128xf32> to vector<16x128xbf16>
      %c112_124 = arith.constant 112 : index
      %c0_125 = arith.constant 0 : index
      %181 = vector.load %arg21[%c112_124, %c0_125] : memref<144x128xbf16, #tpu.memory_space<vmem>>, vector<16x128xbf16>
      tpu.vector_store %arg21[%c112_124, %c0_125], %180 {strides = array<i32>} : memref<144x128xbf16, #tpu.memory_space<vmem>>, vector<16x128xbf16>,
      %c119_i32_126 = arith.constant 119 : i32
      %182 = tpu.dynamic_rotate %137 by %c119_i32_126 dim 1 : vector<16x128xf32>, i32 -> vector<16x128xf32>
      %c8_127 = arith.constant 8 : index
      %c0_128 = arith.constant 0 : index
      %183 = vector.load %arg5[%c8_127, %c0_128] : memref<9x128xf32, #tpu.memory_space<vmem>>, vector<1x128xf32>
      %184 = vector.broadcast %183 : vector<1x128xf32> to vector<16x128xf32>
      %185 = arith.mulf %182, %184 : vector<16x128xf32>
      %186 = arith.truncf %185 : vector<16x128xf32> to vector<16x128xbf16>
      %c128_129 = arith.constant 128 : index
      %c0_130 = arith.constant 0 : index
      %187 = vector.load %arg21[%c128_129, %c0_130] : memref<144x128xbf16, #tpu.memory_space<vmem>>, vector<16x128xbf16>
      tpu.vector_store %arg21[%c128_129, %c0_130], %186 {strides = array<i32>} : memref<144x128xbf16, #tpu.memory_space<vmem>>, vector<16x128xbf16>,
      %c0_131 = arith.constant 0 : index
      %c0_132 = arith.constant 0 : index
      %188 = vector.load %arg12[%c0_131, %c0_132] : memref<16x144xbf16, #tpu.memory_space<vmem>>, vector<16x144xbf16>
      %c0_133 = arith.constant 0 : index
      %c0_134 = arith.constant 0 : index
      %189 = vector.load %arg21[%c0_133, %c0_134] : memref<144x128xbf16, #tpu.memory_space<vmem>>, vector<144x128xbf16>
      %cst_135 = arith.constant dense<0.000000e+00> : vector<16x128xf32>
      %190 = tpu.matmul %188, %189, %cst_135 {dimension_numbers = #tpu.dot_dimension_numbers<[1], [0], [0], [1], [0, 0, 1, 1], [], []>} : vector<16x144xbf16>, vector<144x128xbf16>, vector<16x128xf32> -> vector<16x128xf32>
      %c0_136 = arith.constant 0 : index
      %c0_137 = arith.constant 0 : index
      %191 = vector.load %arg13[%c0_136, %c0_137] : memref<16x1xf32, #tpu.memory_space<vmem>>, vector<16x1xf32>
      %192 = vector.broadcast %191 : vector<16x1xf32> to vector<16x128xf32>
      %193 = arith.addf %190, %192 : vector<16x128xf32>
      %194 = arith.addf %79, %193 : vector<16x128xf32>
      %cst_138 = arith.constant 0.000000e+00 : f32
      %195 = vector.broadcast %cst_138 : f32 to vector<16x128xf32>
      %196 = arith.maximumf %194, %195 : vector<16x128xf32>
      %c0_139 = arith.constant 0 : index
      %c0_140 = arith.constant 0 : index
      %197 = vector.load %arg14[%c0_139, %c0_140] : memref<16x4xbf16, #tpu.memory_space<vmem>>, vector<16x4xbf16>
      %198 = arith.truncf %15 : vector<4x128xf32> to vector<4x128xbf16>
      %cst_141 = arith.constant dense<0.000000e+00> : vector<16x128xf32>
      %199 = tpu.matmul %197, %198, %cst_141 {dimension_numbers = #tpu.dot_dimension_numbers<[1], [0], [0], [1], [0, 0, 1, 1], [], []>} : vector<16x4xbf16>, vector<4x128xbf16>, vector<16x128xf32> -> vector<16x128xf32>
      %c0_142 = arith.constant 0 : index
      %c0_143 = arith.constant 0 : index
      %200 = vector.load %arg15[%c0_142, %c0_143] : memref<16x16xbf16, #tpu.memory_space<vmem>>, vector<16x16xbf16>
      %201 = arith.truncf %196 : vector<16x128xf32> to vector<16x128xbf16>
      %cst_144 = arith.constant dense<0.000000e+00> : vector<16x128xf32>
      %202 = tpu.matmul %200, %201, %cst_144 {dimension_numbers = #tpu.dot_dimension_numbers<[1], [0], [0], [1], [0, 0, 1, 1], [], []>} : vector<16x16xbf16>, vector<16x128xbf16>, vector<16x128xf32> -> vector<16x128xf32>
      %203 = arith.addf %199, %202 : vector<16x128xf32>
      %c0_145 = arith.constant 0 : index
      %c0_146 = arith.constant 0 : index
      %204 = vector.load %arg16[%c0_145, %c0_146] : memref<16x1xf32, #tpu.memory_space<vmem>>, vector<16x1xf32>
      %205 = vector.broadcast %204 : vector<16x1xf32> to vector<16x128xf32>
      %206 = arith.addf %203, %205 : vector<16x128xf32>
      %207 = math.tanh %206 : vector<16x128xf32>
      %208 = vector.extract_strided_slice %207 {offsets = [0, 0], sizes = [4, 128], strides = [1, 1]} : vector<16x128xf32> to vector<4x128xf32>
      %cst_147 = arith.constant 1.000000e+00 : f32
      %209 = vector.broadcast %cst_147 : f32 to vector<4x128xf32>
      %210 = arith.addf %208, %209 : vector<4x128xf32>
      %cst_148 = arith.constant 5.000000e-01 : f32
      %211 = vector.broadcast %cst_148 : f32 to vector<4x128xf32>
      %212 = arith.mulf %211, %210 : vector<4x128xf32>
      %213 = vector.extract_strided_slice %207 {offsets = [4, 0], sizes = [4, 128], strides = [1, 1]} : vector<16x128xf32> to vector<4x128xf32>
      %cst_149 = arith.constant 1.000000e+00 : f32
      %214 = vector.broadcast %cst_149 : f32 to vector<4x128xf32>
      %215 = arith.addf %213, %214 : vector<4x128xf32>
      %cst_150 = arith.constant 5.000000e-01 : f32
      %216 = vector.broadcast %cst_150 : f32 to vector<4x128xf32>
      %217 = arith.mulf %216, %215 : vector<4x128xf32>
      %218 = vector.extract_strided_slice %207 {offsets = [8, 0], sizes = [4, 128], strides = [1, 1]} : vector<16x128xf32> to vector<4x128xf32>
      %219 = vector.extract_strided_slice %207 {offsets = [12, 0], sizes = [4, 128], strides = [1, 1]} : vector<16x128xf32> to vector<4x128xf32>
      %cst_151 = arith.constant 1.000000e+00 : f32
      %220 = vector.broadcast %cst_151 : f32 to vector<4x128xf32>
      %221 = arith.addf %219, %220 : vector<4x128xf32>
      %cst_152 = arith.constant 5.000000e-01 : f32
      %222 = vector.broadcast %cst_152 : f32 to vector<4x128xf32>
      %223 = arith.mulf %222, %221 : vector<4x128xf32>
      %224 = arith.mulf %16, %212 : vector<4x128xf32>
      %225 = arith.mulf %217, %218 : vector<4x128xf32>
      %226 = arith.addf %224, %225 : vector<4x128xf32>
      %227 = math.tanh %226 : vector<4x128xf32>
      %228 = arith.mulf %227, %223 : vector<4x128xf32>
      %c1_153 = arith.constant 1 : index
      %c0_154 = arith.constant 0 : index
      %c0_155 = arith.constant 0 : index
      %229 = vector.load %arg6[%c1_153, %c0_154, %c0_155] : memref<2x1x128xf32, #tpu.memory_space<vmem>>, vector<1x1x128xf32>
      %230 = vector.shape_cast %229 : vector<1x1x128xf32> to vector<1x128xf32>
      %c1_156 = arith.constant 1 : index
      %c0_157 = arith.constant 0 : index
      %c0_158 = arith.constant 0 : index
      %231 = vector.load %arg7[%c1_156, %c0_157, %c0_158] : memref<2x1x128xf32, #tpu.memory_space<vmem>>, vector<1x1x128xf32>
      %232 = vector.shape_cast %231 : vector<1x1x128xf32> to vector<1x128xf32>
      %233 = vector.broadcast %230 : vector<1x128xf32> to vector<4x128xf32>
      %234 = arith.mulf %233, %228 : vector<4x128xf32>
      %235 = vector.broadcast %232 : vector<1x128xf32> to vector<4x128xf32>
      %236 = arith.mulf %235, %15 : vector<4x128xf32>
      %237 = arith.addf %234, %236 : vector<4x128xf32>
      %c0_159 = arith.constant 0 : index
      %c0_160 = arith.constant 0 : index
      %238 = vector.load %arg17[%c0_159, %c0_160] : memref<4x128xf32, #tpu.memory_space<vmem>>, vector<4x128xf32>
      tpu.vector_store %arg17[%c0_159, %c0_160], %237 {strides = array<i32>} : memref<4x128xf32, #tpu.memory_space<vmem>>, vector<4x128xf32>,
      %239 = vector.broadcast %230 : vector<1x128xf32> to vector<4x128xf32>
      %240 = arith.mulf %239, %226 : vector<4x128xf32>
      %241 = vector.broadcast %232 : vector<1x128xf32> to vector<4x128xf32>
      %242 = arith.mulf %241, %16 : vector<4x128xf32>
      %243 = arith.addf %240, %242 : vector<4x128xf32>
      %c0_161 = arith.constant 0 : index
      %c0_162 = arith.constant 0 : index
      %244 = vector.load %arg18[%c0_161, %c0_162] : memref<4x128xf32, #tpu.memory_space<vmem>>, vector<4x128xf32>
      tpu.vector_store %arg18[%c0_161, %c0_162], %243 {strides = array<i32>} : memref<4x128xf32, #tpu.memory_space<vmem>>, vector<4x128xf32>,
    } else {
    }
    return
  }
  func.func @transform_0(%arg0: i32, %arg1: memref<1xi32, #tpu.memory_space<smem>>) -> (i32, i32, i32) {
    %c0_i32 = arith.constant 0 : i32
    %c0_i32_0 = arith.constant 0 : i32
    %c0_i32_1 = arith.constant 0 : i32
    return %arg0, %c0_i32, %c0_i32_0 : i32, i32, i32
  }
  func.func @transform_1(%arg0: i32, %arg1: memref<1xi32, #tpu.memory_space<smem>>) -> (i32, i32) {
    %c0_i32 = arith.constant 0 : i32
    %c0_i32_0 = arith.constant 0 : i32
    %c0_i32_1 = arith.constant 0 : i32
    return %c0_i32, %c0_i32_0 : i32, i32
  }
  func.func @transform_2(%arg0: i32, %arg1: memref<1xi32, #tpu.memory_space<smem>>) -> (i32, i32) {
    %c0_i32 = arith.constant 0 : i32
    %c0_i32_0 = arith.constant 0 : i32
    %c0_i32_1 = arith.constant 0 : i32
    return %c0_i32, %c0_i32_0 : i32, i32
  }
  func.func @transform_3(%arg0: i32, %arg1: memref<1xi32, #tpu.memory_space<smem>>) -> (i32, i32) {
    %c0_i32 = arith.constant 0 : i32
    %c0_i32_0 = arith.constant 0 : i32
    %c0_i32_1 = arith.constant 0 : i32
    return %c0_i32, %c0_i32_0 : i32, i32
  }
  func.func @transform_4(%arg0: i32, %arg1: memref<1xi32, #tpu.memory_space<smem>>) -> (i32, i32, i32) {
    %c0_i32 = arith.constant 0 : i32
    %c0_i32_0 = arith.constant 0 : i32
    %c0_i32_1 = arith.constant 0 : i32
    return %arg0, %c0_i32, %c0_i32_0 : i32, i32, i32
  }
  func.func @transform_5(%arg0: i32, %arg1: memref<1xi32, #tpu.memory_space<smem>>) -> (i32, i32, i32) {
    %c0_i32 = arith.constant 0 : i32
    %c0_i32_0 = arith.constant 0 : i32
    %c0_i32_1 = arith.constant 0 : i32
    return %arg0, %c0_i32, %c0_i32_0 : i32, i32, i32
  }
  func.func @transform_6(%arg0: i32, %arg1: memref<1xi32, #tpu.memory_space<smem>>) -> (i32, i32) {
    %c0_i32 = arith.constant 0 : i32
    %c0_i32_0 = arith.constant 0 : i32
    %c0_i32_1 = arith.constant 0 : i32
    return %c0_i32, %c0_i32_0 : i32, i32
  }
  func.func @transform_7(%arg0: i32, %arg1: memref<1xi32, #tpu.memory_space<smem>>) -> (i32, i32) {
    %c0_i32 = arith.constant 0 : i32
    %c0_i32_0 = arith.constant 0 : i32
    %c0_i32_1 = arith.constant 0 : i32
    return %c0_i32, %c0_i32_0 : i32, i32
  }
  func.func @transform_8(%arg0: i32, %arg1: memref<1xi32, #tpu.memory_space<smem>>) -> (i32, i32) {
    %c0_i32 = arith.constant 0 : i32
    %c0_i32_0 = arith.constant 0 : i32
    %c0_i32_1 = arith.constant 0 : i32
    return %c0_i32, %c0_i32_0 : i32, i32
  }
  func.func @transform_9(%arg0: i32, %arg1: memref<1xi32, #tpu.memory_space<smem>>) -> (i32, i32) {
    %c0_i32 = arith.constant 0 : i32
    %c0_i32_0 = arith.constant 0 : i32
    %c0_i32_1 = arith.constant 0 : i32
    return %c0_i32, %c0_i32_0 : i32, i32
  }
  func.func @transform_10(%arg0: i32, %arg1: memref<1xi32, #tpu.memory_space<smem>>) -> (i32, i32) {
    %c0_i32 = arith.constant 0 : i32
    %c0_i32_0 = arith.constant 0 : i32
    %c0_i32_1 = arith.constant 0 : i32
    return %c0_i32, %c0_i32_0 : i32, i32
  }
  func.func @transform_11(%arg0: i32, %arg1: memref<1xi32, #tpu.memory_space<smem>>) -> (i32, i32) {
    %c0_i32 = arith.constant 0 : i32
    %c0_i32_0 = arith.constant 0 : i32
    %c0_i32_1 = arith.constant 0 : i32
    return %c0_i32, %c0_i32_0 : i32, i32
  }
  func.func @transform_12(%arg0: i32, %arg1: memref<1xi32, #tpu.memory_space<smem>>) -> (i32, i32) {
    %c0_i32 = arith.constant 0 : i32
    %c0_i32_0 = arith.constant 0 : i32
    %c0_i32_1 = arith.constant 0 : i32
    return %c0_i32, %c0_i32_0 : i32, i32
  }
  func.func @transform_13(%arg0: i32, %arg1: memref<1xi32, #tpu.memory_space<smem>>) -> (i32, i32) {
    %c0_i32 = arith.constant 0 : i32
    %c0_i32_0 = arith.constant 0 : i32
    %c0_i32_1 = arith.constant 0 : i32
    return %c0_i32, %c0_i32_0 : i32, i32
  }
  func.func @transform_14(%arg0: i32, %arg1: memref<1xi32, #tpu.memory_space<smem>>) -> (i32, i32) {
    %c0_i32 = arith.constant 0 : i32
    %c0_i32_0 = arith.constant 0 : i32
    %c0_i32_1 = arith.constant 0 : i32
    return %c0_i32, %c0_i32_0 : i32, i32
  }
  func.func @transform_15(%arg0: i32, %arg1: memref<1xi32, #tpu.memory_space<smem>>) -> (i32, i32) {
    %c0_i32 = arith.constant 0 : i32
    %c0_i32_0 = arith.constant 0 : i32
    %c0_i32_1 = arith.constant 0 : i32
    return %c0_i32, %c0_i32_0 : i32, i32
  }
  func.func @transform_16(%arg0: i32, %arg1: memref<1xi32, #tpu.memory_space<smem>>) -> (i32, i32) {
    %c0_i32 = arith.constant 0 : i32
    %c0_i32_0 = arith.constant 0 : i32
    %c0_i32_1 = arith.constant 0 : i32
    return %c0_i32, %c0_i32_0 : i32, i32
  }
}

</mosaic_0001>

<llo_original>
// kernel: rnn_layer_forward.1
$region0: #{rnn_layer_forward.1}
  #allocation0 [shape = 'u32[]', space=smem, size = 0x4, offset = 0x4, fixed_abs, tag = 'smem constant byte address 0x4 - core index']
  #allocation1 [shape = 'u32[72,128]{1,0:T(1,128)}', space=vmem, size = 0x9000, scoped, tag = 'internal scratch']
  #allocation2 [shape = 'f32[24,128]{1,0:T(8,128)}', space=vmem, size = 0x3000, scoped, tag = 'scratch operand']
  #allocation3 [shape = 'bf16[216,128]{1,0:T(8,128)(2,1)}', space=vmem, size = 0xd800, scoped, tag = 'scratch operand']
  #allocation4 [shape = 'bf16[144,128]{1,0:T(8,128)(2,1)}', space=vmem, size = 0x9000, scoped, tag = 'scratch operand']
  #allocation5 [shape = 's32[1]{0}', space=sflag, size = 0x4, scoped, tag = 'scoped memory for rnn_layer_forward.1']
  #allocation6 [shape = 's32[1]{0:T(128)S(6)}', space=smem, size = 0x200, scoped, tag = 'prefetched SMEM operand 0']
  %s0 = inlined_call_operand.<no memory space> [shape: s32[1], index: 0, kind: input, shape index: {}]
  %s1 = inlined_call_operand.vmem [shape: f32[4,18,128], index: 1, kind: input, shape index: {}]
  %s2 = inlined_call_operand.vmem [shape: f32[4,128], index: 2, kind: input, shape index: {}]
  %s3 = inlined_call_operand.vmem [shape: f32[4,128], index: 3, kind: input, shape index: {}]
  %s4 = inlined_call_operand.vmem [shape: f32[9,128], index: 4, kind: input, shape index: {}]
  %s5 = inlined_call_operand.vmem [shape: f32[4,1,128], index: 5, kind: input, shape index: {}]
  %s6 = inlined_call_operand.vmem [shape: f32[4,1,128], index: 6, kind: input, shape index: {}]
  %s7 = inlined_call_operand.vmem [shape: bf16[16,216], index: 7, kind: input, shape index: {}]
  %s8 = inlined_call_operand.vmem [shape: f32[16,1], index: 8, kind: input, shape index: {}]
  %s9 = inlined_call_operand.vmem [shape: bf16[16,144], index: 9, kind: input, shape index: {}]
  %s10 = inlined_call_operand.vmem [shape: f32[16,1], index: 10, kind: input, shape index: {}]
  %s11 = inlined_call_operand.vmem [shape: bf16[16,144], index: 11, kind: input, shape index: {}]
  %s12 = inlined_call_operand.vmem [shape: f32[16,1], index: 12, kind: input, shape index: {}]
  %s13 = inlined_call_operand.vmem [shape: bf16[16,4], index: 13, kind: input, shape index: {}]
  %s14 = inlined_call_operand.vmem [shape: bf16[16,16], index: 14, kind: input, shape index: {}]
  %s15 = inlined_call_operand.vmem [shape: f32[16,1], index: 15, kind: input, shape index: {}]
  %s16 = inlined_call_operand.vmem [shape: f32[4,128], index: 16, kind: output, shape index: {0}]
  %s17 = inlined_call_operand.vmem [shape: f32[4,128], index: 17, kind: output, shape index: {1}]
  %18 = xla_tuple %s16, %s17
  %s19 = sld [smem:[#allocation0]]
  $region113: #{rnn_layer_forward.1} parent=0
    _
  %s21 = ssub.s32 1, %s19
  %s22 = scalar_select 0, %s21, %s19
  %23 = sst [smem:[#allocation6]] %s0
  loop: start=0, step=1, limit=4
  $region2: #{rnn_layer_forward.1} parent=0 // loop_pre_header
    _
  $region3: #{rnn_layer_forward.1} parent=0 // loop_header
    %s25 = sphi 0, %s29
    %p26 = scmp.ge.s32.totalorder %s25, 4
    %s35 = sphi 0, %s37
    %s38 = sphi 0, %s35
    %s39 = sphi 0, %s38
    %s55 = sphi 0, %s39
    %s59 = sphi 0, %s59
    %s61 = sphi 0, %s59
    %s62 = sphi 0, %s61
    %s76 = sphi 0, %s62
    %s80 = sphi 0, %s80
    %s82 = sphi 0, %s80
    %s83 = sphi 0, %s82
    %s97 = sphi 0, %s83
    %s101 = sphi 0, %s101
    %s103 = sphi 0, %s101
    %s104 = sphi 0, %s103
    %s118 = sphi 0, %s104
    %s124 = sphi 0, %s126
    %s127 = sphi 0, %s124
    %s128 = sphi 0, %s127
    %s144 = sphi 0, %s128
    %s150 = sphi 0, %s152
    %s153 = sphi 0, %s150
    %s154 = sphi 0, %s153
    %s170 = sphi 0, %s154
    %s174 = sphi 0, %s174
    %s176 = sphi 0, %s174
    %s177 = sphi 0, %s176
    %s191 = sphi 0, %s177
    %s195 = sphi 0, %s195
    %s197 = sphi 0, %s195
    %s198 = sphi 0, %s197
    %s212 = sphi 0, %s198
    %s216 = sphi 0, %s216
    %s218 = sphi 0, %s216
    %s219 = sphi 0, %s218
    %s233 = sphi 0, %s219
    %s237 = sphi 0, %s237
    %s239 = sphi 0, %s237
    %s240 = sphi 0, %s239
    %s254 = sphi 0, %s240
    %s258 = sphi 0, %s258
    %s260 = sphi 0, %s258
    %s261 = sphi 0, %s260
    %s275 = sphi 0, %s261
    %s279 = sphi 0, %s279
    %s281 = sphi 0, %s279
    %s282 = sphi 0, %s281
    %s296 = sphi 0, %s282
    %s300 = sphi 0, %s300
    %s302 = sphi 0, %s300
    %s303 = sphi 0, %s302
    %s317 = sphi 0, %s303
    %s321 = sphi 0, %s321
    %s323 = sphi 0, %s321
    %s324 = sphi 0, %s323
    %s338 = sphi 0, %s324
    %s342 = sphi 0, %s342
    %s344 = sphi 0, %s342
    %s345 = sphi 0, %s344
    %s359 = sphi 0, %s345
    %s363 = sphi 0, %s363
    %s365 = sphi 0, %s363
    %s366 = sphi 0, %s365
    %s380 = sphi 0, %s366
    %s384 = sphi 0, %s384
    %s386 = sphi 0, %s384
    %s387 = sphi 0, %s386
    %s401 = sphi 0, %s387
  $region4: #{rnn_layer_forward.1} parent=0 // loop_header_branch
    %28 = sbr.rel (%p26) target = $region8
  $region5: #{rnn_layer_forward.1} parent=0 // loop_body
    %s30 = ssub.s32 %s25, 1
    %s31 = ssub.s32 %s25, 2
    %s32 = sadd.s32 %s25, 1
    %s33 = ssub.s32 %s25, %s32
    %p34 = scmp.eq.s32.totalorder %s33, 0
    %s36 = sadd.s32 %s35, 1
    %s37 = scalar_select %p34, %s35, %s36
    %p40 = pneg %p34
    %p41 = scmp.eq.s32.totalorder %s25, 1
    %p42 = por %p40, %p41
    %p43 = scmp.ne.s32.totalorder %s35, %s38
    %p44 = scmp.eq.s32.totalorder %s25, 0
    %p45 = por %p43, %p44
    %p46 = scmp.ne.s32.totalorder %s35, %s38
    %p47 = scmp.eq.s32.totalorder %s30, 1
    %p48 = por %p46, %p47
    %p49 = scmp.ne.s32.totalorder %s38, %s39
    %p50 = scmp.eq.s32.totalorder %s30, 0
    %p51 = por %p49, %p50
    %p52 = scmp.ne.s32.totalorder %s38, %s39
    %p53 = scmp.eq.s32.totalorder %s31, 1
    %p54 = por %p52, %p53
    %p56 = scmp.ne.s32.totalorder %s39, %s55
    %p57 = scmp.eq.s32.totalorder %s31, 0
    %p58 = por %p56, %p57
    %s60 = sadd.s32 %s59, 1
    %p63 = scmp.eq.s32.totalorder %s25, 1
    %p64 = scmp.ne.s32.totalorder %s59, %s61
    %p65 = scmp.eq.s32.totalorder %s25, 0
    %p66 = por %p64, %p65
    %p67 = scmp.ne.s32.totalorder %s59, %s61
    %p68 = scmp.eq.s32.totalorder %s30, 1
    %p69 = por %p67, %p68
    %p70 = scmp.ne.s32.totalorder %s61, %s62
    %p71 = scmp.eq.s32.totalorder %s30, 0
    %p72 = por %p70, %p71
    %p73 = scmp.ne.s32.totalorder %s61, %s62
    %p74 = scmp.eq.s32.totalorder %s31, 1
    %p75 = por %p73, %p74
    %p77 = scmp.ne.s32.totalorder %s62, %s76
    %p78 = scmp.eq.s32.totalorder %s31, 0
    %p79 = por %p77, %p78
    %s81 = sadd.s32 %s80, 1
    %p84 = scmp.eq.s32.totalorder %s25, 1
    %p85 = scmp.ne.s32.totalorder %s80, %s82
    %p86 = scmp.eq.s32.totalorder %s25, 0
    %p87 = por %p85, %p86
    %p88 = scmp.ne.s32.totalorder %s80, %s82
    %p89 = scmp.eq.s32.totalorder %s30, 1
    %p90 = por %p88, %p89
    %p91 = scmp.ne.s32.totalorder %s82, %s83
    %p92 = scmp.eq.s32.totalorder %s30, 0
    %p93 = por %p91, %p92
    %p94 = scmp.ne.s32.totalorder %s82, %s83
    %p95 = scmp.eq.s32.totalorder %s31, 1
    %p96 = por %p94, %p95
    %p98 = scmp.ne.s32.totalorder %s83, %s97
    %p99 = scmp.eq.s32.totalorder %s31, 0
    %p100 = por %p98, %p99
    %s102 = sadd.s32 %s101, 1
    %p105 = scmp.eq.s32.totalorder %s25, 1
    %p106 = scmp.ne.s32.totalorder %s101, %s103
    %p107 = scmp.eq.s32.totalorder %s25, 0
    %p108 = por %p106, %p107
    %p109 = scmp.ne.s32.totalorder %s101, %s103
    %p110 = scmp.eq.s32.totalorder %s30, 1
    %p111 = por %p109, %p110
    %p112 = scmp.ne.s32.totalorder %s103, %s104
    %p113 = scmp.eq.s32.totalorder %s30, 0
    %p114 = por %p112, %p113
    %p115 = scmp.ne.s32.totalorder %s103, %s104
    %p116 = scmp.eq.s32.totalorder %s31, 1
    %p117 = por %p115, %p116
    %p119 = scmp.ne.s32.totalorder %s104, %s118
    %p120 = scmp.eq.s32.totalorder %s31, 0
    %p121 = por %p119, %p120
    %s122 = ssub.s32 %s25, %s32
    %p123 = scmp.eq.s32.totalorder %s122, 0
    %s125 = sadd.s32 %s124, 1
    %s126 = scalar_select %p123, %s124, %s125
    %p129 = pneg %p123
    %p130 = scmp.eq.s32.totalorder %s25, 1
    %p131 = por %p129, %p130
    %p132 = scmp.ne.s32.totalorder %s124, %s127
    %p133 = scmp.eq.s32.totalorder %s25, 0
    %p134 = por %p132, %p133
    %p135 = scmp.ne.s32.totalorder %s124, %s127
    %p136 = scmp.eq.s32.totalorder %s30, 1
    %p137 = por %p135, %p136
    %p138 = scmp.ne.s32.totalorder %s127, %s128
    %p139 = scmp.eq.s32.totalorder %s30, 0
    %p140 = por %p138, %p139
    %p141 = scmp.ne.s32.totalorder %s127, %s128
    %p142 = scmp.eq.s32.totalorder %s31, 1
    %p143 = por %p141, %p142
    %p145 = scmp.ne.s32.totalorder %s128, %s144
    %p146 = scmp.eq.s32.totalorder %s31, 0
    %p147 = por %p145, %p146
    %s148 = ssub.s32 %s25, %s32
    %p149 = scmp.eq.s32.totalorder %s148, 0
    %s151 = sadd.s32 %s150, 1
    %s152 = scalar_select %p149, %s150, %s151
    %p155 = pneg %p149
    %p156 = scmp.eq.s32.totalorder %s25, 1
    %p157 = por %p155, %p156
    %p158 = scmp.ne.s32.totalorder %s150, %s153
    %p159 = scmp.eq.s32.totalorder %s25, 0
    %p160 = por %p158, %p159
    %p161 = scmp.ne.s32.totalorder %s150, %s153
    %p162 = scmp.eq.s32.totalorder %s30, 1
    %p163 = por %p161, %p162
    %p164 = scmp.ne.s32.totalorder %s153, %s154
    %p165 = scmp.eq.s32.totalorder %s30, 0
    %p166 = por %p164, %p165
    %p167 = scmp.ne.s32.totalorder %s153, %s154
    %p168 = scmp.eq.s32.totalorder %s31, 1
    %p169 = por %p167, %p168
    %p171 = scmp.ne.s32.totalorder %s154, %s170
    %p172 = scmp.eq.s32.totalorder %s31, 0
    %p173 = por %p171, %p172
    %s175 = sadd.s32 %s174, 1
    %p178 = scmp.eq.s32.totalorder %s25, 1
    %p179 = scmp.ne.s32.totalorder %s174, %s176
    %p180 = scmp.eq.s32.totalorder %s25, 0
    %p181 = por %p179, %p180
    %p182 = scmp.ne.s32.totalorder %s174, %s176
    %p183 = scmp.eq.s32.totalorder %s30, 1
    %p184 = por %p182, %p183
    %p185 = scmp.ne.s32.totalorder %s176, %s177
    %p186 = scmp.eq.s32.totalorder %s30, 0
    %p187 = por %p185, %p186
    %p188 = scmp.ne.s32.totalorder %s176, %s177
    %p189 = scmp.eq.s32.totalorder %s31, 1
    %p190 = por %p188, %p189
    %p192 = scmp.ne.s32.totalorder %s177, %s191
    %p193 = scmp.eq.s32.totalorder %s31, 0
    %p194 = por %p192, %p193
    %s196 = sadd.s32 %s195, 1
    %p199 = scmp.eq.s32.totalorder %s25, 1
    %p200 = scmp.ne.s32.totalorder %s195, %s197
    %p201 = scmp.eq.s32.totalorder %s25, 0
    %p202 = por %p200, %p201
    %p203 = scmp.ne.s32.totalorder %s195, %s197
    %p204 = scmp.eq.s32.totalorder %s30, 1
    %p205 = por %p203, %p204
    %p206 = scmp.ne.s32.totalorder %s197, %s198
    %p207 = scmp.eq.s32.totalorder %s30, 0
    %p208 = por %p206, %p207
    %p209 = scmp.ne.s32.totalorder %s197, %s198
    %p210 = scmp.eq.s32.totalorder %s31, 1
    %p211 = por %p209, %p210
    %p213 = scmp.ne.s32.totalorder %s198, %s212
    %p214 = scmp.eq.s32.totalorder %s31, 0
    %p215 = por %p213, %p214
    %s217 = sadd.s32 %s216, 1
    %p220 = scmp.eq.s32.totalorder %s25, 1
    %p221 = scmp.ne.s32.totalorder %s216, %s218
    %p222 = scmp.eq.s32.totalorder %s25, 0
    %p223 = por %p221, %p222
    %p224 = scmp.ne.s32.totalorder %s216, %s218
    %p225 = scmp.eq.s32.totalorder %s30, 1
    %p226 = por %p224, %p225
    %p227 = scmp.ne.s32.totalorder %s218, %s219
    %p228 = scmp.eq.s32.totalorder %s30, 0
    %p229 = por %p227, %p228
    %p230 = scmp.ne.s32.totalorder %s218, %s219
    %p231 = scmp.eq.s32.totalorder %s31, 1
    %p232 = por %p230, %p231
    %p234 = scmp.ne.s32.totalorder %s219, %s233
    %p235 = scmp.eq.s32.totalorder %s31, 0
    %p236 = por %p234, %p235
    %s238 = sadd.s32 %s237, 1
    %p241 = scmp.eq.s32.totalorder %s25, 1
    %p242 = scmp.ne.s32.totalorder %s237, %s239
    %p243 = scmp.eq.s32.totalorder %s25, 0
    %p244 = por %p242, %p243
    %p245 = scmp.ne.s32.totalorder %s237, %s239
    %p246 = scmp.eq.s32.totalorder %s30, 1
    %p247 = por %p245, %p246
    %p248 = scmp.ne.s32.totalorder %s239, %s240
    %p249 = scmp.eq.s32.totalorder %s30, 0
    %p250 = por %p248, %p249
    %p251 = scmp.ne.s32.totalorder %s239, %s240
    %p252 = scmp.eq.s32.totalorder %s31, 1
    %p253 = por %p251, %p252
    %p255 = scmp.ne.s32.totalorder %s240, %s254
    %p256 = scmp.eq.s32.totalorder %s31, 0
    %p257 = por %p255, %p256
    %s259 = sadd.s32 %s258, 1
    %p262 = scmp.eq.s32.totalorder %s25, 1
    %p263 = scmp.ne.s32.totalorder %s258, %s260
    %p264 = scmp.eq.s32.totalorder %s25, 0
    %p265 = por %p263, %p264
    %p266 = scmp.ne.s32.totalorder %s258, %s260
    %p267 = scmp.eq.s32.totalorder %s30, 1
    %p268 = por %p266, %p267
    %p269 = scmp.ne.s32.totalorder %s260, %s261
    %p270 = scmp.eq.s32.totalorder %s30, 0
    %p271 = por %p269, %p270
    %p272 = scmp.ne.s32.totalorder %s260, %s261
    %p273 = scmp.eq.s32.totalorder %s31, 1
    %p274 = por %p272, %p273
    %p276 = scmp.ne.s32.totalorder %s261, %s275
    %p277 = scmp.eq.s32.totalorder %s31, 0
    %p278 = por %p276, %p277
    %s280 = sadd.s32 %s279, 1
    %p283 = scmp.eq.s32.totalorder %s25, 1
    %p284 = scmp.ne.s32.totalorder %s279, %s281
    %p285 = scmp.eq.s32.totalorder %s25, 0
    %p286 = por %p284, %p285
    %p287 = scmp.ne.s32.totalorder %s279, %s281
    %p288 = scmp.eq.s32.totalorder %s30, 1
    %p289 = por %p287, %p288
    %p290 = scmp.ne.s32.totalorder %s281, %s282
    %p291 = scmp.eq.s32.totalorder %s30, 0
    %p292 = por %p290, %p291
    %p293 = scmp.ne.s32.totalorder %s281, %s282
    %p294 = scmp.eq.s32.totalorder %s31, 1
    %p295 = por %p293, %p294
    %p297 = scmp.ne.s32.totalorder %s282, %s296
    %p298 = scmp.eq.s32.totalorder %s31, 0
    %p299 = por %p297, %p298
    %s301 = sadd.s32 %s300, 1
    %p304 = scmp.eq.s32.totalorder %s25, 1
    %p305 = scmp.ne.s32.totalorder %s300, %s302
    %p306 = scmp.eq.s32.totalorder %s25, 0
    %p307 = por %p305, %p306
    %p308 = scmp.ne.s32.totalorder %s300, %s302
    %p309 = scmp.eq.s32.totalorder %s30, 1
    %p310 = por %p308, %p309
    %p311 = scmp.ne.s32.totalorder %s302, %s303
    %p312 = scmp.eq.s32.totalorder %s30, 0
    %p313 = por %p311, %p312
    %p314 = scmp.ne.s32.totalorder %s302, %s303
    %p315 = scmp.eq.s32.totalorder %s31, 1
    %p316 = por %p314, %p315
    %p318 = scmp.ne.s32.totalorder %s303, %s317
    %p319 = scmp.eq.s32.totalorder %s31, 0
    %p320 = por %p318, %p319
    %s322 = sadd.s32 %s321, 1
    %p325 = scmp.eq.s32.totalorder %s25, 1
    %p326 = scmp.ne.s32.totalorder %s321, %s323
    %p327 = scmp.eq.s32.totalorder %s25, 0
    %p328 = por %p326, %p327
    %p329 = scmp.ne.s32.totalorder %s321, %s323
    %p330 = scmp.eq.s32.totalorder %s30, 1
    %p331 = por %p329, %p330
    %p332 = scmp.ne.s32.totalorder %s323, %s324
    %p333 = scmp.eq.s32.totalorder %s30, 0
    %p334 = por %p332, %p333
    %p335 = scmp.ne.s32.totalorder %s323, %s324
    %p336 = scmp.eq.s32.totalorder %s31, 1
    %p337 = por %p335, %p336
    %p339 = scmp.ne.s32.totalorder %s324, %s338
    %p340 = scmp.eq.s32.totalorder %s31, 0
    %p341 = por %p339, %p340
    %s343 = sadd.s32 %s342, 1
    %p346 = scmp.eq.s32.totalorder %s25, 1
    %p347 = scmp.ne.s32.totalorder %s342, %s344
    %p348 = scmp.eq.s32.totalorder %s25, 0
    %p349 = por %p347, %p348
    %p350 = scmp.ne.s32.totalorder %s342, %s344
    %p351 = scmp.eq.s32.totalorder %s30, 1
    %p352 = por %p350, %p351
    %p353 = scmp.ne.s32.totalorder %s344, %s345
    %p354 = scmp.eq.s32.totalorder %s30, 0
    %p355 = por %p353, %p354
    %p356 = scmp.ne.s32.totalorder %s344, %s345
    %p357 = scmp.eq.s32.totalorder %s31, 1
    %p358 = por %p356, %p357
    %p360 = scmp.ne.s32.totalorder %s345, %s359
    %p361 = scmp.eq.s32.totalorder %s31, 0
    %p362 = por %p360, %p361
    %s364 = sadd.s32 %s363, 1
    %p367 = scmp.eq.s32.totalorder %s25, 1
    %p368 = scmp.ne.s32.totalorder %s363, %s365
    %p369 = scmp.eq.s32.totalorder %s25, 0
    %p370 = por %p368, %p369
    %p371 = scmp.ne.s32.totalorder %s363, %s365
    %p372 = scmp.eq.s32.totalorder %s30, 1
    %p373 = por %p371, %p372
    %p374 = scmp.ne.s32.totalorder %s365, %s366
    %p375 = scmp.eq.s32.totalorder %s30, 0
    %p376 = por %p374, %p375
    %p377 = scmp.ne.s32.totalorder %s365, %s366
    %p378 = scmp.eq.s32.totalorder %s31, 1
    %p379 = por %p377, %p378
    %p381 = scmp.ne.s32.totalorder %s366, %s380
    %p382 = scmp.eq.s32.totalorder %s31, 0
    %p383 = por %p381, %p382
    %s385 = sadd.s32 %s384, 1
    %p388 = scmp.eq.s32.totalorder %s25, 1
    %p389 = scmp.ne.s32.totalorder %s384, %s386
    %p390 = scmp.eq.s32.totalorder %s25, 0
    %p391 = por %p389, %p390
    %p392 = scmp.ne.s32.totalorder %s384, %s386
    %p393 = scmp.eq.s32.totalorder %s30, 1
    %p394 = por %p392, %p393
    %p395 = scmp.ne.s32.totalorder %s386, %s387
    %p396 = scmp.eq.s32.totalorder %s30, 0
    %p397 = por %p395, %p396
    %p398 = scmp.ne.s32.totalorder %s386, %s387
    %p399 = scmp.eq.s32.totalorder %s31, 1
    %p400 = por %p398, %p399
    %p402 = scmp.ne.s32.totalorder %s387, %s401
    %p403 = scmp.eq.s32.totalorder %s31, 0
    %p404 = por %p402, %p403
    %p405 = scmp.le.s32.totalorder 1, %s25
    %p406 = scmp.lt.s32.totalorder %s25, 3
    %p407 = pnand %p405, %p406
    %p408 = pneg %p407
    // Predicated region
    $region9: #{rnn_layer_forward.1} parent=5 // pred_check
      _
    $region10: #{rnn_layer_forward.1} parent=5 // pred_check_branch
      %410 = sbr.rel (%p407) target = $region12
    $region11: #{rnn_layer_forward.1} parent=5 // pred_region
      %s411 = ssub.s32 %s25, 1
      // Predicated region
      $region13: #{rnn_layer_forward.1} parent=11 // pred_check
        %p412 = pneg %p72
      $region14: #{rnn_layer_forward.1} parent=11 // pred_check_branch
        %414 = sbr.rel (%p412) target = $region16
      $region15: #{rnn_layer_forward.1} parent=11 // pred_region
        _
      $region16: #{rnn_layer_forward.1} parent=11 // pred_fallthru
        _
      // Predicated region
      $region17: #{rnn_layer_forward.1} parent=11 // pred_check
        %p415 = pneg %p93
      $region18: #{rnn_layer_forward.1} parent=11 // pred_check_branch
        %417 = sbr.rel (%p415) target = $region20
      $region19: #{rnn_layer_forward.1} parent=11 // pred_region
        _
      $region20: #{rnn_layer_forward.1} parent=11 // pred_fallthru
        _
      // Predicated region
      $region21: #{rnn_layer_forward.1} parent=11 // pred_check
        %p418 = pneg %p114
      $region22: #{rnn_layer_forward.1} parent=11 // pred_check_branch
        %420 = sbr.rel (%p418) target = $region24
      $region23: #{rnn_layer_forward.1} parent=11 // pred_region
        _
      $region24: #{rnn_layer_forward.1} parent=11 // pred_fallthru
        _
      // Predicated region
      $region25: #{rnn_layer_forward.1} parent=11 // pred_check
        %p421 = pneg %p187
      $region26: #{rnn_layer_forward.1} parent=11 // pred_check_branch
        %423 = sbr.rel (%p421) target = $region28
      $region27: #{rnn_layer_forward.1} parent=11 // pred_region
        _
      $region28: #{rnn_layer_forward.1} parent=11 // pred_fallthru
        _
      // Predicated region
      $region29: #{rnn_layer_forward.1} parent=11 // pred_check
        %p424 = pneg %p208
      $region30: #{rnn_layer_forward.1} parent=11 // pred_check_branch
        %426 = sbr.rel (%p424) target = $region32
      $region31: #{rnn_layer_forward.1} parent=11 // pred_region
        _
      $region32: #{rnn_layer_forward.1} parent=11 // pred_fallthru
        _
      // Predicated region
      $region33: #{rnn_layer_forward.1} parent=11 // pred_check
        %p427 = pneg %p229
      $region34: #{rnn_layer_forward.1} parent=11 // pred_check_branch
        %429 = sbr.rel (%p427) target = $region36
      $region35: #{rnn_layer_forward.1} parent=11 // pred_region
        _
      $region36: #{rnn_layer_forward.1} parent=11 // pred_fallthru
        _
      // Predicated region
      $region37: #{rnn_layer_forward.1} parent=11 // pred_check
        %p430 = pneg %p250
      $region38: #{rnn_layer_forward.1} parent=11 // pred_check_branch
        %432 = sbr.rel (%p430) target = $region40
      $region39: #{rnn_layer_forward.1} parent=11 // pred_region
        _
      $region40: #{rnn_layer_forward.1} parent=11 // pred_fallthru
        _
      // Predicated region
      $region41: #{rnn_layer_forward.1} parent=11 // pred_check
        %p433 = pneg %p271
      $region42: #{rnn_layer_forward.1} parent=11 // pred_check_branch
        %435 = sbr.rel (%p433) target = $region44
      $region43: #{rnn_layer_forward.1} parent=11 // pred_region
        _
      $region44: #{rnn_layer_forward.1} parent=11 // pred_fallthru
        _
      // Predicated region
      $region45: #{rnn_layer_forward.1} parent=11 // pred_check
        %p436 = pneg %p292
      $region46: #{rnn_layer_forward.1} parent=11 // pred_check_branch
        %438 = sbr.rel (%p436) target = $region48
      $region47: #{rnn_layer_forward.1} parent=11 // pred_region
        _
      $region48: #{rnn_layer_forward.1} parent=11 // pred_fallthru
        _
      // Predicated region
      $region49: #{rnn_layer_forward.1} parent=11 // pred_check
        %p439 = pneg %p313
      $region50: #{rnn_layer_forward.1} parent=11 // pred_check_branch
        %441 = sbr.rel (%p439) target = $region52
      $region51: #{rnn_layer_forward.1} parent=11 // pred_region
        _
      $region52: #{rnn_layer_forward.1} parent=11 // pred_fallthru
        _
      // Predicated region
      $region53: #{rnn_layer_forward.1} parent=11 // pred_check
        %p442 = pneg %p334
      $region54: #{rnn_layer_forward.1} parent=11 // pred_check_branch
        %444 = sbr.rel (%p442) target = $region56
      $region55: #{rnn_layer_forward.1} parent=11 // pred_region
        _
      $region56: #{rnn_layer_forward.1} parent=11 // pred_fallthru
        _
      // Predicated region
      $region57: #{rnn_layer_forward.1} parent=11 // pred_check
        %p445 = pneg %p355
      $region58: #{rnn_layer_forward.1} parent=11 // pred_check_branch
        %447 = sbr.rel (%p445) target = $region60
      $region59: #{rnn_layer_forward.1} parent=11 // pred_region
        _
      $region60: #{rnn_layer_forward.1} parent=11 // pred_fallthru
        _
    $region12: #{rnn_layer_forward.1} parent=5 // pred_fallthru
      _
    %p448 = scmp.lt.s32.totalorder %s25, 2
    // Predicated region
    $region61: #{rnn_layer_forward.1} parent=5 // pred_check
      %p449 = pneg %p448
    $region62: #{rnn_layer_forward.1} parent=5 // pred_check_branch
      %451 = sbr.rel (%p449) target = $region64
    $region63: #{rnn_layer_forward.1} parent=5 // pred_region
      // Predicated region
      $region65: #{rnn_layer_forward.1} parent=63 // pred_check
        %p452 = pneg %p45
      $region66: #{rnn_layer_forward.1} parent=63 // pred_check_branch
        %454 = sbr.rel (%p452) target = $region68
      $region67: #{rnn_layer_forward.1} parent=63 // pred_region
        %s455 = smul.u32 2, %s25
        %p456 = scmp.lt.s32.totalorder %s455, 3
        %s457 = scalar_select %p456, %s455, 3
        %s458 = smul.addr %s457, 3
        %s459 = smul.addr %s458, 8
        %s460 = scalar_lea.vmem %s1, %s459
        %s461 = smul.u32 2, %s25
      $region68: #{rnn_layer_forward.1} parent=63 // pred_fallthru
        _
      // Predicated region
      $region69: #{rnn_layer_forward.1} parent=63 // pred_check
        %p462 = pneg %p134
      $region70: #{rnn_layer_forward.1} parent=63 // pred_check_branch
        %464 = sbr.rel (%p462) target = $region72
      $region71: #{rnn_layer_forward.1} parent=63 // pred_region
        %s465 = smul.u32 2, %s25
        %p466 = scmp.lt.s32.totalorder %s465, 3
        %s467 = scalar_select %p466, %s465, 3
        %s468 = scalar_lea.vmem %s5, %s467
        %s469 = smul.u32 2, %s25
      $region72: #{rnn_layer_forward.1} parent=63 // pred_fallthru
        _
      // Predicated region
      $region73: #{rnn_layer_forward.1} parent=63 // pred_check
        %p470 = pneg %p160
      $region74: #{rnn_layer_forward.1} parent=63 // pred_check_branch
        %472 = sbr.rel (%p470) target = $region76
      $region75: #{rnn_layer_forward.1} parent=63 // pred_region
        %s473 = smul.u32 2, %s25
        %p474 = scmp.lt.s32.totalorder %s473, 3
        %s475 = scalar_select %p474, %s473, 3
        %s476 = scalar_lea.vmem %s6, %s475
        %s477 = smul.u32 2, %s25
      $region76: #{rnn_layer_forward.1} parent=63 // pred_fallthru
        _
    $region64: #{rnn_layer_forward.1} parent=5 // pred_fallthru
      _
    %p478 = scmp.le.s32.totalorder 1, %s25
    %p479 = scmp.lt.s32.totalorder %s25, 3
    %p480 = pnand %p478, %p479
    %p481 = pneg %p480
    // Predicated region
    $region77: #{rnn_layer_forward.1} parent=5 // pred_check
      _
    $region78: #{rnn_layer_forward.1} parent=5 // pred_check_branch
      %483 = sbr.rel (%p480) target = $region80
    $region79: #{rnn_layer_forward.1} parent=5 // pred_region
      %s484 = ssub.s32 %s25, 1
      %s485 = smul.u32 2, %s30
      %p486 = scmp.lt.s32.totalorder %s485, 3
      %s487 = scalar_select %p486, %s485, 3
      %s488 = smul.addr %s487, 3
      %s489 = smul.addr %s488, 8
      %s490 = scalar_lea.vmem %s1, %s489
      %p491 = pneg %p51
      %p492 = pneg %p48
      %p493 = pneg %p72
      %p494 = pneg %p69
      %p495 = pneg %p93
      %p496 = pneg %p90
      %p497 = pneg %p114
      %p498 = pneg %p111
      %s499 = smul.u32 2, %s30
      %p500 = scmp.lt.s32.totalorder %s499, 3
      %s501 = scalar_select %p500, %s499, 3
      %s502 = scalar_lea.vmem %s5, %s501
      %p503 = pneg %p140
      %p504 = pneg %p137
      %s505 = smul.u32 2, %s30
      %p506 = scmp.lt.s32.totalorder %s505, 3
      %s507 = scalar_select %p506, %s505, 3
      %s508 = scalar_lea.vmem %s6, %s507
      %p509 = pneg %p166
      %p510 = pneg %p163
      %p511 = pneg %p187
      %p512 = pneg %p184
      %p513 = pneg %p208
      %p514 = pneg %p205
      %p515 = pneg %p229
      %p516 = pneg %p226
      %p517 = pneg %p250
      %p518 = pneg %p247
      %p519 = pneg %p271
      %p520 = pneg %p268
      %p521 = pneg %p292
      %p522 = pneg %p289
      %p523 = pneg %p313
      %p524 = pneg %p310
      %p525 = pneg %p334
      %p526 = pneg %p331
      %p527 = pneg %p355
      %p528 = pneg %p352
      %p529 = pneg %p376
      %p530 = pneg %p373
      %p531 = pneg %p397
      %p532 = pneg %p394
      %s533 = smul.u32 2, %s30
      %p534 = scmp.lt.s32.totalorder %s533, 3
      %s535 = scalar_select %p534, %s533, 3
      %s536 = smul.addr %s535, 3
      %s537 = smul.addr %s536, 8
      %s538 = scalar_lea.vmem %s1, %s537
      %s539 = smul.u32 2, %s30
      %s540 = smul.u32 2, %s30
      %p541 = scmp.lt.s32.totalorder %s540, 3
      %s542 = scalar_select %p541, %s540, 3
      %s543 = scalar_lea.vmem %s5, %s542
      %s544 = smul.u32 2, %s30
      %s545 = smul.u32 2, %s30
      %p546 = scmp.lt.s32.totalorder %s545, 3
      %s547 = scalar_select %p546, %s545, 3
      %s548 = scalar_lea.vmem %s6, %s547
      %s549 = smul.u32 2, %s30
      %p551 = scmp.eq.s32.totalorder %s30, 0
      // Predicated region
      $region81: #{rnn_layer_forward.1} parent=79 // pred_check
        %p552 = pneg %p551
      $region82: #{rnn_layer_forward.1} parent=79 // pred_check_branch
        %554 = sbr.rel (%p552) target = $region84
      $region83: #{rnn_layer_forward.1} parent=79 // pred_region
        %v555 = vld [vmem:[%s2] sm:$0xf]
        %556 = vst [vmem:[%s16] sm:$0xf] %v555
        %v557 = vld [vmem:[%s3] sm:$0xf]
        %558 = vst [vmem:[%s17] sm:$0xf] %v557
        %559 = vst [vmem:[#allocation2 + $0x16] sm:$0x3] 0.0
      $region84: #{rnn_layer_forward.1} parent=79 // pred_fallthru
        _
      %s560 = smul.u32 %s30, 2
      %s561 = sld [smem:[#allocation6]]
      %p562 = scmp.lt.s32.totalorder %s560, %s561
      // Predicated region
      $region85: #{rnn_layer_forward.1} parent=79 // pred_check
        %p563 = pneg %p562
      $region86: #{rnn_layer_forward.1} parent=79 // pred_check_branch
        %565 = sbr.rel (%p563) target = $region88
      $region87: #{rnn_layer_forward.1} parent=79 // pred_region
        %v566 = vld [vmem:[%s16] sm:$0xf]
        %v567 = vld [vmem:[%s17] sm:$0xf]
        %568 = vst [vmem:[#allocation2] sm:$0xf] %v566
        %v569 = vld [vmem:[%s538] sm:$0xff]
        %v570 = vld [vmem:[%s538 + $0x8] sm:$0xff]
        %v571 = vld [vmem:[%s538 + $0x10] sm:$0x3]
        %572 = vst [vmem:[#allocation2 + $0x4] sm:$0xff] %v569
        %573 = vst [vmem:[#allocation2 + $0xc] sm:$0xff] %v570
        %574 = vst [vmem:[#allocation2 + $0x14] sm:$0x3] %v571
        %v575 = vld [vmem:[#allocation2] sm:$0xff]
        %v576 = vld [vmem:[#allocation2 + $0x8] sm:$0xff]
        %v577 = vld [vmem:[#allocation2 + $0x10] sm:$0xff]
        %578 = vrot.lane.b32.xlu0 %v575, 9
        %v579 = vpop.permute.xlu0 %578
        %580 = vrot.lane.b32.xlu0 %v576, 9
        %v581 = vpop.permute.xlu0 %580
        %582 = vrot.lane.b32.xlu0 %v577, 9
        %v583 = vpop.permute.xlu0 %582
        %v584 = vld [vmem:[%s4] sm:$0x1]
        %v585 = vperm.slane %v584, 0
        %v586 = vmul.f32 %v579, %v585
        %v587 = vmul.f32 %v581, %v585
        %v588 = vmul.f32 %v583, %v585
        %v589 = vpack.c.bf16 %v586, %v586
        %v590 = vpack.c.bf16 %v587, %v587
        %v591 = vpack.c.bf16 %v588, %v588
        %592 = vst [vmem:[#allocation3] sm:$0xf] %v589
        %593 = vst [vmem:[#allocation3 + $0x4] sm:$0xf] %v590
        %594 = vst [vmem:[#allocation3 + $0x8] sm:$0xf] %v591
        %595 = vrot.lane.b32.xlu0 %v575, 8
        %v596 = vpop.permute.xlu0 %595
        %597 = vrot.lane.b32.xlu0 %v576, 8
        %v598 = vpop.permute.xlu0 %597
        %599 = vrot.lane.b32.xlu0 %v577, 8
        %v600 = vpop.permute.xlu0 %599
        %v601 = vld [vmem:[%s4 + $0x1] sm:$0x1]
        %v602 = vperm.slane %v601, 0
        %v603 = vmul.f32 %v596, %v602
        %v604 = vmul.f32 %v598, %v602
        %v605 = vmul.f32 %v600, %v602
        %v606 = vpack.c.bf16 %v603, %v603
        %v607 = vpack.c.bf16 %v604, %v604
        %v608 = vpack.c.bf16 %v605, %v605
        %609 = vst [vmem:[#allocation3 + $0xc] sm:$0xf] %v606
        %610 = vst [vmem:[#allocation3 + $0x10] sm:$0xf] %v607
        %611 = vst [vmem:[#allocation3 + $0x14] sm:$0xf] %v608
        %612 = vrot.lane.b32.xlu0 %v575, 7
        %v613 = vpop.permute.xlu0 %612
        %614 = vrot.lane.b32.xlu0 %v576, 7
        %v615 = vpop.permute.xlu0 %614
        %616 = vrot.lane.b32.xlu0 %v577, 7
        %v617 = vpop.permute.xlu0 %616
        %v618 = vld [vmem:[%s4 + $0x2] sm:$0x1]
        %v619 = vperm.slane %v618, 0
        %v620 = vmul.f32 %v613, %v619
        %v621 = vmul.f32 %v615, %v619
        %v622 = vmul.f32 %v617, %v619
        %v623 = vpack.c.bf16 %v620, %v620
        %v624 = vpack.c.bf16 %v621, %v621
        %v625 = vpack.c.bf16 %v622, %v622
        %626 = vst [vmem:[#allocation3 + $0x18] sm:$0xf] %v623
        %627 = vst [vmem:[#allocation3 + $0x1c] sm:$0xf] %v624
        %628 = vst [vmem:[#allocation3 + $0x20] sm:$0xf] %v625
        %629 = vrot.lane.b32.xlu0 %v575, 1
        %v630 = vpop.permute.xlu0 %629
        %631 = vrot.lane.b32.xlu0 %v576, 1
        %v632 = vpop.permute.xlu0 %631
        %633 = vrot.lane.b32.xlu0 %v577, 1
        %v634 = vpop.permute.xlu0 %633
        %v635 = vld [vmem:[%s4 + $0x3] sm:$0x1]
        %v636 = vperm.slane %v635, 0
        %v637 = vmul.f32 %v630, %v636
        %v638 = vmul.f32 %v632, %v636
        %v639 = vmul.f32 %v634, %v636
        %v640 = vpack.c.bf16 %v637, %v637
        %v641 = vpack.c.bf16 %v638, %v638
        %v642 = vpack.c.bf16 %v639, %v639
        %643 = vst [vmem:[#allocation3 + $0x24] sm:$0xf] %v640
        %644 = vst [vmem:[#allocation3 + $0x28] sm:$0xf] %v641
        %645 = vst [vmem:[#allocation3 + $0x2c] sm:$0xf] %v642
        %v646 = vpack.c.bf16 %v575, %v575
        %v647 = vpack.c.bf16 %v576, %v576
        %v648 = vpack.c.bf16 %v577, %v577
        %649 = vst [vmem:[#allocation3 + $0x30] sm:$0xf] %v646
        %650 = vst [vmem:[#allocation3 + $0x34] sm:$0xf] %v647
        %651 = vst [vmem:[#allocation3 + $0x38] sm:$0xf] %v648
        %652 = vrot.lane.b32.xlu0 %v575, 127
        %v653 = vpop.permute.xlu0 %652
        %654 = vrot.lane.b32.xlu0 %v576, 127
        %v655 = vpop.permute.xlu0 %654
        %656 = vrot.lane.b32.xlu0 %v577, 127
        %v657 = vpop.permute.xlu0 %656
        %v658 = vld [vmem:[%s4 + $0x5] sm:$0x1]
        %v659 = vperm.slane %v658, 0
        %v660 = vmul.f32 %v653, %v659
        %v661 = vmul.f32 %v655, %v659
        %v662 = vmul.f32 %v657, %v659
        %v663 = vpack.c.bf16 %v660, %v660
        %v664 = vpack.c.bf16 %v661, %v661
        %v665 = vpack.c.bf16 %v662, %v662
        %666 = vst [vmem:[#allocation3 + $0x3c] sm:$0xf] %v663
        %667 = vst [vmem:[#allocation3 + $0x40] sm:$0xf] %v664
        %668 = vst [vmem:[#allocation3 + $0x44] sm:$0xf] %v665
        %669 = vrot.lane.b32.xlu0 %v575, 121
        %v670 = vpop.permute.xlu0 %669
        %671 = vrot.lane.b32.xlu0 %v576, 121
        %v672 = vpop.permute.xlu0 %671
        %673 = vrot.lane.b32.xlu0 %v577, 121
        %v674 = vpop.permute.xlu0 %673
        %v675 = vld [vmem:[%s4 + $0x6] sm:$0x1]
        %v676 = vperm.slane %v675, 0
        %v677 = vmul.f32 %v670, %v676
        %v678 = vmul.f32 %v672, %v676
        %v679 = vmul.f32 %v674, %v676
        %v680 = vpack.c.bf16 %v677, %v677
        %v681 = vpack.c.bf16 %v678, %v678
        %v682 = vpack.c.bf16 %v679, %v679
        %683 = vst [vmem:[#allocation3 + $0x48] sm:$0xf] %v680
        %684 = vst [vmem:[#allocation3 + $0x4c] sm:$0xf] %v681
        %685 = vst [vmem:[#allocation3 + $0x50] sm:$0xf] %v682
        %686 = vrot.lane.b32.xlu0 %v575, 120
        %v687 = vpop.permute.xlu0 %686
        %688 = vrot.lane.b32.xlu0 %v576, 120
        %v689 = vpop.permute.xlu0 %688
        %690 = vrot.lane.b32.xlu0 %v577, 120
        %v691 = vpop.permute.xlu0 %690
        %v692 = vld [vmem:[%s4 + $0x7] sm:$0x1]
        %v693 = vperm.slane %v692, 0
        %v694 = vmul.f32 %v687, %v693
        %v695 = vmul.f32 %v689, %v693
        %v696 = vmul.f32 %v691, %v693
        %v697 = vpack.c.bf16 %v694, %v694
        %v698 = vpack.c.bf16 %v695, %v695
        %v699 = vpack.c.bf16 %v696, %v696
        %700 = vst [vmem:[#allocation3 + $0x54] sm:$0xf] %v697
        %701 = vst [vmem:[#allocation3 + $0x58] sm:$0xf] %v698
        %702 = vst [vmem:[#allocation3 + $0x5c] sm:$0xf] %v699
        %703 = vrot.lane.b32.xlu0 %v575, 119
        %v704 = vpop.permute.xlu0 %703
        %705 = vrot.lane.b32.xlu0 %v576, 119
        %v706 = vpop.permute.xlu0 %705
        %707 = vrot.lane.b32.xlu0 %v577, 119
        %v708 = vpop.permute.xlu0 %707
        %v709 = vld [vmem:[%s4 + $0x8] sm:$0x1]
        %v710 = vperm.slane %v709, 0
        %v711 = vmul.f32 %v704, %v710
        %v712 = vmul.f32 %v706, %v710
        %v713 = vmul.f32 %v708, %v710
        %v714 = vpack.c.bf16 %v711, %v711
        %v715 = vpack.c.bf16 %v712, %v712
        %v716 = vpack.c.bf16 %v713, %v713
        %717 = vst [vmem:[#allocation3 + $0x60] sm:$0xf] %v714
        %718 = vst [vmem:[#allocation3 + $0x64] sm:$0xf] %v715
        %719 = vst [vmem:[#allocation3 + $0x68] sm:$0xf] %v716
        %v720 = vld [vmem:[%s7] sm:$0xff]
        %v721 = vld [vmem:[%s7 + $0x8] sm:$0xff]
        %v722 = vld [vmem:[#allocation3] sm:$0xf]
        %v723 = vld [vmem:[#allocation3 + $0x4] sm:$0xf]
        %v724 = vld [vmem:[#allocation3 + $0x8] sm:$0xf]
        %v725 = vld [vmem:[#allocation3 + $0xc] sm:$0xf]
        %v726 = vld [vmem:[#allocation3 + $0x10] sm:$0xf]
        %v727 = vld [vmem:[#allocation3 + $0x14] sm:$0xf]
        %v728 = vld [vmem:[#allocation3 + $0x18] sm:$0xf]
        %v729 = vld [vmem:[#allocation3 + $0x1c] sm:$0xf]
        %v730 = vld [vmem:[#allocation3 + $0x20] sm:$0xf]
        %v731 = vld [vmem:[#allocation3 + $0x24] sm:$0xf]
        %v732 = vld [vmem:[#allocation3 + $0x28] sm:$0xf]
        %v733 = vld [vmem:[#allocation3 + $0x2c] sm:$0xf]
        %v734 = vld [vmem:[#allocation3 + $0x30] sm:$0xf]
        %v735 = vld [vmem:[#allocation3 + $0x34] sm:$0xf]
        %v736 = vld [vmem:[#allocation3 + $0x38] sm:$0xf]
        %v737 = vld [vmem:[#allocation3 + $0x3c] sm:$0xf]
        %v738 = vld [vmem:[#allocation3 + $0x40] sm:$0xf]
        %v739 = vld [vmem:[#allocation3 + $0x44] sm:$0xf]
        %v740 = vld [vmem:[#allocation3 + $0x48] sm:$0xf]
        %v741 = vld [vmem:[#allocation3 + $0x4c] sm:$0xf]
        %v742 = vld [vmem:[#allocation3 + $0x50] sm:$0xf]
        %v743 = vld [vmem:[#allocation3 + $0x54] sm:$0xf]
        %v744 = vld [vmem:[#allocation3 + $0x58] sm:$0xf]
        %v745 = vld [vmem:[#allocation3 + $0x5c] sm:$0xf]
        %v746 = vld [vmem:[#allocation3 + $0x60] sm:$0xf]
        %v747 = vld [vmem:[#allocation3 + $0x64] sm:$0xf]
        %v748 = vld [vmem:[#allocation3 + $0x68] sm:$0xf]
        %v749 = vld [vmem:[%s8] sm:$0xff]
        %v750 = vld [vmem:[%s8 + $0x8] sm:$0xff]
        %752 = vset.pattern.permute.xlu0 0
        %753 = vperm.xlu0 %752, %v749
        %v754 = vpop.permute.xlu0 %753
        %757 = vset.pattern.permute.xlu0 0
        %758 = vperm.xlu0 %757, %v750
        %v759 = vpop.permute.xlu0 %758
        %v763 = vunpack.c.l.b16 %v720
        %v764 = vunpack.c.h.b16 %v720
        %v765 = vunpack.c.l.b16 %v721
        %v766 = vunpack.c.h.b16 %v721
        %v767 = vpack.c.b16 %v765, %v763
        %v768 = vpack.c.b16 %v766, %v764
        %v797 = vunpack.c.l.b16 %v722
        %v798 = vunpack.c.l.b16 %v723
        %v799 = vunpack.c.l.b16 %v724
        %v800 = vunpack.c.l.b16 %v725
        %v801 = vunpack.c.l.b16 %v726
        %v802 = vunpack.c.l.b16 %v727
        %v803 = vunpack.c.l.b16 %v728
        %v804 = vunpack.c.l.b16 %v729
        %v805 = vunpack.c.l.b16 %v730
        %v806 = vunpack.c.l.b16 %v731
        %v807 = vunpack.c.l.b16 %v732
        %v808 = vunpack.c.l.b16 %v733
        %v809 = vunpack.c.l.b16 %v734
        %v810 = vunpack.c.l.b16 %v735
        %v811 = vunpack.c.l.b16 %v736
        %v812 = vunpack.c.l.b16 %v737
        %v813 = vunpack.c.l.b16 %v738
        %v814 = vunpack.c.l.b16 %v739
        %v815 = vunpack.c.l.b16 %v740
        %v816 = vunpack.c.l.b16 %v741
        %v817 = vunpack.c.l.b16 %v742
        %v818 = vunpack.c.l.b16 %v743
        %v819 = vunpack.c.l.b16 %v744
        %v820 = vunpack.c.l.b16 %v745
        %v821 = vunpack.c.l.b16 %v746
        %v822 = vunpack.c.l.b16 %v747
        %v823 = vunpack.c.l.b16 %v748
        %v824 = vpack.c.b16 %v798, %v797
        %v825 = vpack.c.b16 %v800, %v799
        %v826 = vpack.c.b16 %v802, %v801
        %v827 = vpack.c.b16 %v804, %v803
        %v828 = vpack.c.b16 %v806, %v805
        %v829 = vpack.c.b16 %v808, %v807
        %v830 = vpack.c.b16 %v810, %v809
        %v831 = vpack.c.b16 %v812, %v811
        %v832 = vpack.c.b16 %v814, %v813
        %v833 = vpack.c.b16 %v816, %v815
        %v834 = vpack.c.b16 %v818, %v817
        %v835 = vpack.c.b16 %v820, %v819
        %v836 = vpack.c.b16 %v822, %v821
        %v837 = vpack.c.b16 %v823, %v823
        %vm851 = vcmask 719872
        %v853 = vsel %vm851, %v768, 0
        %vm855 = vcmask 1043456
        %v857 = vsel %vm855, %v837, 0
        %859 = vmatpush.bf16.msra.mxu0 %v831
        %860 = vmatpush.bf16.msra.mxu0 %v830
        %861 = vmatpush.bf16.msra.mxu0 %v829
        %862 = vmatpush.bf16.msra.mxu0 %v828
        %863 = vmatpush.bf16.msra.mxu0 %v827
        %864 = vmatpush.bf16.msra.mxu0 %v826
        %865 = vmatpush.bf16.msra.mxu0 %v825
        %866 = vmatpush.bf16.msra.mxu0 %v824
        %867 = vmatmul.bf16.gmra.mxu0 %v767
        %v868 = vpop.f32.mrf.mxu0
        %v869 = vadd.f32 %v754, %v868
        %v870 = vpop.f32.mrf.mxu0
        %v871 = vadd.f32 %v759, %v870
        %872 = vdwg.mxu0
        %873 = vmatpush.bf16.msra.mxu0 0
        %874 = vmatpush.bf16.msra.mxu0 0
        %875 = vmatpush.bf16.msra.mxu0 %v857
        %876 = vmatpush.bf16.msra.mxu0 %v836
        %877 = vmatpush.bf16.msra.mxu0 %v835
        %878 = vmatpush.bf16.msra.mxu0 %v834
        %879 = vmatpush.bf16.msra.mxu0 %v833
        %880 = vmatpush.bf16.msra.mxu0 %v832
        %881 = vmatmul.bf16.gmra.mxu0 %v853
        %v882 = vpop.f32.mrf.mxu0
        %v883 = vadd.f32 %v869, %v882
        %v884 = vpop.f32.mrf.mxu0
        %v885 = vadd.f32 %v871, %v884
        %886 = vdwg.mxu0
        %v887 = vmax.f32 %v883, 0.0
        %v888 = vmax.f32 %v885, 0.0
        %889 = vrot.lane.b32.xlu0 %v887, 9
        %v890 = vpop.permute.xlu0 %889
        %891 = vrot.lane.b32.xlu0 %v888, 9
        %v892 = vpop.permute.xlu0 %891
        %v893 = vld [vmem:[%s4] sm:$0x1]
        %v894 = vperm.slane %v893, 0
        %v895 = vmul.f32 %v890, %v894
        %v896 = vmul.f32 %v892, %v894
        %v897 = vpack.c.bf16 %v895, %v895
        %v898 = vpack.c.bf16 %v896, %v896
        %899 = vst [vmem:[#allocation4] sm:$0xf] %v897
        %900 = vst [vmem:[#allocation4 + $0x4] sm:$0xf] %v898
        %901 = vrot.lane.b32.xlu0 %v887, 8
        %v902 = vpop.permute.xlu0 %901
        %903 = vrot.lane.b32.xlu0 %v888, 8
        %v904 = vpop.permute.xlu0 %903
        %v905 = vld [vmem:[%s4 + $0x1] sm:$0x1]
        %v906 = vperm.slane %v905, 0
        %v907 = vmul.f32 %v902, %v906
        %v908 = vmul.f32 %v904, %v906
        %v909 = vpack.c.bf16 %v907, %v907
        %v910 = vpack.c.bf16 %v908, %v908
        %911 = vst [vmem:[#allocation4 + $0x8] sm:$0xf] %v909
        %912 = vst [vmem:[#allocation4 + $0xc] sm:$0xf] %v910
        %913 = vrot.lane.b32.xlu0 %v887, 7
        %v914 = vpop.permute.xlu0 %913
        %915 = vrot.lane.b32.xlu0 %v888, 7
        %v916 = vpop.permute.xlu0 %915
        %v917 = vld [vmem:[%s4 + $0x2] sm:$0x1]
        %v918 = vperm.slane %v917, 0
        %v919 = vmul.f32 %v914, %v918
        %v920 = vmul.f32 %v916, %v918
        %v921 = vpack.c.bf16 %v919, %v919
        %v922 = vpack.c.bf16 %v920, %v920
        %923 = vst [vmem:[#allocation4 + $0x10] sm:$0xf] %v921
        %924 = vst [vmem:[#allocation4 + $0x14] sm:$0xf] %v922
        %925 = vrot.lane.b32.xlu0 %v887, 1
        %v926 = vpop.permute.xlu0 %925
        %927 = vrot.lane.b32.xlu0 %v888, 1
        %v928 = vpop.permute.xlu0 %927
        %v929 = vld [vmem:[%s4 + $0x3] sm:$0x1]
        %v930 = vperm.slane %v929, 0
        %v931 = vmul.f32 %v926, %v930
        %v932 = vmul.f32 %v928, %v930
        %v933 = vpack.c.bf16 %v931, %v931
        %v934 = vpack.c.bf16 %v932, %v932
        %935 = vst [vmem:[#allocation4 + $0x18] sm:$0xf] %v933
        %936 = vst [vmem:[#allocation4 + $0x1c] sm:$0xf] %v934
        %v937 = vpack.c.bf16 %v887, %v887
        %v938 = vpack.c.bf16 %v888, %v888
        %939 = vst [vmem:[#allocation4 + $0x20] sm:$0xf] %v937
        %940 = vst [vmem:[#allocation4 + $0x24] sm:$0xf] %v938
        %941 = vrot.lane.b32.xlu0 %v887, 127
        %v942 = vpop.permute.xlu0 %941
        %943 = vrot.lane.b32.xlu0 %v888, 127
        %v944 = vpop.permute.xlu0 %943
        %v945 = vld [vmem:[%s4 + $0x5] sm:$0x1]
        %v946 = vperm.slane %v945, 0
        %v947 = vmul.f32 %v942, %v946
        %v948 = vmul.f32 %v944, %v946
        %v949 = vpack.c.bf16 %v947, %v947
        %v950 = vpack.c.bf16 %v948, %v948
        %951 = vst [vmem:[#allocation4 + $0x28] sm:$0xf] %v949
        %952 = vst [vmem:[#allocation4 + $0x2c] sm:$0xf] %v950
        %953 = vrot.lane.b32.xlu0 %v887, 121
        %v954 = vpop.permute.xlu0 %953
        %955 = vrot.lane.b32.xlu0 %v888, 121
        %v956 = vpop.permute.xlu0 %955
        %v957 = vld [vmem:[%s4 + $0x6] sm:$0x1]
        %v958 = vperm.slane %v957, 0
        %v959 = vmul.f32 %v954, %v958
        %v960 = vmul.f32 %v956, %v958
        %v961 = vpack.c.bf16 %v959, %v959
        %v962 = vpack.c.bf16 %v960, %v960
        %963 = vst [vmem:[#allocation4 + $0x30] sm:$0xf] %v961
        %964 = vst [vmem:[#allocation4 + $0x34] sm:$0xf] %v962
        %965 = vrot.lane.b32.xlu0 %v887, 120
        %v966 = vpop.permute.xlu0 %965
        %967 = vrot.lane.b32.xlu0 %v888, 120
        %v968 = vpop.permute.xlu0 %967
        %v969 = vld [vmem:[%s4 + $0x7] sm:$0x1]
        %v970 = vperm.slane %v969, 0
        %v971 = vmul.f32 %v966, %v970
        %v972 = vmul.f32 %v968, %v970
        %v973 = vpack.c.bf16 %v971, %v971
        %v974 = vpack.c.bf16 %v972, %v972
        %975 = vst [vmem:[#allocation4 + $0x38] sm:$0xf] %v973
        %976 = vst [vmem:[#allocation4 + $0x3c] sm:$0xf] %v974
        %977 = vrot.lane.b32.xlu0 %v887, 119
        %v978 = vpop.permute.xlu0 %977
        %979 = vrot.lane.b32.xlu0 %v888, 119
        %v980 = vpop.permute.xlu0 %979
        %v981 = vld [vmem:[%s4 + $0x8] sm:$0x1]
        %v982 = vperm.slane %v981, 0
        %v983 = vmul.f32 %v978, %v982
        %v984 = vmul.f32 %v980, %v982
        %v985 = vpack.c.bf16 %v983, %v983
        %v986 = vpack.c.bf16 %v984, %v984
        %987 = vst [vmem:[#allocation4 + $0x40] sm:$0xf] %v985
        %988 = vst [vmem:[#allocation4 + $0x44] sm:$0xf] %v986
        %v989 = vld [vmem:[%s9] sm:$0xff]
        %v990 = vld [vmem:[%s9 + $0x8] sm:$0xff]
        %v991 = vld [vmem:[#allocation4] sm:$0xf]
        %v992 = vld [vmem:[#allocation4 + $0x4] sm:$0xf]
        %v993 = vld [vmem:[#allocation4 + $0x8] sm:$0xf]
        %v994 = vld [vmem:[#allocation4 + $0xc] sm:$0xf]
        %v995 = vld [vmem:[#allocation4 + $0x10] sm:$0xf]
        %v996 = vld [vmem:[#allocation4 + $0x14] sm:$0xf]
        %v997 = vld [vmem:[#allocation4 + $0x18] sm:$0xf]
        %v998 = vld [vmem:[#allocation4 + $0x1c] sm:$0xf]
        %v999 = vld [vmem:[#allocation4 + $0x20] sm:$0xf]
        %v1000 = vld [vmem:[#allocation4 + $0x24] sm:$0xf]
        %v1001 = vld [vmem:[#allocation4 + $0x28] sm:$0xf]
        %v1002 = vld [vmem:[#allocation4 + $0x2c] sm:$0xf]
        %v1003 = vld [vmem:[#allocation4 + $0x30] sm:$0xf]
        %v1004 = vld [vmem:[#allocation4 + $0x34] sm:$0xf]
        %v1005 = vld [vmem:[#allocation4 + $0x38] sm:$0xf]
        %v1006 = vld [vmem:[#allocation4 + $0x3c] sm:$0xf]
        %v1007 = vld [vmem:[#allocation4 + $0x40] sm:$0xf]
        %v1008 = vld [vmem:[#allocation4 + $0x44] sm:$0xf]
        %v1009 = vld [vmem:[%s10] sm:$0xff]
        %v1010 = vld [vmem:[%s10 + $0x8] sm:$0xff]
        %1012 = vset.pattern.permute.xlu0 0
        %1013 = vperm.xlu0 %1012, %v1009
        %v1014 = vpop.permute.xlu0 %1013
        %1017 = vset.pattern.permute.xlu0 0
        %1018 = vperm.xlu0 %1017, %v1010
        %v1019 = vpop.permute.xlu0 %1018
        %v1023 = vunpack.c.l.b16 %v989
        %v1024 = vunpack.c.h.b16 %v989
        %v1025 = vunpack.c.l.b16 %v990
        %v1026 = vunpack.c.h.b16 %v990
        %v1027 = vpack.c.b16 %v1025, %v1023
        %v1028 = vpack.c.b16 %v1026, %v1024
        %v1048 = vunpack.c.l.b16 %v991
        %v1049 = vunpack.c.l.b16 %v992
        %v1050 = vunpack.c.l.b16 %v993
        %v1051 = vunpack.c.l.b16 %v994
        %v1052 = vunpack.c.l.b16 %v995
        %v1053 = vunpack.c.l.b16 %v996
        %v1054 = vunpack.c.l.b16 %v997
        %v1055 = vunpack.c.l.b16 %v998
        %v1056 = vunpack.c.l.b16 %v999
        %v1057 = vunpack.c.l.b16 %v1000
        %v1058 = vunpack.c.l.b16 %v1001
        %v1059 = vunpack.c.l.b16 %v1002
        %v1060 = vunpack.c.l.b16 %v1003
        %v1061 = vunpack.c.l.b16 %v1004
        %v1062 = vunpack.c.l.b16 %v1005
        %v1063 = vunpack.c.l.b16 %v1006
        %v1064 = vunpack.c.l.b16 %v1007
        %v1065 = vunpack.c.l.b16 %v1008
        %v1066 = vpack.c.b16 %v1049, %v1048
        %v1067 = vpack.c.b16 %v1051, %v1050
        %v1068 = vpack.c.b16 %v1053, %v1052
        %v1069 = vpack.c.b16 %v1055, %v1054
        %v1070 = vpack.c.b16 %v1057, %v1056
        %v1071 = vpack.c.b16 %v1059, %v1058
        %v1072 = vpack.c.b16 %v1061, %v1060
        %v1073 = vpack.c.b16 %v1063, %v1062
        %v1074 = vpack.c.b16 %v1065, %v1064
        %vm1084 = vcmask 130048
        %v1086 = vsel %vm1084, %v1028, 0
        %1088 = vmatpush.bf16.msra.mxu0 %v1073
        %1089 = vmatpush.bf16.msra.mxu0 %v1072
        %1090 = vmatpush.bf16.msra.mxu0 %v1071
        %1091 = vmatpush.bf16.msra.mxu0 %v1070
        %1092 = vmatpush.bf16.msra.mxu0 %v1069
        %1093 = vmatpush.bf16.msra.mxu0 %v1068
        %1094 = vmatpush.bf16.msra.mxu0 %v1067
        %1095 = vmatpush.bf16.msra.mxu0 %v1066
        %1096 = vmatmul.bf16.gmra.mxu0 %v1027
        %v1097 = vpop.f32.mrf.mxu0
        %v1098 = vadd.f32 %v1014, %v1097
        %v1099 = vpop.f32.mrf.mxu0
        %v1100 = vadd.f32 %v1019, %v1099
        %1101 = vdwg.mxu0
        %1102 = vmatpush.bf16.msra.mxu0 0
        %1103 = vmatpush.bf16.msra.mxu0 0
        %1104 = vmatpush.bf16.msra.mxu0 0
        %1105 = vmatpush.bf16.msra.mxu0 0
        %1106 = vmatpush.bf16.msra.mxu0 0
        %1107 = vmatpush.bf16.msra.mxu0 0
        %1108 = vmatpush.bf16.msra.mxu0 0
        %1109 = vmatpush.bf16.msra.mxu0 %v1074
        %1110 = vmatmul.bf16.gmra.mxu0 %v1086
        %v1111 = vpop.f32.mrf.mxu0
        %v1112 = vadd.f32 %v1098, %v1111
        %v1113 = vpop.f32.mrf.mxu0
        %v1114 = vadd.f32 %v1100, %v1113
        %1115 = vdwg.mxu0
        %v1116 = vmax.f32 %v1112, 0.0
        %v1117 = vmax.f32 %v1114, 0.0
        %1118 = vrot.lane.b32.xlu0 %v1116, 9
        %v1119 = vpop.permute.xlu0 %1118
        %1120 = vrot.lane.b32.xlu0 %v1117, 9
        %v1121 = vpop.permute.xlu0 %1120
        %v1122 = vld [vmem:[%s4] sm:$0x1]
        %v1123 = vperm.slane %v1122, 0
        %v1124 = vmul.f32 %v1119, %v1123
        %v1125 = vmul.f32 %v1121, %v1123
        %v1126 = vpack.c.bf16 %v1124, %v1124
        %v1127 = vpack.c.bf16 %v1125, %v1125
        %1128 = vst [vmem:[#allocation4] sm:$0xf] %v1126
        %1129 = vst [vmem:[#allocation4 + $0x4] sm:$0xf] %v1127
        %1130 = vrot.lane.b32.xlu0 %v1116, 8
        %v1131 = vpop.permute.xlu0 %1130
        %1132 = vrot.lane.b32.xlu0 %v1117, 8
        %v1133 = vpop.permute.xlu0 %1132
        %v1134 = vld [vmem:[%s4 + $0x1] sm:$0x1]
        %v1135 = vperm.slane %v1134, 0
        %v1136 = vmul.f32 %v1131, %v1135
        %v1137 = vmul.f32 %v1133, %v1135
        %v1138 = vpack.c.bf16 %v1136, %v1136
        %v1139 = vpack.c.bf16 %v1137, %v1137
        %1140 = vst [vmem:[#allocation4 + $0x8] sm:$0xf] %v1138
        %1141 = vst [vmem:[#allocation4 + $0xc] sm:$0xf] %v1139
        %1142 = vrot.lane.b32.xlu0 %v1116, 7
        %v1143 = vpop.permute.xlu0 %1142
        %1144 = vrot.lane.b32.xlu0 %v1117, 7
        %v1145 = vpop.permute.xlu0 %1144
        %v1146 = vld [vmem:[%s4 + $0x2] sm:$0x1]
        %v1147 = vperm.slane %v1146, 0
        %v1148 = vmul.f32 %v1143, %v1147
        %v1149 = vmul.f32 %v1145, %v1147
        %v1150 = vpack.c.bf16 %v1148, %v1148
        %v1151 = vpack.c.bf16 %v1149, %v1149
        %1152 = vst [vmem:[#allocation4 + $0x10] sm:$0xf] %v1150
        %1153 = vst [vmem:[#allocation4 + $0x14] sm:$0xf] %v1151
        %1154 = vrot.lane.b32.xlu0 %v1116, 1
        %v1155 = vpop.permute.xlu0 %1154
        %1156 = vrot.lane.b32.xlu0 %v1117, 1
        %v1157 = vpop.permute.xlu0 %1156
        %v1158 = vld [vmem:[%s4 + $0x3] sm:$0x1]
        %v1159 = vperm.slane %v1158, 0
        %v1160 = vmul.f32 %v1155, %v1159
        %v1161 = vmul.f32 %v1157, %v1159
        %v1162 = vpack.c.bf16 %v1160, %v1160
        %v1163 = vpack.c.bf16 %v1161, %v1161
        %1164 = vst [vmem:[#allocation4 + $0x18] sm:$0xf] %v1162
        %1165 = vst [vmem:[#allocation4 + $0x1c] sm:$0xf] %v1163
        %v1166 = vpack.c.bf16 %v1116, %v1116
        %v1167 = vpack.c.bf16 %v1117, %v1117
        %1168 = vst [vmem:[#allocation4 + $0x20] sm:$0xf] %v1166
        %1169 = vst [vmem:[#allocation4 + $0x24] sm:$0xf] %v1167
        %1170 = vrot.lane.b32.xlu0 %v1116, 127
        %v1171 = vpop.permute.xlu0 %1170
        %1172 = vrot.lane.b32.xlu0 %v1117, 127
        %v1173 = vpop.permute.xlu0 %1172
        %v1174 = vld [vmem:[%s4 + $0x5] sm:$0x1]
        %v1175 = vperm.slane %v1174, 0
        %v1176 = vmul.f32 %v1171, %v1175
        %v1177 = vmul.f32 %v1173, %v1175
        %v1178 = vpack.c.bf16 %v1176, %v1176
        %v1179 = vpack.c.bf16 %v1177, %v1177
        %1180 = vst [vmem:[#allocation4 + $0x28] sm:$0xf] %v1178
        %1181 = vst [vmem:[#allocation4 + $0x2c] sm:$0xf] %v1179
        %1182 = vrot.lane.b32.xlu0 %v1116, 121
        %v1183 = vpop.permute.xlu0 %1182
        %1184 = vrot.lane.b32.xlu0 %v1117, 121
        %v1185 = vpop.permute.xlu0 %1184
        %v1186 = vld [vmem:[%s4 + $0x6] sm:$0x1]
        %v1187 = vperm.slane %v1186, 0
        %v1188 = vmul.f32 %v1183, %v1187
        %v1189 = vmul.f32 %v1185, %v1187
        %v1190 = vpack.c.bf16 %v1188, %v1188
        %v1191 = vpack.c.bf16 %v1189, %v1189
        %1192 = vst [vmem:[#allocation4 + $0x30] sm:$0xf] %v1190
        %1193 = vst [vmem:[#allocation4 + $0x34] sm:$0xf] %v1191
        %1194 = vrot.lane.b32.xlu0 %v1116, 120
        %v1195 = vpop.permute.xlu0 %1194
        %1196 = vrot.lane.b32.xlu0 %v1117, 120
        %v1197 = vpop.permute.xlu0 %1196
        %v1198 = vld [vmem:[%s4 + $0x7] sm:$0x1]
        %v1199 = vperm.slane %v1198, 0
        %v1200 = vmul.f32 %v1195, %v1199
        %v1201 = vmul.f32 %v1197, %v1199
        %v1202 = vpack.c.bf16 %v1200, %v1200
        %v1203 = vpack.c.bf16 %v1201, %v1201
        %1204 = vst [vmem:[#allocation4 + $0x38] sm:$0xf] %v1202
        %1205 = vst [vmem:[#allocation4 + $0x3c] sm:$0xf] %v1203
        %1206 = vrot.lane.b32.xlu0 %v1116, 119
        %v1207 = vpop.permute.xlu0 %1206
        %1208 = vrot.lane.b32.xlu0 %v1117, 119
        %v1209 = vpop.permute.xlu0 %1208
        %v1210 = vld [vmem:[%s4 + $0x8] sm:$0x1]
        %v1211 = vperm.slane %v1210, 0
        %v1212 = vmul.f32 %v1207, %v1211
        %v1213 = vmul.f32 %v1209, %v1211
        %v1214 = vpack.c.bf16 %v1212, %v1212
        %v1215 = vpack.c.bf16 %v1213, %v1213
        %1216 = vst [vmem:[#allocation4 + $0x40] sm:$0xf] %v1214
        %1217 = vst [vmem:[#allocation4 + $0x44] sm:$0xf] %v1215
        %v1218 = vld [vmem:[%s11] sm:$0xff]
        %v1219 = vld [vmem:[%s11 + $0x8] sm:$0xff]
        %v1220 = vld [vmem:[#allocation4] sm:$0xf]
        %v1221 = vld [vmem:[#allocation4 + $0x4] sm:$0xf]
        %v1222 = vld [vmem:[#allocation4 + $0x8] sm:$0xf]
        %v1223 = vld [vmem:[#allocation4 + $0xc] sm:$0xf]
        %v1224 = vld [vmem:[#allocation4 + $0x10] sm:$0xf]
        %v1225 = vld [vmem:[#allocation4 + $0x14] sm:$0xf]
        %v1226 = vld [vmem:[#allocation4 + $0x18] sm:$0xf]
        %v1227 = vld [vmem:[#allocation4 + $0x1c] sm:$0xf]
        %v1228 = vld [vmem:[#allocation4 + $0x20] sm:$0xf]
        %v1229 = vld [vmem:[#allocation4 + $0x24] sm:$0xf]
        %v1230 = vld [vmem:[#allocation4 + $0x28] sm:$0xf]
        %v1231 = vld [vmem:[#allocation4 + $0x2c] sm:$0xf]
        %v1232 = vld [vmem:[#allocation4 + $0x30] sm:$0xf]
        %v1233 = vld [vmem:[#allocation4 + $0x34] sm:$0xf]
        %v1234 = vld [vmem:[#allocation4 + $0x38] sm:$0xf]
        %v1235 = vld [vmem:[#allocation4 + $0x3c] sm:$0xf]
        %v1236 = vld [vmem:[#allocation4 + $0x40] sm:$0xf]
        %v1237 = vld [vmem:[#allocation4 + $0x44] sm:$0xf]
        %v1238 = vld [vmem:[%s12] sm:$0xff]
        %v1239 = vld [vmem:[%s12 + $0x8] sm:$0xff]
        %1241 = vset.pattern.permute.xlu0 0
        %1242 = vperm.xlu0 %1241, %v1238
        %v1243 = vpop.permute.xlu0 %1242
        %1246 = vset.pattern.permute.xlu0 0
        %1247 = vperm.xlu0 %1246, %v1239
        %v1248 = vpop.permute.xlu0 %1247
        %v1252 = vunpack.c.l.b16 %v1218
        %v1253 = vunpack.c.h.b16 %v1218
        %v1254 = vunpack.c.l.b16 %v1219
        %v1255 = vunpack.c.h.b16 %v1219
        %v1256 = vpack.c.b16 %v1254, %v1252
        %v1257 = vpack.c.b16 %v1255, %v1253
        %v1277 = vunpack.c.l.b16 %v1220
        %v1278 = vunpack.c.l.b16 %v1221
        %v1279 = vunpack.c.l.b16 %v1222
        %v1280 = vunpack.c.l.b16 %v1223
        %v1281 = vunpack.c.l.b16 %v1224
        %v1282 = vunpack.c.l.b16 %v1225
        %v1283 = vunpack.c.l.b16 %v1226
        %v1284 = vunpack.c.l.b16 %v1227
        %v1285 = vunpack.c.l.b16 %v1228
        %v1286 = vunpack.c.l.b16 %v1229
        %v1287 = vunpack.c.l.b16 %v1230
        %v1288 = vunpack.c.l.b16 %v1231
        %v1289 = vunpack.c.l.b16 %v1232
        %v1290 = vunpack.c.l.b16 %v1233
        %v1291 = vunpack.c.l.b16 %v1234
        %v1292 = vunpack.c.l.b16 %v1235
        %v1293 = vunpack.c.l.b16 %v1236
        %v1294 = vunpack.c.l.b16 %v1237
        %v1295 = vpack.c.b16 %v1278, %v1277
        %v1296 = vpack.c.b16 %v1280, %v1279
        %v1297 = vpack.c.b16 %v1282, %v1281
        %v1298 = vpack.c.b16 %v1284, %v1283
        %v1299 = vpack.c.b16 %v1286, %v1285
        %v1300 = vpack.c.b16 %v1288, %v1287
        %v1301 = vpack.c.b16 %v1290, %v1289
        %v1302 = vpack.c.b16 %v1292, %v1291
        %v1303 = vpack.c.b16 %v1294, %v1293
        %v1314 = vsel %vm1084, %v1257, 0
        %1316 = vmatpush.bf16.msra.mxu0 %v1302
        %1317 = vmatpush.bf16.msra.mxu0 %v1301
        %1318 = vmatpush.bf16.msra.mxu0 %v1300
        %1319 = vmatpush.bf16.msra.mxu0 %v1299
        %1320 = vmatpush.bf16.msra.mxu0 %v1298
        %1321 = vmatpush.bf16.msra.mxu0 %v1297
        %1322 = vmatpush.bf16.msra.mxu0 %v1296
        %1323 = vmatpush.bf16.msra.mxu0 %v1295
        %1324 = vmatmul.bf16.gmra.mxu0 %v1256
        %v1325 = vpop.f32.mrf.mxu0
        %v1326 = vadd.f32 %v1243, %v1325
        %v1327 = vpop.f32.mrf.mxu0
        %v1328 = vadd.f32 %v1248, %v1327
        %1329 = vdwg.mxu0
        %1330 = vmatpush.bf16.msra.mxu0 0
        %1331 = vmatpush.bf16.msra.mxu0 0
        %1332 = vmatpush.bf16.msra.mxu0 0
        %1333 = vmatpush.bf16.msra.mxu0 0
        %1334 = vmatpush.bf16.msra.mxu0 0
        %1335 = vmatpush.bf16.msra.mxu0 0
        %1336 = vmatpush.bf16.msra.mxu0 0
        %1337 = vmatpush.bf16.msra.mxu0 %v1303
        %1338 = vmatmul.bf16.gmra.mxu0 %v1314
        %v1339 = vpop.f32.mrf.mxu0
        %v1340 = vadd.f32 %v1326, %v1339
        %v1341 = vpop.f32.mrf.mxu0
        %v1342 = vadd.f32 %v1328, %v1341
        %1343 = vdwg.mxu0
        %v1344 = vadd.f32 %v887, %v1340
        %v1345 = vadd.f32 %v888, %v1342
        %v1346 = vmax.f32 %v1344, 0.0
        %v1347 = vmax.f32 %v1345, 0.0
        %v1348 = vld [vmem:[%s13] sm:$0xf]
        %v1349 = vld [vmem:[%s13 + $0x4] sm:$0xf]
        %v1350 = vpack.c.bf16 %v566, %v566
        %v1351 = vld [vmem:[%s14] sm:$0xf]
        %v1352 = vld [vmem:[%s14 + $0x4] sm:$0xf]
        %v1353 = vpack.c.bf16 %v1347, %v1346
        %v1356 = vunpack.c.l.b16 %v1351
        %v1357 = vunpack.c.l.b16 %v1352
        %v1358 = vpack.c.b16 %v1357, %v1356
        %v1360 = vsel %vm1084, %v1358, 0
        %1362 = vmatpush.bf16.msra.mxu0 0
        %1363 = vmatpush.bf16.msra.mxu0 0
        %1364 = vmatpush.bf16.msra.mxu0 0
        %1365 = vmatpush.bf16.msra.mxu0 0
        %1366 = vmatpush.bf16.msra.mxu0 0
        %1367 = vmatpush.bf16.msra.mxu0 0
        %1368 = vmatpush.bf16.msra.mxu0 0
        %1369 = vmatpush.bf16.msra.mxu0 %v1353
        %1370 = vmatmul.bf16.gmra.mxu0 %v1360
        %v1371 = vpop.f32.mrf.mxu0
        %v1372 = vadd.f32 0.0, %v1371
        %v1373 = vpop.f32.mrf.mxu0
        %v1374 = vadd.f32 0.0, %v1373
        %1375 = vdwg.mxu0
        %v1378 = vunpack.c.l.b16 %v1348
        %v1379 = vunpack.c.l.b16 %v1349
        %v1380 = vpack.c.b16 %v1379, %v1378
        %vm1381 = vcmask 31744
        %v1383 = vsel %vm1381, %v1380, 0
        %vm1385 = vcmask 1041408
        %v1387 = vsel %vm1385, %v1350, 0
        %1389 = vmatpush.bf16.msra.mxu0 0
        %1390 = vmatpush.bf16.msra.mxu0 0
        %1391 = vmatpush.bf16.msra.mxu0 0
        %1392 = vmatpush.bf16.msra.mxu0 0
        %1393 = vmatpush.bf16.msra.mxu0 0
        %1394 = vmatpush.bf16.msra.mxu0 0
        %1395 = vmatpush.bf16.msra.mxu0 0
        %1396 = vmatpush.bf16.msra.mxu0 %v1387
        %1397 = vmatmul.bf16.gmra.mxu0 %v1383
        %v1398 = vpop.f32.mrf.mxu0
        %v1399 = vadd.f32 %v1372, %v1398
        %v1400 = vpop.f32.mrf.mxu0
        %v1401 = vadd.f32 %v1374, %v1400
        %1402 = vdwg.mxu0
        %v1403 = vld [vmem:[%s15] sm:$0xff]
        %v1404 = vld [vmem:[%s15 + $0x8] sm:$0xff]
        %1406 = vset.pattern.permute.xlu0 0
        %1407 = vperm.xlu0 %1406, %v1403
        %v1408 = vpop.permute.xlu0 %1407
        %1411 = vset.pattern.permute.xlu0 0
        %1412 = vperm.xlu0 %1411, %v1404
        %v1413 = vpop.permute.xlu0 %1412
        %v1415 = vadd.f32 %v1399, %v1408
        %v1416 = vadd.f32 %v1401, %v1413
        %v1417 = vtanh.pop %v1415
        %v1418 = vtanh.pop %v1416
        %v1419 = vadd.f32 %v1417, 1.0
        %v1420 = vmul.f32 %v1419, 0.5
        %v1421 = vadd.f32 %v1418, 1.0
        %v1422 = vmul.f32 %v1421, 0.5
        %v1423 = vmul.f32 %v567, %v1420
        %v1425 = vrot.slane %v1418, 4
        %v1427 = vmul.f32 %v1420, %v1425
        %v1429 = vrot.slane %v1427, 4
        %v1431 = vadd.f32 %v1423, %v1429
        %v1432 = vtanh.pop %v1431
        %v1434 = vrot.slane %v1422, 4
        %v1436 = vmul.f32 %v1432, %v1434
        %v1437 = vld [vmem:[%s543] sm:$0x1]
        %v1438 = vld [vmem:[%s548] sm:$0x1]
        %v1440 = vperm.slane %v1437, 0
        %v1442 = vmul.f32 %v1440, %v1436
        %v1444 = vperm.slane %v1438, 0
        %v1446 = vmul.f32 %v1444, %v566
        %v1447 = vadd.f32 %v1442, %v1446
        %1448 = vst [vmem:[%s16] sm:$0xf] %v1447
        %v1449 = vmul.f32 %v1440, %v1431
        %v1450 = vmul.f32 %v1444, %v567
        %v1451 = vadd.f32 %v1449, %v1450
        %1452 = vst [vmem:[%s17] sm:$0xf] %v1451
      $region88: #{rnn_layer_forward.1} parent=79 // pred_fallthru
        _
      %s1453 = sadd.s32 %s560, 1
      %s1454 = sld [smem:[#allocation6]]
      %p1455 = scmp.lt.s32.totalorder %s1453, %s1454
      // Predicated region
      $region89: #{rnn_layer_forward.1} parent=79 // pred_check
        %p1456 = pneg %p1455
      $region90: #{rnn_layer_forward.1} parent=79 // pred_check_branch
        %1458 = sbr.rel (%p1456) target = $region92
      $region91: #{rnn_layer_forward.1} parent=79 // pred_region
        %v1459 = vld [vmem:[%s16] sm:$0xf]
        %v1460 = vld [vmem:[%s17] sm:$0xf]
        %1461 = vst [vmem:[#allocation2] sm:$0xf] %v1459
        %s1462 = scalar_lea.vmem %s538, 24
        %v1463 = vld [vmem:[%s1462] sm:$0xff]
        %v1464 = vld [vmem:[%s1462 + $0x8] sm:$0xff]
        %v1465 = vld [vmem:[%s1462 + $0x10] sm:$0x3]
        %1466 = vst [vmem:[#allocation2 + $0x4] sm:$0xff] %v1463
        %1467 = vst [vmem:[#allocation2 + $0xc] sm:$0xff] %v1464
        %1468 = vst [vmem:[#allocation2 + $0x14] sm:$0x3] %v1465
        %v1469 = vld [vmem:[#allocation2] sm:$0xff]
        %v1470 = vld [vmem:[#allocation2 + $0x8] sm:$0xff]
        %v1471 = vld [vmem:[#allocation2 + $0x10] sm:$0xff]
        %1472 = vrot.lane.b32.xlu0 %v1469, 9
        %v1473 = vpop.permute.xlu0 %1472
        %1474 = vrot.lane.b32.xlu0 %v1470, 9
        %v1475 = vpop.permute.xlu0 %1474
        %1476 = vrot.lane.b32.xlu0 %v1471, 9
        %v1477 = vpop.permute.xlu0 %1476
        %v1478 = vld [vmem:[%s4] sm:$0x1]
        %v1479 = vperm.slane %v1478, 0
        %v1480 = vmul.f32 %v1473, %v1479
        %v1481 = vmul.f32 %v1475, %v1479
        %v1482 = vmul.f32 %v1477, %v1479
        %v1483 = vpack.c.bf16 %v1480, %v1480
        %v1484 = vpack.c.bf16 %v1481, %v1481
        %v1485 = vpack.c.bf16 %v1482, %v1482
        %1486 = vst [vmem:[#allocation3] sm:$0xf] %v1483
        %1487 = vst [vmem:[#allocation3 + $0x4] sm:$0xf] %v1484
        %1488 = vst [vmem:[#allocation3 + $0x8] sm:$0xf] %v1485
        %1489 = vrot.lane.b32.xlu0 %v1469, 8
        %v1490 = vpop.permute.xlu0 %1489
        %1491 = vrot.lane.b32.xlu0 %v1470, 8
        %v1492 = vpop.permute.xlu0 %1491
        %1493 = vrot.lane.b32.xlu0 %v1471, 8
        %v1494 = vpop.permute.xlu0 %1493
        %v1495 = vld [vmem:[%s4 + $0x1] sm:$0x1]
        %v1496 = vperm.slane %v1495, 0
        %v1497 = vmul.f32 %v1490, %v1496
        %v1498 = vmul.f32 %v1492, %v1496
        %v1499 = vmul.f32 %v1494, %v1496
        %v1500 = vpack.c.bf16 %v1497, %v1497
        %v1501 = vpack.c.bf16 %v1498, %v1498
        %v1502 = vpack.c.bf16 %v1499, %v1499
        %1503 = vst [vmem:[#allocation3 + $0xc] sm:$0xf] %v1500
        %1504 = vst [vmem:[#allocation3 + $0x10] sm:$0xf] %v1501
        %1505 = vst [vmem:[#allocation3 + $0x14] sm:$0xf] %v1502
        %1506 = vrot.lane.b32.xlu0 %v1469, 7
        %v1507 = vpop.permute.xlu0 %1506
        %1508 = vrot.lane.b32.xlu0 %v1470, 7
        %v1509 = vpop.permute.xlu0 %1508
        %1510 = vrot.lane.b32.xlu0 %v1471, 7
        %v1511 = vpop.permute.xlu0 %1510
        %v1512 = vld [vmem:[%s4 + $0x2] sm:$0x1]
        %v1513 = vperm.slane %v1512, 0
        %v1514 = vmul.f32 %v1507, %v1513
        %v1515 = vmul.f32 %v1509, %v1513
        %v1516 = vmul.f32 %v1511, %v1513
        %v1517 = vpack.c.bf16 %v1514, %v1514
        %v1518 = vpack.c.bf16 %v1515, %v1515
        %v1519 = vpack.c.bf16 %v1516, %v1516
        %1520 = vst [vmem:[#allocation3 + $0x18] sm:$0xf] %v1517
        %1521 = vst [vmem:[#allocation3 + $0x1c] sm:$0xf] %v1518
        %1522 = vst [vmem:[#allocation3 + $0x20] sm:$0xf] %v1519
        %1523 = vrot.lane.b32.xlu0 %v1469, 1
        %v1524 = vpop.permute.xlu0 %1523
        %1525 = vrot.lane.b32.xlu0 %v1470, 1
        %v1526 = vpop.permute.xlu0 %1525
        %1527 = vrot.lane.b32.xlu0 %v1471, 1
        %v1528 = vpop.permute.xlu0 %1527
        %v1529 = vld [vmem:[%s4 + $0x3] sm:$0x1]
        %v1530 = vperm.slane %v1529, 0
        %v1531 = vmul.f32 %v1524, %v1530
        %v1532 = vmul.f32 %v1526, %v1530
        %v1533 = vmul.f32 %v1528, %v1530
        %v1534 = vpack.c.bf16 %v1531, %v1531
        %v1535 = vpack.c.bf16 %v1532, %v1532
        %v1536 = vpack.c.bf16 %v1533, %v1533
        %1537 = vst [vmem:[#allocation3 + $0x24] sm:$0xf] %v1534
        %1538 = vst [vmem:[#allocation3 + $0x28] sm:$0xf] %v1535
        %1539 = vst [vmem:[#allocation3 + $0x2c] sm:$0xf] %v1536
        %v1540 = vpack.c.bf16 %v1469, %v1469
        %v1541 = vpack.c.bf16 %v1470, %v1470
        %v1542 = vpack.c.bf16 %v1471, %v1471
        %1543 = vst [vmem:[#allocation3 + $0x30] sm:$0xf] %v1540
        %1544 = vst [vmem:[#allocation3 + $0x34] sm:$0xf] %v1541
        %1545 = vst [vmem:[#allocation3 + $0x38] sm:$0xf] %v1542
        %1546 = vrot.lane.b32.xlu0 %v1469, 127
        %v1547 = vpop.permute.xlu0 %1546
        %1548 = vrot.lane.b32.xlu0 %v1470, 127
        %v1549 = vpop.permute.xlu0 %1548
        %1550 = vrot.lane.b32.xlu0 %v1471, 127
        %v1551 = vpop.permute.xlu0 %1550
        %v1552 = vld [vmem:[%s4 + $0x5] sm:$0x1]
        %v1553 = vperm.slane %v1552, 0
        %v1554 = vmul.f32 %v1547, %v1553
        %v1555 = vmul.f32 %v1549, %v1553
        %v1556 = vmul.f32 %v1551, %v1553
        %v1557 = vpack.c.bf16 %v1554, %v1554
        %v1558 = vpack.c.bf16 %v1555, %v1555
        %v1559 = vpack.c.bf16 %v1556, %v1556
        %1560 = vst [vmem:[#allocation3 + $0x3c] sm:$0xf] %v1557
        %1561 = vst [vmem:[#allocation3 + $0x40] sm:$0xf] %v1558
        %1562 = vst [vmem:[#allocation3 + $0x44] sm:$0xf] %v1559
        %1563 = vrot.lane.b32.xlu0 %v1469, 121
        %v1564 = vpop.permute.xlu0 %1563
        %1565 = vrot.lane.b32.xlu0 %v1470, 121
        %v1566 = vpop.permute.xlu0 %1565
        %1567 = vrot.lane.b32.xlu0 %v1471, 121
        %v1568 = vpop.permute.xlu0 %1567
        %v1569 = vld [vmem:[%s4 + $0x6] sm:$0x1]
        %v1570 = vperm.slane %v1569, 0
        %v1571 = vmul.f32 %v1564, %v1570
        %v1572 = vmul.f32 %v1566, %v1570
        %v1573 = vmul.f32 %v1568, %v1570
        %v1574 = vpack.c.bf16 %v1571, %v1571
        %v1575 = vpack.c.bf16 %v1572, %v1572
        %v1576 = vpack.c.bf16 %v1573, %v1573
        %1577 = vst [vmem:[#allocation3 + $0x48] sm:$0xf] %v1574
        %1578 = vst [vmem:[#allocation3 + $0x4c] sm:$0xf] %v1575
        %1579 = vst [vmem:[#allocation3 + $0x50] sm:$0xf] %v1576
        %1580 = vrot.lane.b32.xlu0 %v1469, 120
        %v1581 = vpop.permute.xlu0 %1580
        %1582 = vrot.lane.b32.xlu0 %v1470, 120
        %v1583 = vpop.permute.xlu0 %1582
        %1584 = vrot.lane.b32.xlu0 %v1471, 120
        %v1585 = vpop.permute.xlu0 %1584
        %v1586 = vld [vmem:[%s4 + $0x7] sm:$0x1]
        %v1587 = vperm.slane %v1586, 0
        %v1588 = vmul.f32 %v1581, %v1587
        %v1589 = vmul.f32 %v1583, %v1587
        %v1590 = vmul.f32 %v1585, %v1587
        %v1591 = vpack.c.bf16 %v1588, %v1588
        %v1592 = vpack.c.bf16 %v1589, %v1589
        %v1593 = vpack.c.bf16 %v1590, %v1590
        %1594 = vst [vmem:[#allocation3 + $0x54] sm:$0xf] %v1591
        %1595 = vst [vmem:[#allocation3 + $0x58] sm:$0xf] %v1592
        %1596 = vst [vmem:[#allocation3 + $0x5c] sm:$0xf] %v1593
        %1597 = vrot.lane.b32.xlu0 %v1469, 119
        %v1598 = vpop.permute.xlu0 %1597
        %1599 = vrot.lane.b32.xlu0 %v1470, 119
        %v1600 = vpop.permute.xlu0 %1599
        %1601 = vrot.lane.b32.xlu0 %v1471, 119
        %v1602 = vpop.permute.xlu0 %1601
        %v1603 = vld [vmem:[%s4 + $0x8] sm:$0x1]
        %v1604 = vperm.slane %v1603, 0
        %v1605 = vmul.f32 %v1598, %v1604
        %v1606 = vmul.f32 %v1600, %v1604
        %v1607 = vmul.f32 %v1602, %v1604
        %v1608 = vpack.c.bf16 %v1605, %v1605
        %v1609 = vpack.c.bf16 %v1606, %v1606
        %v1610 = vpack.c.bf16 %v1607, %v1607
        %1611 = vst [vmem:[#allocation3 + $0x60] sm:$0xf] %v1608
        %1612 = vst [vmem:[#allocation3 + $0x64] sm:$0xf] %v1609
        %1613 = vst [vmem:[#allocation3 + $0x68] sm:$0xf] %v1610
        %v1614 = vld [vmem:[%s7] sm:$0xff]
        %v1615 = vld [vmem:[%s7 + $0x8] sm:$0xff]
        %v1616 = vld [vmem:[#allocation3] sm:$0xf]
        %v1617 = vld [vmem:[#allocation3 + $0x4] sm:$0xf]
        %v1618 = vld [vmem:[#allocation3 + $0x8] sm:$0xf]
        %v1619 = vld [vmem:[#allocation3 + $0xc] sm:$0xf]
        %v1620 = vld [vmem:[#allocation3 + $0x10] sm:$0xf]
        %v1621 = vld [vmem:[#allocation3 + $0x14] sm:$0xf]
        %v1622 = vld [vmem:[#allocation3 + $0x18] sm:$0xf]
        %v1623 = vld [vmem:[#allocation3 + $0x1c] sm:$0xf]
        %v1624 = vld [vmem:[#allocation3 + $0x20] sm:$0xf]
        %v1625 = vld [vmem:[#allocation3 + $0x24] sm:$0xf]
        %v1626 = vld [vmem:[#allocation3 + $0x28] sm:$0xf]
        %v1627 = vld [vmem:[#allocation3 + $0x2c] sm:$0xf]
        %v1628 = vld [vmem:[#allocation3 + $0x30] sm:$0xf]
        %v1629 = vld [vmem:[#allocation3 + $0x34] sm:$0xf]
        %v1630 = vld [vmem:[#allocation3 + $0x38] sm:$0xf]
        %v1631 = vld [vmem:[#allocation3 + $0x3c] sm:$0xf]
        %v1632 = vld [vmem:[#allocation3 + $0x40] sm:$0xf]
        %v1633 = vld [vmem:[#allocation3 + $0x44] sm:$0xf]
        %v1634 = vld [vmem:[#allocation3 + $0x48] sm:$0xf]
        %v1635 = vld [vmem:[#allocation3 + $0x4c] sm:$0xf]
        %v1636 = vld [vmem:[#allocation3 + $0x50] sm:$0xf]
        %v1637 = vld [vmem:[#allocation3 + $0x54] sm:$0xf]
        %v1638 = vld [vmem:[#allocation3 + $0x58] sm:$0xf]
        %v1639 = vld [vmem:[#allocation3 + $0x5c] sm:$0xf]
        %v1640 = vld [vmem:[#allocation3 + $0x60] sm:$0xf]
        %v1641 = vld [vmem:[#allocation3 + $0x64] sm:$0xf]
        %v1642 = vld [vmem:[#allocation3 + $0x68] sm:$0xf]
        %v1643 = vld [vmem:[%s8] sm:$0xff]
        %v1644 = vld [vmem:[%s8 + $0x8] sm:$0xff]
        %1646 = vset.pattern.permute.xlu0 0
        %1647 = vperm.xlu0 %1646, %v1643
        %v1648 = vpop.permute.xlu0 %1647
        %1651 = vset.pattern.permute.xlu0 0
        %1652 = vperm.xlu0 %1651, %v1644
        %v1653 = vpop.permute.xlu0 %1652
        %v1657 = vunpack.c.l.b16 %v1614
        %v1658 = vunpack.c.h.b16 %v1614
        %v1659 = vunpack.c.l.b16 %v1615
        %v1660 = vunpack.c.h.b16 %v1615
        %v1661 = vpack.c.b16 %v1659, %v1657
        %v1662 = vpack.c.b16 %v1660, %v1658
        %v1691 = vunpack.c.l.b16 %v1616
        %v1692 = vunpack.c.l.b16 %v1617
        %v1693 = vunpack.c.l.b16 %v1618
        %v1694 = vunpack.c.l.b16 %v1619
        %v1695 = vunpack.c.l.b16 %v1620
        %v1696 = vunpack.c.l.b16 %v1621
        %v1697 = vunpack.c.l.b16 %v1622
        %v1698 = vunpack.c.l.b16 %v1623
        %v1699 = vunpack.c.l.b16 %v1624
        %v1700 = vunpack.c.l.b16 %v1625
        %v1701 = vunpack.c.l.b16 %v1626
        %v1702 = vunpack.c.l.b16 %v1627
        %v1703 = vunpack.c.l.b16 %v1628
        %v1704 = vunpack.c.l.b16 %v1629
        %v1705 = vunpack.c.l.b16 %v1630
        %v1706 = vunpack.c.l.b16 %v1631
        %v1707 = vunpack.c.l.b16 %v1632
        %v1708 = vunpack.c.l.b16 %v1633
        %v1709 = vunpack.c.l.b16 %v1634
        %v1710 = vunpack.c.l.b16 %v1635
        %v1711 = vunpack.c.l.b16 %v1636
        %v1712 = vunpack.c.l.b16 %v1637
        %v1713 = vunpack.c.l.b16 %v1638
        %v1714 = vunpack.c.l.b16 %v1639
        %v1715 = vunpack.c.l.b16 %v1640
        %v1716 = vunpack.c.l.b16 %v1641
        %v1717 = vunpack.c.l.b16 %v1642
        %v1718 = vpack.c.b16 %v1692, %v1691
        %v1719 = vpack.c.b16 %v1694, %v1693
        %v1720 = vpack.c.b16 %v1696, %v1695
        %v1721 = vpack.c.b16 %v1698, %v1697
        %v1722 = vpack.c.b16 %v1700, %v1699
        %v1723 = vpack.c.b16 %v1702, %v1701
        %v1724 = vpack.c.b16 %v1704, %v1703
        %v1725 = vpack.c.b16 %v1706, %v1705
        %v1726 = vpack.c.b16 %v1708, %v1707
        %v1727 = vpack.c.b16 %v1710, %v1709
        %v1728 = vpack.c.b16 %v1712, %v1711
        %v1729 = vpack.c.b16 %v1714, %v1713
        %v1730 = vpack.c.b16 %v1716, %v1715
        %v1731 = vpack.c.b16 %v1717, %v1717
        %vm1745 = vcmask 719872
        %v1747 = vsel %vm1745, %v1662, 0
        %vm1749 = vcmask 1043456
        %v1751 = vsel %vm1749, %v1731, 0
        %1753 = vmatpush.bf16.msra.mxu0 %v1725
        %1754 = vmatpush.bf16.msra.mxu0 %v1724
        %1755 = vmatpush.bf16.msra.mxu0 %v1723
        %1756 = vmatpush.bf16.msra.mxu0 %v1722
        %1757 = vmatpush.bf16.msra.mxu0 %v1721
        %1758 = vmatpush.bf16.msra.mxu0 %v1720
        %1759 = vmatpush.bf16.msra.mxu0 %v1719
        %1760 = vmatpush.bf16.msra.mxu0 %v1718
        %1761 = vmatmul.bf16.gmra.mxu0 %v1661
        %v1762 = vpop.f32.mrf.mxu0
        %v1763 = vadd.f32 %v1648, %v1762
        %v1764 = vpop.f32.mrf.mxu0
        %v1765 = vadd.f32 %v1653, %v1764
        %1766 = vdwg.mxu0
        %1767 = vmatpush.bf16.msra.mxu0 0
        %1768 = vmatpush.bf16.msra.mxu0 0
        %1769 = vmatpush.bf16.msra.mxu0 %v1751
        %1770 = vmatpush.bf16.msra.mxu0 %v1730
        %1771 = vmatpush.bf16.msra.mxu0 %v1729
        %1772 = vmatpush.bf16.msra.mxu0 %v1728
        %1773 = vmatpush.bf16.msra.mxu0 %v1727
        %1774 = vmatpush.bf16.msra.mxu0 %v1726
        %1775 = vmatmul.bf16.gmra.mxu0 %v1747
        %v1776 = vpop.f32.mrf.mxu0
        %v1777 = vadd.f32 %v1763, %v1776
        %v1778 = vpop.f32.mrf.mxu0
        %v1779 = vadd.f32 %v1765, %v1778
        %1780 = vdwg.mxu0
        %v1781 = vmax.f32 %v1777, 0.0
        %v1782 = vmax.f32 %v1779, 0.0
        %1783 = vrot.lane.b32.xlu0 %v1781, 9
        %v1784 = vpop.permute.xlu0 %1783
        %1785 = vrot.lane.b32.xlu0 %v1782, 9
        %v1786 = vpop.permute.xlu0 %1785
        %v1787 = vld [vmem:[%s4] sm:$0x1]
        %v1788 = vperm.slane %v1787, 0
        %v1789 = vmul.f32 %v1784, %v1788
        %v1790 = vmul.f32 %v1786, %v1788
        %v1791 = vpack.c.bf16 %v1789, %v1789
        %v1792 = vpack.c.bf16 %v1790, %v1790
        %1793 = vst [vmem:[#allocation4] sm:$0xf] %v1791
        %1794 = vst [vmem:[#allocation4 + $0x4] sm:$0xf] %v1792
        %1795 = vrot.lane.b32.xlu0 %v1781, 8
        %v1796 = vpop.permute.xlu0 %1795
        %1797 = vrot.lane.b32.xlu0 %v1782, 8
        %v1798 = vpop.permute.xlu0 %1797
        %v1799 = vld [vmem:[%s4 + $0x1] sm:$0x1]
        %v1800 = vperm.slane %v1799, 0
        %v1801 = vmul.f32 %v1796, %v1800
        %v1802 = vmul.f32 %v1798, %v1800
        %v1803 = vpack.c.bf16 %v1801, %v1801
        %v1804 = vpack.c.bf16 %v1802, %v1802
        %1805 = vst [vmem:[#allocation4 + $0x8] sm:$0xf] %v1803
        %1806 = vst [vmem:[#allocation4 + $0xc] sm:$0xf] %v1804
        %1807 = vrot.lane.b32.xlu0 %v1781, 7
        %v1808 = vpop.permute.xlu0 %1807
        %1809 = vrot.lane.b32.xlu0 %v1782, 7
        %v1810 = vpop.permute.xlu0 %1809
        %v1811 = vld [vmem:[%s4 + $0x2] sm:$0x1]
        %v1812 = vperm.slane %v1811, 0
        %v1813 = vmul.f32 %v1808, %v1812
        %v1814 = vmul.f32 %v1810, %v1812
        %v1815 = vpack.c.bf16 %v1813, %v1813
        %v1816 = vpack.c.bf16 %v1814, %v1814
        %1817 = vst [vmem:[#allocation4 + $0x10] sm:$0xf] %v1815
        %1818 = vst [vmem:[#allocation4 + $0x14] sm:$0xf] %v1816
        %1819 = vrot.lane.b32.xlu0 %v1781, 1
        %v1820 = vpop.permute.xlu0 %1819
        %1821 = vrot.lane.b32.xlu0 %v1782, 1
        %v1822 = vpop.permute.xlu0 %1821
        %v1823 = vld [vmem:[%s4 + $0x3] sm:$0x1]
        %v1824 = vperm.slane %v1823, 0
        %v1825 = vmul.f32 %v1820, %v1824
        %v1826 = vmul.f32 %v1822, %v1824
        %v1827 = vpack.c.bf16 %v1825, %v1825
        %v1828 = vpack.c.bf16 %v1826, %v1826
        %1829 = vst [vmem:[#allocation4 + $0x18] sm:$0xf] %v1827
        %1830 = vst [vmem:[#allocation4 + $0x1c] sm:$0xf] %v1828
        %v1831 = vpack.c.bf16 %v1781, %v1781
        %v1832 = vpack.c.bf16 %v1782, %v1782
        %1833 = vst [vmem:[#allocation4 + $0x20] sm:$0xf] %v1831
        %1834 = vst [vmem:[#allocation4 + $0x24] sm:$0xf] %v1832
        %1835 = vrot.lane.b32.xlu0 %v1781, 127
        %v1836 = vpop.permute.xlu0 %1835
        %1837 = vrot.lane.b32.xlu0 %v1782, 127
        %v1838 = vpop.permute.xlu0 %1837
        %v1839 = vld [vmem:[%s4 + $0x5] sm:$0x1]
        %v1840 = vperm.slane %v1839, 0
        %v1841 = vmul.f32 %v1836, %v1840
        %v1842 = vmul.f32 %v1838, %v1840
        %v1843 = vpack.c.bf16 %v1841, %v1841
        %v1844 = vpack.c.bf16 %v1842, %v1842
        %1845 = vst [vmem:[#allocation4 + $0x28] sm:$0xf] %v1843
        %1846 = vst [vmem:[#allocation4 + $0x2c] sm:$0xf] %v1844
        %1847 = vrot.lane.b32.xlu0 %v1781, 121
        %v1848 = vpop.permute.xlu0 %1847
        %1849 = vrot.lane.b32.xlu0 %v1782, 121
        %v1850 = vpop.permute.xlu0 %1849
        %v1851 = vld [vmem:[%s4 + $0x6] sm:$0x1]
        %v1852 = vperm.slane %v1851, 0
        %v1853 = vmul.f32 %v1848, %v1852
        %v1854 = vmul.f32 %v1850, %v1852
        %v1855 = vpack.c.bf16 %v1853, %v1853
        %v1856 = vpack.c.bf16 %v1854, %v1854
        %1857 = vst [vmem:[#allocation4 + $0x30] sm:$0xf] %v1855
        %1858 = vst [vmem:[#allocation4 + $0x34] sm:$0xf] %v1856
        %1859 = vrot.lane.b32.xlu0 %v1781, 120
        %v1860 = vpop.permute.xlu0 %1859
        %1861 = vrot.lane.b32.xlu0 %v1782, 120
        %v1862 = vpop.permute.xlu0 %1861
        %v1863 = vld [vmem:[%s4 + $0x7] sm:$0x1]
        %v1864 = vperm.slane %v1863, 0
        %v1865 = vmul.f32 %v1860, %v1864
        %v1866 = vmul.f32 %v1862, %v1864
        %v1867 = vpack.c.bf16 %v1865, %v1865
        %v1868 = vpack.c.bf16 %v1866, %v1866
        %1869 = vst [vmem:[#allocation4 + $0x38] sm:$0xf] %v1867
        %1870 = vst [vmem:[#allocation4 + $0x3c] sm:$0xf] %v1868
        %1871 = vrot.lane.b32.xlu0 %v1781, 119
        %v1872 = vpop.permute.xlu0 %1871
        %1873 = vrot.lane.b32.xlu0 %v1782, 119
        %v1874 = vpop.permute.xlu0 %1873
        %v1875 = vld [vmem:[%s4 + $0x8] sm:$0x1]
        %v1876 = vperm.slane %v1875, 0
        %v1877 = vmul.f32 %v1872, %v1876
        %v1878 = vmul.f32 %v1874, %v1876
        %v1879 = vpack.c.bf16 %v1877, %v1877
        %v1880 = vpack.c.bf16 %v1878, %v1878
        %1881 = vst [vmem:[#allocation4 + $0x40] sm:$0xf] %v1879
        %1882 = vst [vmem:[#allocation4 + $0x44] sm:$0xf] %v1880
        %v1883 = vld [vmem:[%s9] sm:$0xff]
        %v1884 = vld [vmem:[%s9 + $0x8] sm:$0xff]
        %v1885 = vld [vmem:[#allocation4] sm:$0xf]
        %v1886 = vld [vmem:[#allocation4 + $0x4] sm:$0xf]
        %v1887 = vld [vmem:[#allocation4 + $0x8] sm:$0xf]
        %v1888 = vld [vmem:[#allocation4 + $0xc] sm:$0xf]
        %v1889 = vld [vmem:[#allocation4 + $0x10] sm:$0xf]
        %v1890 = vld [vmem:[#allocation4 + $0x14] sm:$0xf]
        %v1891 = vld [vmem:[#allocation4 + $0x18] sm:$0xf]
        %v1892 = vld [vmem:[#allocation4 + $0x1c] sm:$0xf]
        %v1893 = vld [vmem:[#allocation4 + $0x20] sm:$0xf]
        %v1894 = vld [vmem:[#allocation4 + $0x24] sm:$0xf]
        %v1895 = vld [vmem:[#allocation4 + $0x28] sm:$0xf]
        %v1896 = vld [vmem:[#allocation4 + $0x2c] sm:$0xf]
        %v1897 = vld [vmem:[#allocation4 + $0x30] sm:$0xf]
        %v1898 = vld [vmem:[#allocation4 + $0x34] sm:$0xf]
        %v1899 = vld [vmem:[#allocation4 + $0x38] sm:$0xf]
        %v1900 = vld [vmem:[#allocation4 + $0x3c] sm:$0xf]
        %v1901 = vld [vmem:[#allocation4 + $0x40] sm:$0xf]
        %v1902 = vld [vmem:[#allocation4 + $0x44] sm:$0xf]
        %v1903 = vld [vmem:[%s10] sm:$0xff]
        %v1904 = vld [vmem:[%s10 + $0x8] sm:$0xff]
        %1906 = vset.pattern.permute.xlu0 0
        %1907 = vperm.xlu0 %1906, %v1903
        %v1908 = vpop.permute.xlu0 %1907
        %1911 = vset.pattern.permute.xlu0 0
        %1912 = vperm.xlu0 %1911, %v1904
        %v1913 = vpop.permute.xlu0 %1912
        %v1917 = vunpack.c.l.b16 %v1883
        %v1918 = vunpack.c.h.b16 %v1883
        %v1919 = vunpack.c.l.b16 %v1884
        %v1920 = vunpack.c.h.b16 %v1884
        %v1921 = vpack.c.b16 %v1919, %v1917
        %v1922 = vpack.c.b16 %v1920, %v1918
        %v1942 = vunpack.c.l.b16 %v1885
        %v1943 = vunpack.c.l.b16 %v1886
        %v1944 = vunpack.c.l.b16 %v1887
        %v1945 = vunpack.c.l.b16 %v1888
        %v1946 = vunpack.c.l.b16 %v1889
        %v1947 = vunpack.c.l.b16 %v1890
        %v1948 = vunpack.c.l.b16 %v1891
        %v1949 = vunpack.c.l.b16 %v1892
        %v1950 = vunpack.c.l.b16 %v1893
        %v1951 = vunpack.c.l.b16 %v1894
        %v1952 = vunpack.c.l.b16 %v1895
        %v1953 = vunpack.c.l.b16 %v1896
        %v1954 = vunpack.c.l.b16 %v1897
        %v1955 = vunpack.c.l.b16 %v1898
        %v1956 = vunpack.c.l.b16 %v1899
        %v1957 = vunpack.c.l.b16 %v1900
        %v1958 = vunpack.c.l.b16 %v1901
        %v1959 = vunpack.c.l.b16 %v1902
        %v1960 = vpack.c.b16 %v1943, %v1942
        %v1961 = vpack.c.b16 %v1945, %v1944
        %v1962 = vpack.c.b16 %v1947, %v1946
        %v1963 = vpack.c.b16 %v1949, %v1948
        %v1964 = vpack.c.b16 %v1951, %v1950
        %v1965 = vpack.c.b16 %v1953, %v1952
        %v1966 = vpack.c.b16 %v1955, %v1954
        %v1967 = vpack.c.b16 %v1957, %v1956
        %v1968 = vpack.c.b16 %v1959, %v1958
        %vm1978 = vcmask 130048
        %v1980 = vsel %vm1978, %v1922, 0
        %1982 = vmatpush.bf16.msra.mxu0 %v1967
        %1983 = vmatpush.bf16.msra.mxu0 %v1966
        %1984 = vmatpush.bf16.msra.mxu0 %v1965
        %1985 = vmatpush.bf16.msra.mxu0 %v1964
        %1986 = vmatpush.bf16.msra.mxu0 %v1963
        %1987 = vmatpush.bf16.msra.mxu0 %v1962
        %1988 = vmatpush.bf16.msra.mxu0 %v1961
        %1989 = vmatpush.bf16.msra.mxu0 %v1960
        %1990 = vmatmul.bf16.gmra.mxu0 %v1921
        %v1991 = vpop.f32.mrf.mxu0
        %v1992 = vadd.f32 %v1908, %v1991
        %v1993 = vpop.f32.mrf.mxu0
        %v1994 = vadd.f32 %v1913, %v1993
        %1995 = vdwg.mxu0
        %1996 = vmatpush.bf16.msra.mxu0 0
        %1997 = vmatpush.bf16.msra.mxu0 0
        %1998 = vmatpush.bf16.msra.mxu0 0
        %1999 = vmatpush.bf16.msra.mxu0 0
        %2000 = vmatpush.bf16.msra.mxu0 0
        %2001 = vmatpush.bf16.msra.mxu0 0
        %2002 = vmatpush.bf16.msra.mxu0 0
        %2003 = vmatpush.bf16.msra.mxu0 %v1968
        %2004 = vmatmul.bf16.gmra.mxu0 %v1980
        %v2005 = vpop.f32.mrf.mxu0
        %v2006 = vadd.f32 %v1992, %v2005
        %v2007 = vpop.f32.mrf.mxu0
        %v2008 = vadd.f32 %v1994, %v2007
        %2009 = vdwg.mxu0
        %v2010 = vmax.f32 %v2006, 0.0
        %v2011 = vmax.f32 %v2008, 0.0
        %2012 = vrot.lane.b32.xlu0 %v2010, 9
        %v2013 = vpop.permute.xlu0 %2012
        %2014 = vrot.lane.b32.xlu0 %v2011, 9
        %v2015 = vpop.permute.xlu0 %2014
        %v2016 = vld [vmem:[%s4] sm:$0x1]
        %v2017 = vperm.slane %v2016, 0
        %v2018 = vmul.f32 %v2013, %v2017
        %v2019 = vmul.f32 %v2015, %v2017
        %v2020 = vpack.c.bf16 %v2018, %v2018
        %v2021 = vpack.c.bf16 %v2019, %v2019
        %2022 = vst [vmem:[#allocation4] sm:$0xf] %v2020
        %2023 = vst [vmem:[#allocation4 + $0x4] sm:$0xf] %v2021
        %2024 = vrot.lane.b32.xlu0 %v2010, 8
        %v2025 = vpop.permute.xlu0 %2024
        %2026 = vrot.lane.b32.xlu0 %v2011, 8
        %v2027 = vpop.permute.xlu0 %2026
        %v2028 = vld [vmem:[%s4 + $0x1] sm:$0x1]
        %v2029 = vperm.slane %v2028, 0
        %v2030 = vmul.f32 %v2025, %v2029
        %v2031 = vmul.f32 %v2027, %v2029
        %v2032 = vpack.c.bf16 %v2030, %v2030
        %v2033 = vpack.c.bf16 %v2031, %v2031
        %2034 = vst [vmem:[#allocation4 + $0x8] sm:$0xf] %v2032
        %2035 = vst [vmem:[#allocation4 + $0xc] sm:$0xf] %v2033
        %2036 = vrot.lane.b32.xlu0 %v2010, 7
        %v2037 = vpop.permute.xlu0 %2036
        %2038 = vrot.lane.b32.xlu0 %v2011, 7
        %v2039 = vpop.permute.xlu0 %2038
        %v2040 = vld [vmem:[%s4 + $0x2] sm:$0x1]
        %v2041 = vperm.slane %v2040, 0
        %v2042 = vmul.f32 %v2037, %v2041
        %v2043 = vmul.f32 %v2039, %v2041
        %v2044 = vpack.c.bf16 %v2042, %v2042
        %v2045 = vpack.c.bf16 %v2043, %v2043
        %2046 = vst [vmem:[#allocation4 + $0x10] sm:$0xf] %v2044
        %2047 = vst [vmem:[#allocation4 + $0x14] sm:$0xf] %v2045
        %2048 = vrot.lane.b32.xlu0 %v2010, 1
        %v2049 = vpop.permute.xlu0 %2048
        %2050 = vrot.lane.b32.xlu0 %v2011, 1
        %v2051 = vpop.permute.xlu0 %2050
        %v2052 = vld [vmem:[%s4 + $0x3] sm:$0x1]
        %v2053 = vperm.slane %v2052, 0
        %v2054 = vmul.f32 %v2049, %v2053
        %v2055 = vmul.f32 %v2051, %v2053
        %v2056 = vpack.c.bf16 %v2054, %v2054
        %v2057 = vpack.c.bf16 %v2055, %v2055
        %2058 = vst [vmem:[#allocation4 + $0x18] sm:$0xf] %v2056
        %2059 = vst [vmem:[#allocation4 + $0x1c] sm:$0xf] %v2057
        %v2060 = vpack.c.bf16 %v2010, %v2010
        %v2061 = vpack.c.bf16 %v2011, %v2011
        %2062 = vst [vmem:[#allocation4 + $0x20] sm:$0xf] %v2060
        %2063 = vst [vmem:[#allocation4 + $0x24] sm:$0xf] %v2061
        %2064 = vrot.lane.b32.xlu0 %v2010, 127
        %v2065 = vpop.permute.xlu0 %2064
        %2066 = vrot.lane.b32.xlu0 %v2011, 127
        %v2067 = vpop.permute.xlu0 %2066
        %v2068 = vld [vmem:[%s4 + $0x5] sm:$0x1]
        %v2069 = vperm.slane %v2068, 0
        %v2070 = vmul.f32 %v2065, %v2069
        %v2071 = vmul.f32 %v2067, %v2069
        %v2072 = vpack.c.bf16 %v2070, %v2070
        %v2073 = vpack.c.bf16 %v2071, %v2071
        %2074 = vst [vmem:[#allocation4 + $0x28] sm:$0xf] %v2072
        %2075 = vst [vmem:[#allocation4 + $0x2c] sm:$0xf] %v2073
        %2076 = vrot.lane.b32.xlu0 %v2010, 121
        %v2077 = vpop.permute.xlu0 %2076
        %2078 = vrot.lane.b32.xlu0 %v2011, 121
        %v2079 = vpop.permute.xlu0 %2078
        %v2080 = vld [vmem:[%s4 + $0x6] sm:$0x1]
        %v2081 = vperm.slane %v2080, 0
        %v2082 = vmul.f32 %v2077, %v2081
        %v2083 = vmul.f32 %v2079, %v2081
        %v2084 = vpack.c.bf16 %v2082, %v2082
        %v2085 = vpack.c.bf16 %v2083, %v2083
        %2086 = vst [vmem:[#allocation4 + $0x30] sm:$0xf] %v2084
        %2087 = vst [vmem:[#allocation4 + $0x34] sm:$0xf] %v2085
        %2088 = vrot.lane.b32.xlu0 %v2010, 120
        %v2089 = vpop.permute.xlu0 %2088
        %2090 = vrot.lane.b32.xlu0 %v2011, 120
        %v2091 = vpop.permute.xlu0 %2090
        %v2092 = vld [vmem:[%s4 + $0x7] sm:$0x1]
        %v2093 = vperm.slane %v2092, 0
        %v2094 = vmul.f32 %v2089, %v2093
        %v2095 = vmul.f32 %v2091, %v2093
        %v2096 = vpack.c.bf16 %v2094, %v2094
        %v2097 = vpack.c.bf16 %v2095, %v2095
        %2098 = vst [vmem:[#allocation4 + $0x38] sm:$0xf] %v2096
        %2099 = vst [vmem:[#allocation4 + $0x3c] sm:$0xf] %v2097
        %2100 = vrot.lane.b32.xlu0 %v2010, 119
        %v2101 = vpop.permute.xlu0 %2100
        %2102 = vrot.lane.b32.xlu0 %v2011, 119
        %v2103 = vpop.permute.xlu0 %2102
        %v2104 = vld [vmem:[%s4 + $0x8] sm:$0x1]
        %v2105 = vperm.slane %v2104, 0
        %v2106 = vmul.f32 %v2101, %v2105
        %v2107 = vmul.f32 %v2103, %v2105
        %v2108 = vpack.c.bf16 %v2106, %v2106
        %v2109 = vpack.c.bf16 %v2107, %v2107
        %2110 = vst [vmem:[#allocation4 + $0x40] sm:$0xf] %v2108
        %2111 = vst [vmem:[#allocation4 + $0x44] sm:$0xf] %v2109
        %v2112 = vld [vmem:[%s11] sm:$0xff]
        %v2113 = vld [vmem:[%s11 + $0x8] sm:$0xff]
        %v2114 = vld [vmem:[#allocation4] sm:$0xf]
        %v2115 = vld [vmem:[#allocation4 + $0x4] sm:$0xf]
        %v2116 = vld [vmem:[#allocation4 + $0x8] sm:$0xf]
        %v2117 = vld [vmem:[#allocation4 + $0xc] sm:$0xf]
        %v2118 = vld [vmem:[#allocation4 + $0x10] sm:$0xf]
        %v2119 = vld [vmem:[#allocation4 + $0x14] sm:$0xf]
        %v2120 = vld [vmem:[#allocation4 + $0x18] sm:$0xf]
        %v2121 = vld [vmem:[#allocation4 + $0x1c] sm:$0xf]
        %v2122 = vld [vmem:[#allocation4 + $0x20] sm:$0xf]
        %v2123 = vld [vmem:[#allocation4 + $0x24] sm:$0xf]
        %v2124 = vld [vmem:[#allocation4 + $0x28] sm:$0xf]
        %v2125 = vld [vmem:[#allocation4 + $0x2c] sm:$0xf]
        %v2126 = vld [vmem:[#allocation4 + $0x30] sm:$0xf]
        %v2127 = vld [vmem:[#allocation4 + $0x34] sm:$0xf]
        %v2128 = vld [vmem:[#allocation4 + $0x38] sm:$0xf]
        %v2129 = vld [vmem:[#allocation4 + $0x3c] sm:$0xf]
        %v2130 = vld [vmem:[#allocation4 + $0x40] sm:$0xf]
        %v2131 = vld [vmem:[#allocation4 + $0x44] sm:$0xf]
        %v2132 = vld [vmem:[%s12] sm:$0xff]
        %v2133 = vld [vmem:[%s12 + $0x8] sm:$0xff]
        %2135 = vset.pattern.permute.xlu0 0
        %2136 = vperm.xlu0 %2135, %v2132
        %v2137 = vpop.permute.xlu0 %2136
        %2140 = vset.pattern.permute.xlu0 0
        %2141 = vperm.xlu0 %2140, %v2133
        %v2142 = vpop.permute.xlu0 %2141
        %v2146 = vunpack.c.l.b16 %v2112
        %v2147 = vunpack.c.h.b16 %v2112
        %v2148 = vunpack.c.l.b16 %v2113
        %v2149 = vunpack.c.h.b16 %v2113
        %v2150 = vpack.c.b16 %v2148, %v2146
        %v2151 = vpack.c.b16 %v2149, %v2147
        %v2171 = vunpack.c.l.b16 %v2114
        %v2172 = vunpack.c.l.b16 %v2115
        %v2173 = vunpack.c.l.b16 %v2116
        %v2174 = vunpack.c.l.b16 %v2117
        %v2175 = vunpack.c.l.b16 %v2118
        %v2176 = vunpack.c.l.b16 %v2119
        %v2177 = vunpack.c.l.b16 %v2120
        %v2178 = vunpack.c.l.b16 %v2121
        %v2179 = vunpack.c.l.b16 %v2122
        %v2180 = vunpack.c.l.b16 %v2123
        %v2181 = vunpack.c.l.b16 %v2124
        %v2182 = vunpack.c.l.b16 %v2125
        %v2183 = vunpack.c.l.b16 %v2126
        %v2184 = vunpack.c.l.b16 %v2127
        %v2185 = vunpack.c.l.b16 %v2128
        %v2186 = vunpack.c.l.b16 %v2129
        %v2187 = vunpack.c.l.b16 %v2130
        %v2188 = vunpack.c.l.b16 %v2131
        %v2189 = vpack.c.b16 %v2172, %v2171
        %v2190 = vpack.c.b16 %v2174, %v2173
        %v2191 = vpack.c.b16 %v2176, %v2175
        %v2192 = vpack.c.b16 %v2178, %v2177
        %v2193 = vpack.c.b16 %v2180, %v2179
        %v2194 = vpack.c.b16 %v2182, %v2181
        %v2195 = vpack.c.b16 %v2184, %v2183
        %v2196 = vpack.c.b16 %v2186, %v2185
        %v2197 = vpack.c.b16 %v2188, %v2187
        %v2208 = vsel %vm1978, %v2151, 0
        %2210 = vmatpush.bf16.msra.mxu0 %v2196
        %2211 = vmatpush.bf16.msra.mxu0 %v2195
        %2212 = vmatpush.bf16.msra.mxu0 %v2194
        %2213 = vmatpush.bf16.msra.mxu0 %v2193
        %2214 = vmatpush.bf16.msra.mxu0 %v2192
        %2215 = vmatpush.bf16.msra.mxu0 %v2191
        %2216 = vmatpush.bf16.msra.mxu0 %v2190
        %2217 = vmatpush.bf16.msra.mxu0 %v2189
        %2218 = vmatmul.bf16.gmra.mxu0 %v2150
        %v2219 = vpop.f32.mrf.mxu0
        %v2220 = vadd.f32 %v2137, %v2219
        %v2221 = vpop.f32.mrf.mxu0
        %v2222 = vadd.f32 %v2142, %v2221
        %2223 = vdwg.mxu0
        %2224 = vmatpush.bf16.msra.mxu0 0
        %2225 = vmatpush.bf16.msra.mxu0 0
        %2226 = vmatpush.bf16.msra.mxu0 0
        %2227 = vmatpush.bf16.msra.mxu0 0
        %2228 = vmatpush.bf16.msra.mxu0 0
        %2229 = vmatpush.bf16.msra.mxu0 0
        %2230 = vmatpush.bf16.msra.mxu0 0
        %2231 = vmatpush.bf16.msra.mxu0 %v2197
        %2232 = vmatmul.bf16.gmra.mxu0 %v2208
        %v2233 = vpop.f32.mrf.mxu0
        %v2234 = vadd.f32 %v2220, %v2233
        %v2235 = vpop.f32.mrf.mxu0
        %v2236 = vadd.f32 %v2222, %v2235
        %2237 = vdwg.mxu0
        %v2238 = vadd.f32 %v1781, %v2234
        %v2239 = vadd.f32 %v1782, %v2236
        %v2240 = vmax.f32 %v2238, 0.0
        %v2241 = vmax.f32 %v2239, 0.0
        %v2242 = vld [vmem:[%s13] sm:$0xf]
        %v2243 = vld [vmem:[%s13 + $0x4] sm:$0xf]
        %v2244 = vpack.c.bf16 %v1459, %v1459
        %v2245 = vld [vmem:[%s14] sm:$0xf]
        %v2246 = vld [vmem:[%s14 + $0x4] sm:$0xf]
        %v2247 = vpack.c.bf16 %v2241, %v2240
        %v2250 = vunpack.c.l.b16 %v2245
        %v2251 = vunpack.c.l.b16 %v2246
        %v2252 = vpack.c.b16 %v2251, %v2250
        %v2254 = vsel %vm1978, %v2252, 0
        %2256 = vmatpush.bf16.msra.mxu0 0
        %2257 = vmatpush.bf16.msra.mxu0 0
        %2258 = vmatpush.bf16.msra.mxu0 0
        %2259 = vmatpush.bf16.msra.mxu0 0
        %2260 = vmatpush.bf16.msra.mxu0 0
        %2261 = vmatpush.bf16.msra.mxu0 0
        %2262 = vmatpush.bf16.msra.mxu0 0
        %2263 = vmatpush.bf16.msra.mxu0 %v2247
        %2264 = vmatmul.bf16.gmra.mxu0 %v2254
        %v2265 = vpop.f32.mrf.mxu0
        %v2266 = vadd.f32 0.0, %v2265
        %v2267 = vpop.f32.mrf.mxu0
        %v2268 = vadd.f32 0.0, %v2267
        %2269 = vdwg.mxu0
        %v2272 = vunpack.c.l.b16 %v2242
        %v2273 = vunpack.c.l.b16 %v2243
        %v2274 = vpack.c.b16 %v2273, %v2272
        %vm2275 = vcmask 31744
        %v2277 = vsel %vm2275, %v2274, 0
        %vm2279 = vcmask 1041408
        %v2281 = vsel %vm2279, %v2244, 0
        %2283 = vmatpush.bf16.msra.mxu0 0
        %2284 = vmatpush.bf16.msra.mxu0 0
        %2285 = vmatpush.bf16.msra.mxu0 0
        %2286 = vmatpush.bf16.msra.mxu0 0
        %2287 = vmatpush.bf16.msra.mxu0 0
        %2288 = vmatpush.bf16.msra.mxu0 0
        %2289 = vmatpush.bf16.msra.mxu0 0
        %2290 = vmatpush.bf16.msra.mxu0 %v2281
        %2291 = vmatmul.bf16.gmra.mxu0 %v2277
        %v2292 = vpop.f32.mrf.mxu0
        %v2293 = vadd.f32 %v2266, %v2292
        %v2294 = vpop.f32.mrf.mxu0
        %v2295 = vadd.f32 %v2268, %v2294
        %2296 = vdwg.mxu0
        %v2297 = vld [vmem:[%s15] sm:$0xff]
        %v2298 = vld [vmem:[%s15 + $0x8] sm:$0xff]
        %2300 = vset.pattern.permute.xlu0 0
        %2301 = vperm.xlu0 %2300, %v2297
        %v2302 = vpop.permute.xlu0 %2301
        %2305 = vset.pattern.permute.xlu0 0
        %2306 = vperm.xlu0 %2305, %v2298
        %v2307 = vpop.permute.xlu0 %2306
        %v2309 = vadd.f32 %v2293, %v2302
        %v2310 = vadd.f32 %v2295, %v2307
        %v2311 = vtanh.pop %v2309
        %v2312 = vtanh.pop %v2310
        %v2313 = vadd.f32 %v2311, 1.0
        %v2314 = vmul.f32 %v2313, 0.5
        %v2315 = vadd.f32 %v2312, 1.0
        %v2316 = vmul.f32 %v2315, 0.5
        %v2317 = vmul.f32 %v1460, %v2314
        %v2319 = vrot.slane %v2312, 4
        %v2321 = vmul.f32 %v2314, %v2319
        %v2323 = vrot.slane %v2321, 4
        %v2325 = vadd.f32 %v2317, %v2323
        %v2326 = vtanh.pop %v2325
        %v2328 = vrot.slane %v2316, 4
        %v2330 = vmul.f32 %v2326, %v2328
        %s2331 = scalar_lea.vmem %s543, 1
        %v2332 = vld [vmem:[%s2331] sm:$0x1]
        %s2333 = scalar_lea.vmem %s548, 1
        %v2334 = vld [vmem:[%s2333] sm:$0x1]
        %v2336 = vperm.slane %v2332, 0
        %v2338 = vmul.f32 %v2336, %v2330
        %v2340 = vperm.slane %v2334, 0
        %v2342 = vmul.f32 %v2340, %v1459
        %v2343 = vadd.f32 %v2338, %v2342
        %2344 = vst [vmem:[%s16] sm:$0xf] %v2343
        %v2345 = vmul.f32 %v2336, %v2325
        %v2346 = vmul.f32 %v2340, %v1460
        %v2347 = vadd.f32 %v2345, %v2346
        %2348 = vst [vmem:[%s17] sm:$0xf] %v2347
      $region92: #{rnn_layer_forward.1} parent=79 // pred_fallthru
        _
      // Predicated region
      $region93: #{rnn_layer_forward.1} parent=79 // pred_check
        %p2349 = pneg %p373
      $region94: #{rnn_layer_forward.1} parent=79 // pred_check_branch
        %2351 = sbr.rel (%p2349) target = $region96
      $region95: #{rnn_layer_forward.1} parent=79 // pred_region
        _
      $region96: #{rnn_layer_forward.1} parent=79 // pred_fallthru
        _
      // Predicated region
      $region97: #{rnn_layer_forward.1} parent=79 // pred_check
        %p2352 = pneg %p394
      $region98: #{rnn_layer_forward.1} parent=79 // pred_check_branch
        %2354 = sbr.rel (%p2352) target = $region100
      $region99: #{rnn_layer_forward.1} parent=79 // pred_region
        _
      $region100: #{rnn_layer_forward.1} parent=79 // pred_fallthru
        _
      // Predicated region
      $region101: #{rnn_layer_forward.1} parent=79 // pred_check
        %p2355 = pneg %p373
      $region102: #{rnn_layer_forward.1} parent=79 // pred_check_branch
        %2357 = sbr.rel (%p2355) target = $region104
      $region103: #{rnn_layer_forward.1} parent=79 // pred_region
        _
      $region104: #{rnn_layer_forward.1} parent=79 // pred_fallthru
        _
      // Predicated region
      $region105: #{rnn_layer_forward.1} parent=79 // pred_check
        %p2358 = pneg %p394
      $region106: #{rnn_layer_forward.1} parent=79 // pred_check_branch
        %2360 = sbr.rel (%p2358) target = $region108
      $region107: #{rnn_layer_forward.1} parent=79 // pred_region
        _
      $region108: #{rnn_layer_forward.1} parent=79 // pred_fallthru
        _
    $region80: #{rnn_layer_forward.1} parent=5 // pred_fallthru
      _
    %p2361 = scmp.le.s32.totalorder 2, %s25
    // Predicated region
    $region109: #{rnn_layer_forward.1} parent=5 // pred_check
      %p2362 = pneg %p2361
    $region110: #{rnn_layer_forward.1} parent=5 // pred_check_branch
      %2364 = sbr.rel (%p2362) target = $region112
    $region111: #{rnn_layer_forward.1} parent=5 // pred_region
      %s2365 = ssub.s32 %s25, 2
    $region112: #{rnn_layer_forward.1} parent=5 // pred_fallthru
      _
  $region6: #{rnn_layer_forward.1} parent=0 // loop_footer
    %s29 = sadd.s32 1, %s25
  $region7: #{rnn_layer_forward.1} parent=0 // loop_footer_branch
    %24 = sbr.rel target = $region3
  $region8: #{rnn_layer_forward.1} parent=0 // loop_exit
    _

</llo_original>
